<compile_context>
chip_gen: v6e
topology: v6e:2x2x1
jax: 0.10.0
libtpu: 0.0.40
codegen_flags: <defaults>
</compile_context>

<pallas_src>
import jax
import jax.numpy as jnp
from jax.experimental import pallas as pl
from jax.experimental.pallas import tpu as pltpu

# ----------------------------- configuration -------------------------------
B = 2                       # batch size
SEQ = 8                     # max words per sentence
T = SEQ + 2                 # +2 for [CLS]/[SEP]
T_PAD = 16                  # padded sequence length (multiple of 8 sublanes)
BT = B * T_PAD              # flattened token axis
BERT_H = 48                 # synthetic BERT hidden size
D_MODEL = 32
D_CONTENT = D_MODEL // 2    # partition=True
D_POSITION = D_MODEL - D_MODEL // 2
NHEAD = 2
HEAD_DIM = D_MODEL // NHEAD
DIM_FF = 64
LAYER_NUM = 2
LABEL_HIDDEN = 24
N_SUBTREE = 12              # len(subtree_vocab)
N_TOKEN = 20                # len(token_vocab)
C_PAD = 128                 # lane-dense logits width (classes padded to 128)
LANES = 128
LN_EPS = 1e-5

# number of gathered rows per head (static, from the synthetic example data)
N_SUB = 2
N_HEADSPAN = 3
N_MSK = 2
N_GATHER = N_SUB + N_HEADSPAN + N_MSK      # 7
META_ROWS = 8                              # SMEM meta rows (padded)
NSEL_HALF = 8                              # 'a' rows (t) / 'b' rows (t+1)
NSEL = 2 * NSEL_HALF
OUT_ROWS = 8                               # packed output slab rows

QKV_Q_OFF = 0
QKV_K_OFF = D_MODEL
QKV_V_OFF = 2 * D_MODEL


# --------------------------- slab row layouts -------------------------------
def _make_offsets(entries):
    off, cur = {}, 0
    for name, rows in entries:
        off[name] = cur
        cur += rows
    return off, ((cur + 7) // 8) * 8


def _weight_entries():
    e = [('wp', BERT_H)]
    for l in range(LAYER_NUM):
        e += [(f'wqkv{l}', D_MODEL), (f'wo{l}', D_MODEL),
              (f'w1{l}', D_MODEL), (f'w2{l}', DIM_FF)]
    e += [('sub_w1a', D_MODEL), ('sub_w1b', D_MODEL), ('sub_w2', LABEL_HIDDEN),
          ('hd_w1a', D_MODEL), ('hd_w1b', D_MODEL), ('hd_w2', LABEL_HIDDEN),
          ('tok_wa', D_MODEL), ('tok_wb', D_MODEL)]
    return e


def _bias_entries():
    e = [('emb_g', 1), ('emb_b', 1)]
    for l in range(LAYER_NUM):
        e += [(f'bqkv{l}', 1), (f'bo{l}', 1), (f'ln1g{l}', 1), (f'ln1b{l}', 1),
              (f'b1{l}', 1), (f'b2{l}', 1), (f'ln2g{l}', 1), (f'ln2b{l}', 1)]
    e += [('sub_b1', 1), ('sub_g', 1), ('sub_beta', 1), ('sub_b2', 1),
          ('hd_b1', 1), ('hd_g', 1), ('hd_beta', 1), ('hd_b2', 1), ('tok_b', 1)]
    return e


W_OFF, W_ROWS = _make_offsets(_weight_entries())   # all row offsets 8-aligned
B_OFF, B_ROWS = _make_offsets(_bias_entries())
DATA_ROWS = 3 * BT                                 # bert | pos(+bias) | attn-bias


# ------------------------- in-kernel helper math ---------------------------
def _ln(x, g, b):
    mean = jnp.mean(x, axis=-1, keepdims=True)
    var = jnp.mean((x - mean) ** 2, axis=-1, keepdims=True)
    return (x - mean) * jax.lax.rsqrt(var + LN_EPS) * g + b


def _mm(a, b):
    # bf16 MXU operands (native on v6e/v7x, supported on v5e), f32 accumulate.
    return jnp.dot(a.astype(jnp.bfloat16), b.astype(jnp.bfloat16),
                   preferred_element_type=jnp.float32)


def _mm_nt(a, b):
    # a[M,K] contracted against b[N,K] -> [M,N]  (rhs transposed on the MXU)
    return jax.lax.dot_general(
        a.astype(jnp.bfloat16), b.astype(jnp.bfloat16),
        dimension_numbers=(((1,), (1,)), ((), ())),
        preferred_element_type=jnp.float32)


# ------------------------------- fused kernel -------------------------------
def fused_pretrain_kernel(meta_ref, data_ref, w_ref, b_ref, out_ref):
    scale = 1.0 / (HEAD_DIM ** 0.5)

    def w_at(name, rows, cols=LANES):
        off = W_OFF[name]
        return w_ref[off:off + rows, 0:cols]

    def b_at(name, cols=LANES):
        off = B_OFF[name]
        return b_ref[off:off + 1, 0:cols]

    # ---- EmbeddingLayer tail: bert_proj + (pre-materialized) pos emb + LN ----
    bert2 = data_ref[0:BT, 0:BERT_H]
    pos_full = data_ref[BT:2 * BT, 0:D_MODEL]      # [proj bias | pos emb] rows
    abias = data_ref[2 * BT:3 * BT, 0:BT]          # block-diag + padding mask
    x = _ln(_mm(bert2, w_at('wp', BERT_H, D_MODEL)) + pos_full,
            b_at('emb_g', D_MODEL), b_at('emb_b', D_MODEL))       # [BT, D]

    # ---- transformer stack (activations stay in vregs) ----
    for l in range(LAYER_NUM):
        # fused QKV: one [32,32]@[32,128] dot, per-head q/k/v as lane slices
        qkv = _mm(x, w_at(f'wqkv{l}', D_MODEL)) + b_at(f'bqkv{l}')
        ctx_heads = []
        for h in range(NHEAD):
            q = qkv[:, QKV_Q_OFF + h * HEAD_DIM:QKV_Q_OFF + (h + 1) * HEAD_DIM]
            k = qkv[:, QKV_K_OFF + h * HEAD_DIM:QKV_K_OFF + (h + 1) * HEAD_DIM]
            v = qkv[:, QKV_V_OFF + h * HEAD_DIM:QKV_V_OFF + (h + 1) * HEAD_DIM]
            s = _mm_nt(q, k) * scale + abias                      # [BT, BT]
            s = s - jnp.max(s, axis=-1, keepdims=True)
            p = jnp.exp(s)
            p = p * pl.reciprocal(jnp.sum(p, axis=-1, keepdims=True), approx=True)
            ctx_heads.append(_mm(p, v))                           # [BT, HEAD_DIM]
        ctx = jnp.concatenate(ctx_heads, axis=-1)                 # [BT, D]
        attn = _mm(ctx, w_at(f'wo{l}', D_MODEL, D_MODEL)) + b_at(f'bo{l}', D_MODEL)
        y = _ln(x + attn, b_at(f'ln1g{l}', D_MODEL), b_at(f'ln1b{l}', D_MODEL))
        ff = jnp.maximum(_mm(y, w_at(f'w1{l}', D_MODEL, DIM_FF))
                         + b_at(f'b1{l}', DIM_FF), 0.0)
        ff = _mm(ff, w_at(f'w2{l}', DIM_FF, D_MODEL)) + b_at(f'b2{l}', D_MODEL)
        x = _ln(y + ff, b_at(f'ln2g{l}', D_MODEL), b_at(f'ln2b{l}', D_MODEL))

    # ---- selection-matmul gather (replaces dynamic-slice scratch gathers) ----
    # rows 0..6         : words_repr contribution at position t   ("a" rows)
    # rows 8..14        : words_repr contribution at position t+1 ("b" rows)
    lane = jax.lax.broadcasted_iota(jnp.int32, (NSEL, BT), 1)
    row = jax.lax.broadcasted_iota(jnp.int32, (NSEL, BT), 0)
    sel = jnp.zeros((NSEL, BT), jnp.float32)
    for n in range(N_SUB + N_HEADSPAN):                           # span diffs
        fi = meta_ref[n, 0]
        fj = meta_ref[n, 1]
        plus = ((row == n) & (lane == fj)) | ((row == n + NSEL_HALF) & (lane == fj + 1))
        minus = ((row == n) & (lane == fi)) | ((row == n + NSEL_HALF) & (lane == fi + 1))
        sel = sel + plus.astype(jnp.float32) - minus.astype(jnp.float32)
    for m in range(N_MSK):                                        # masked tokens
        n = N_SUB + N_HEADSPAN + m
        f = meta_ref[n, 0]
        plus = ((row == n) & (lane == f)) | ((row == n + NSEL_HALF) & (lane == f + 1))
        sel = sel + plus.astype(jnp.float32)

    g = _mm(sel, x)                                               # [NSEL, D]
    ga = g[0:NSEL_HALF, :]
    gb = g[NSEL_HALF:NSEL, :]

    def ce_sum(logits, lab_base, n_rows):
        # CrossEntropyLoss(reduction='sum'); labels read from SMEM meta rows.
        m = jnp.max(logits, axis=-1, keepdims=True)
        lse = jnp.log(jnp.sum(jnp.exp(logits - m), axis=-1, keepdims=True)) + m
        cls = jax.lax.broadcasted_iota(jnp.int32, logits.shape, 1)
        rr = jax.lax.broadcasted_iota(jnp.int32, logits.shape, 0)
        onehot = jnp.zeros(logits.shape, jnp.float32)
        for n in range(n_rows):
            lab = meta_ref[lab_base + n, 2]
            onehot = onehot + jnp.where((rr == n) & (cls == lab), 1.0, 0.0)
        gold = jnp.sum(logits * onehot, axis=-1, keepdims=True)
        return jnp.sum(lse - gold)

    def span_head(row0, n_rows, prefix):
        a = ga[row0:row0 + n_rows, :]
        b = gb[row0:row0 + n_rows, :]
        z = (_mm(a, w_at(prefix + '_w1a', D_MODEL, LABEL_HIDDEN))
             + _mm(b, w_at(prefix + '_w1b', D_MODEL, LABEL_HIDDEN))
             + b_at(prefix + '_b1', LABEL_HIDDEN))
        z = jnp.maximum(_ln(z, b_at(prefix + '_g', LABEL_HIDDEN),
                            b_at(prefix + '_beta', LABEL_HIDDEN)), 0.0)
        return _mm(z, w_at(prefix + '_w2', LABEL_HIDDEN, C_PAD)) + b_at(prefix + '_b2')

    sub_logits = span_head(0, N_SUB, 'sub')                       # [2, 128]
    hd_logits = span_head(N_SUB, N_HEADSPAN, 'hd')                # [3, 128]

    ta = ga[N_SUB + N_HEADSPAN:N_GATHER, :]
    tb = gb[N_SUB + N_HEADSPAN:N_GATHER, :]
    tok_logits = (_mm(ta, w_at('tok_wa', D_MODEL, C_PAD))
                  + _mm(tb, w_at('tok_wb', D_MODEL, C_PAD))
                  + b_at('tok_b'))                                # [2, 128]

    loss = (ce_sum(sub_logits, 0, N_SUB)
            + ce_sum(hd_logits, N_SUB, N_HEADSPAN)
            + ce_sum(tok_logits, N_SUB + N_HEADSPAN, N_MSK))

    # ---- one packed (8,128) output slab ----
    out_ref[0:N_SUB, :] = sub_logits
    out_ref[N_SUB:N_SUB + N_HEADSPAN, :] = hd_logits
    out_ref[N_SUB + N_HEADSPAN:N_GATHER, :] = tok_logits
    out_ref[OUT_ROWS - 1:OUT_ROWS, :] = loss * jnp.ones((1, C_PAD), jnp.float32)


# ------------------------------- parameters ---------------------------------
def init_params(key):
    ks = jax.random.split(key, 16)

    def nrm(k, shape, scale=0.05):
        return scale * jax.random.normal(k, shape, dtype=jnp.float32)

    def zeros(shape):
        return jnp.zeros(shape, jnp.float32)

    params = {
        'bert_proj_w': nrm(ks[0], (BERT_H, D_CONTENT)),
        'bert_proj_b': zeros((1, D_CONTENT)),
        'pos_emb': nrm(ks[1], (T_PAD, D_POSITION)),
        'emb_ln_g': jnp.ones((1, D_MODEL), jnp.float32),
        'emb_ln_b': zeros((1, D_MODEL)),
    }
    layers = []
    for l in range(LAYER_NUM):
        lk = jax.random.split(ks[2 + l], 8)
        layers.append(dict(
            wq=nrm(lk[0], (D_MODEL, D_MODEL)), bq=zeros((1, D_MODEL)),
            wk=nrm(lk[1], (D_MODEL, D_MODEL)), bk=zeros((1, D_MODEL)),
            wv=nrm(lk[2], (D_MODEL, D_MODEL)), bv=zeros((1, D_MODEL)),
            wo=nrm(lk[3], (D_MODEL, D_MODEL)), bo=zeros((1, D_MODEL)),
            ln1g=jnp.ones((1, D_MODEL), jnp.float32), ln1b=zeros((1, D_MODEL)),
            w1=nrm(lk[4], (D_MODEL, DIM_FF)), b1=zeros((1, DIM_FF)),
            w2=nrm(lk[5], (DIM_FF, D_MODEL)), b2=zeros((1, D_MODEL)),
            ln2g=jnp.ones((1, D_MODEL), jnp.float32), ln2b=zeros((1, D_MODEL)),
        ))
    params['layers'] = layers
    params['subtree_cls'] = dict(
        w1=nrm(ks[8], (D_MODEL, LABEL_HIDDEN)), b1=zeros((1, LABEL_HIDDEN)),
        g=jnp.ones((1, LABEL_HIDDEN), jnp.float32), beta=zeros((1, LABEL_HIDDEN)),
        w2=nrm(ks[9], (LABEL_HIDDEN, N_SUBTREE)), b2=zeros((1, N_SUBTREE)))
    params['head_cls'] = dict(
        w1=nrm(ks[10], (D_MODEL, LABEL_HIDDEN)), b1=zeros((1, LABEL_HIDDEN)),
        g=jnp.ones((1, LABEL_HIDDEN), jnp.float32), beta=zeros((1, LABEL_HIDDEN)),
        w2=nrm(ks[11], (LABEL_HIDDEN, N_TOKEN)), b2=zeros((1, N_TOKEN)))
    params['token_cls'] = dict(
        w=nrm(ks[12], (D_MODEL, N_TOKEN)), b=zeros((1, N_TOKEN)))
    return params


def prepare_kernel_slabs(p):
    """Host-side re-layout: fuse QKV, fold the Encoder's partition-recombination
    permutation and forward/backward shift into the classifier weights, pad
    class dims to 128 lanes, and pack everything into two 128-lane slabs."""
    w_slab = jnp.zeros((W_ROWS, LANES), jnp.float32)
    b_slab = jnp.zeros((B_ROWS, LANES), jnp.float32)

    def put_w(slab, name, mat):
        off = W_OFF[name]
        return slab.at[off:off + mat.shape[0], :mat.shape[1]].set(mat)

    def put_b(slab, name, vec):
        off = B_OFF[name]
        return slab.at[off:off + 1, :vec.shape[1]].set(vec)

    # embedding tail: bert_proj weights land in lanes 0..D_CONTENT-1 of a
    # D_MODEL-wide (zero-padded) matmul; proj bias is folded into the data slab
    w_slab = put_w(w_slab, 'wp', p['bert_proj_w'])
    b_slab = put_b(b_slab, 'emb_g', p['emb_ln_g'])
    b_slab = put_b(b_slab, 'emb_b', p['emb_ln_b'])

    for l, lp in enumerate(p['layers']):
        wqkv = jnp.concatenate([lp['wq'], lp['wk'], lp['wv']], axis=1)   # [32,96]
        bqkv = jnp.concatenate([lp['bq'], lp['bk'], lp['bv']], axis=1)   # [1,96]
        w_slab = put_w(w_slab, f'wqkv{l}', wqkv)
        w_slab = put_w(w_slab, f'wo{l}', lp['wo'])
        w_slab = put_w(w_slab, f'w1{l}', lp['w1'])
        w_slab = put_w(w_slab, f'w2{l}', lp['w2'])
        b_slab = put_b(b_slab, f'bqkv{l}', bqkv)
        b_slab = put_b(b_slab, f'bo{l}', lp['bo'])
        b_slab = put_b(b_slab, f'ln1g{l}', lp['ln1g'])
        b_slab = put_b(b_slab, f'ln1b{l}', lp['ln1b'])
        b_slab = put_b(b_slab, f'b1{l}', lp['b1'])
        b_slab = put_b(b_slab, f'b2{l}', lp['b2'])
        b_slab = put_b(b_slab, f'ln2g{l}', lp['ln2g'])
        b_slab = put_b(b_slab, f'ln2b{l}', lp['ln2b'])

    def fold_partition(w):
        # words_repr[b,t,m] = h[b,t,2m] (m<16) | h[b,t+1, 2(m-16)+1] (m>=16)
        # so  feat @ W  ==  h[b,t] @ Wa + h[b,t+1] @ Wb  (exact permutation fold)
        out = w.shape[1]
        wa = jnp.zeros((D_MODEL, out), jnp.float32).at[0::2, :].set(w[:D_MODEL // 2, :])
        wb = jnp.zeros((D_MODEL, out), jnp.float32).at[1::2, :].set(w[D_MODEL // 2:, :])
        return wa, wb

    def pad_classes(w, b, n_real):
        wp_ = jnp.zeros((w.shape[0], C_PAD), jnp.float32).at[:, :n_real].set(w)
        bp_ = jnp.full((1, C_PAD), -1e9, jnp.float32).at[:, :n_real].set(b)
        return wp_, bp_

    for prefix, cls, n_cls in (('sub', p['subtree_cls'], N_SUBTREE),
                               ('hd', p['head_cls'], N_TOKEN)):
        w1a, w1b = fold_partition(cls['w1'])
        w2p, b2p = pad_classes(cls['w2'], cls['b2'], n_cls)
        w_slab = put_w(w_slab, prefix + '_w1a', w1a)
        w_slab = put_w(w_slab, prefix + '_w1b', w1b)
        w_slab = put_w(w_slab, prefix + '_w2', w2p)
        b_slab = put_b(b_slab, prefix + '_b1', cls['b1'])
        b_slab = put_b(b_slab, prefix + '_g', cls['g'])
        b_slab = put_b(b_slab, prefix + '_beta', cls['beta'])
        b_slab = put_b(b_slab, prefix + '_b2', b2p)

    tc = p['token_cls']
    wpad, bpad = pad_classes(tc['w'], tc['b'], N_TOKEN)
    wa, wb = fold_partition(wpad)
    w_slab = put_w(w_slab, 'tok_wa', wa)
    w_slab = put_w(w_slab, 'tok_wb', wb)
    b_slab = put_b(b_slab, 'tok_b', bpad)
    return w_slab, b_slab


def prepare_data_slab(p, bert_emb, mask_f):
    """Pack bert embeddings, pre-materialized position emb (+proj bias), and the
    block-diagonal additive attention mask into one [3*BT, 128] slab."""
    bert2 = bert_emb.reshape(BT, BERT_H)
    pos_full = jnp.concatenate(
        [jnp.broadcast_to(p['bert_proj_b'], (T_PAD, D_CONTENT)), p['pos_emb']],
        axis=1)                                       # [T_PAD, D_MODEL]
    pos_full = jnp.tile(pos_full, (B, 1))             # [BT, D_MODEL]
    batch_idx = jnp.arange(BT) // T_PAD
    key_valid = mask_f.reshape(BT) > 0.5
    abias = jnp.where(
        (batch_idx[:, None] == batch_idx[None, :]) & key_valid[None, :],
        0.0, -1e9).astype(jnp.float32)                # [BT, BT]
    data = jnp.zeros((DATA_ROWS, LANES), jnp.float32)
    data = data.at[0:BT, :BERT_H].set(bert2)
    data = data.at[BT:2 * BT, :D_MODEL].set(pos_full)
    data = data.at[2 * BT:3 * BT, :BT].set(abias)
    return data


def build_meta(sub_spans, hd_spans, msk_pos):
    rows = []
    for (b, i, j, lab) in sub_spans:
        rows.append([b * T_PAD + i, b * T_PAD + j, lab, 0])
    for (b, i, j, lab) in hd_spans:
        rows.append([b * T_PAD + i, b * T_PAD + j, lab, 0])
    for (b, t, lab) in msk_pos:
        f = b * T_PAD + t
        rows.append([f, f, lab, 0])
    while len(rows) < META_ROWS:
        rows.append([0, 0, 0, 0])
    return jnp.asarray(rows, dtype=jnp.int32)


# ------------------------------- forward ------------------------------------
def pretrain_forward(w_slab, b_slab, data_slab, meta):
    grid_spec = pltpu.PrefetchScalarGridSpec(
        num_scalar_prefetch=1,
        grid=(1,),
        in_specs=[
            pl.BlockSpec((DATA_ROWS, LANES), lambda i, meta: (0, 0)),
            pl.BlockSpec((W_ROWS, LANES), lambda i, meta: (0, 0)),
            pl.BlockSpec((B_ROWS, LANES), lambda i, meta: (0, 0)),
        ],
        out_specs=pl.BlockSpec((OUT_ROWS, C_PAD), lambda i, meta: (0, 0)),
    )
    out = pl.pallas_call(
        fused_pretrain_kernel,
        out_shape=jax.ShapeDtypeStruct((OUT_ROWS, C_PAD), jnp.float32),
        grid_spec=grid_spec,
        compiler_params=pltpu.CompilerParams(
            dimension_semantics=("arbitrary",)),
    )(meta, data_slab, w_slab, b_slab)

    loss = out[OUT_ROWS - 1, 0]
    sub_logits = out[0:N_SUB, :N_SUBTREE]
    hd_logits = out[N_SUB:N_SUB + N_HEADSPAN, :N_TOKEN]
    tok_logits = out[N_SUB + N_HEADSPAN:N_GATHER, :N_TOKEN]
    return loss, sub_logits, hd_logits, tok_logits


def get_pred(sub_logits, head_logits, tok_logits, sub_gold, head_gold, tok_gold):
    sub_pred = jnp.argmax(sub_logits, axis=1)
    head_pred = jnp.argmax(head_logits, axis=1)
    tok_pred = jnp.argmax(tok_logits, axis=1)
    return (int(sub_gold.shape[0]), int(jnp.sum(sub_pred == sub_gold)),
            int(head_gold.shape[0]), int(jnp.sum(head_pred == head_gold)),
            int(tok_gold.shape[0]), int(jnp.sum(tok_pred == tok_gold)))


# --------------------------------- main --------------------------------------
if __name__ == "__main__":
    key = jax.random.PRNGKey(0)
    pkey, dkey = jax.random.split(key)
    params = init_params(pkey)
    w_slab, b_slab = prepare_kernel_slabs(params)

    # synthetic "BERT" embeddings (post subword pooling) for 2 sentences of
    # lengths [8, 6]; sequence padded to T_PAD=16, padding masked out below.
    bert_emb = jax.random.normal(dkey, (B, T_PAD, BERT_H), dtype=jnp.float32)

    snt_lens = [8, 6]
    mask_rows = [[1.0] * (sl + 2) + [0.0] * (T_PAD - sl - 2) for sl in snt_lens]
    mask_f = jnp.asarray(mask_rows, dtype=jnp.float32)          # [B, T_PAD]
    data_slab = prepare_data_slab(params, bert_emb, mask_f)

    # subtree spans: (batch, i, j, label) ; children spans: (batch, i, j, label)
    # masked-LM positions: (batch, word_idx, label)
    sub_spans = [(0, 1, 4, 3), (1, 0, 2, 5)]
    hd_spans = [(0, 1, 2, 7), (0, 2, 4, 1), (1, 0, 1, 2)]
    msk_pos = [(0, 3, 11), (1, 5, 2)]
    meta = build_meta(sub_spans, hd_spans, msk_pos)

    total_loss, sub_logits, hd_logits, tok_logits = pretrain_forward(
        w_slab, b_slab, data_slab, meta)
    jax.block_until_ready(total_loss)

    sub_gold = jnp.asarray([s[3] for s in sub_spans], dtype=jnp.int32)
    hd_gold = jnp.asarray([s[3] for s in hd_spans], dtype=jnp.int32)
    tok_gold = jnp.asarray([s[2] for s in msk_pos], dtype=jnp.int32)
    _ = get_pred(sub_logits, hd_logits, tok_logits, sub_gold, hd_gold, tok_gold)
    print("KERNEL_OK")
</pallas_src>

<mosaic_0001>
module attributes {stable_mosaic.version = 11 : i64} {
  func.func @fused_pretrain_kernel(%arg0: i32, %arg1: memref<8x4xi32, #tpu.memory_space<smem>>, %arg2: memref<96x128xf32, #tpu.memory_space<vmem>>, %arg3: memref<608x128xf32, #tpu.memory_space<vmem>>, %arg4: memref<32x128xf32, #tpu.memory_space<vmem>>, %arg5: memref<8x128xf32, #tpu.memory_space<vmem>>) attributes {dimension_semantics = [#tpu.dimension_semantics<arbitrary>], iteration_bounds = array<i64: 1>, scalar_prefetch = 1 : i64, scratch_operands = 0 : i64, tpu.core_type = #tpu.core_type<tc>, window_params = [{pipeline_mode = #tpu.pipeline_mode<synchronous>, transform_indices = @transform_0, window_bounds = array<i64: 96, 128>}, {pipeline_mode = #tpu.pipeline_mode<synchronous>, transform_indices = @transform_1, window_bounds = array<i64: 608, 128>}, {pipeline_mode = #tpu.pipeline_mode<synchronous>, transform_indices = @transform_2, window_bounds = array<i64: 32, 128>}, {pipeline_mode = #tpu.pipeline_mode<synchronous>, transform_indices = @transform_3, window_bounds = array<i64: 8, 128>}]} {
    %c0 = arith.constant 0 : index
    %c0_0 = arith.constant 0 : index
    %0 = vector.load %arg2[%c0, %c0_0] : memref<96x128xf32, #tpu.memory_space<vmem>>, vector<32x48xf32>
    %c32 = arith.constant 32 : index
    %c0_1 = arith.constant 0 : index
    %1 = vector.load %arg2[%c32, %c0_1] : memref<96x128xf32, #tpu.memory_space<vmem>>, vector<32x32xf32>
    %c64 = arith.constant 64 : index
    %c0_2 = arith.constant 0 : index
    %2 = vector.load %arg2[%c64, %c0_2] : memref<96x128xf32, #tpu.memory_space<vmem>>, vector<32x32xf32>
    %c0_3 = arith.constant 0 : index
    %c0_4 = arith.constant 0 : index
    %3 = vector.load %arg3[%c0_3, %c0_4] : memref<608x128xf32, #tpu.memory_space<vmem>>, vector<48x32xf32>
    %4 = arith.truncf %0 : vector<32x48xf32> to vector<32x48xbf16>
    %5 = arith.truncf %3 : vector<48x32xf32> to vector<48x32xbf16>
    %cst = arith.constant dense<0.000000e+00> : vector<32x32xf32>
    %6 = tpu.matmul %4, %5, %cst {dimension_numbers = #tpu.dot_dimension_numbers<[1], [0], [0], [1], [0, 0, 1, 1], [], []>} : vector<32x48xbf16>, vector<48x32xbf16>, vector<32x32xf32> -> vector<32x32xf32>
    %7 = arith.addf %6, %1 : vector<32x32xf32>
    %c0_5 = arith.constant 0 : index
    %c0_6 = arith.constant 0 : index
    %8 = vector.load %arg4[%c0_5, %c0_6] : memref<32x128xf32, #tpu.memory_space<vmem>>, vector<1x32xf32>
    %c1 = arith.constant 1 : index
    %c0_7 = arith.constant 0 : index
    %9 = vector.load %arg4[%c1, %c0_7] : memref<32x128xf32, #tpu.memory_space<vmem>>, vector<1x32xf32>
    %cst_8 = arith.constant dense<0.000000e+00> : vector<32xf32>
    %10 = vector.multi_reduction <add>, %7, %cst_8 [1] : vector<32x32xf32> to vector<32xf32>
    %11 = vector.shape_cast %10 : vector<32xf32> to vector<32x1xf32>
    %cst_9 = arith.constant 3.200000e+01 : f32
    %12 = vector.broadcast %cst_9 : f32 to vector<32x1xf32>
    %13 = arith.divf %11, %12 : vector<32x1xf32>
    %14 = vector.broadcast %13 : vector<32x1xf32> to vector<32x32xf32>
    %15 = arith.subf %7, %14 : vector<32x32xf32>
    %16 = arith.mulf %15, %15 : vector<32x32xf32>
    %cst_10 = arith.constant dense<0.000000e+00> : vector<32xf32>
    %17 = vector.multi_reduction <add>, %16, %cst_10 [1] : vector<32x32xf32> to vector<32xf32>
    %18 = vector.shape_cast %17 : vector<32xf32> to vector<32x1xf32>
    %cst_11 = arith.constant 3.200000e+01 : f32
    %19 = vector.broadcast %cst_11 : f32 to vector<32x1xf32>
    %20 = arith.divf %18, %19 : vector<32x1xf32>
    %21 = vector.broadcast %13 : vector<32x1xf32> to vector<32x32xf32>
    %22 = arith.subf %7, %21 : vector<32x32xf32>
    %cst_12 = arith.constant 9.99999974E-6 : f32
    %23 = vector.broadcast %cst_12 : f32 to vector<32x1xf32>
    %24 = arith.addf %20, %23 : vector<32x1xf32>
    %25 = math.rsqrt %24 : vector<32x1xf32>
    %26 = vector.broadcast %25 : vector<32x1xf32> to vector<32x32xf32>
    %27 = arith.mulf %22, %26 : vector<32x32xf32>
    %28 = vector.broadcast %8 : vector<1x32xf32> to vector<32x32xf32>
    %29 = arith.mulf %27, %28 : vector<32x32xf32>
    %30 = vector.broadcast %9 : vector<1x32xf32> to vector<32x32xf32>
    %31 = arith.addf %29, %30 : vector<32x32xf32>
    %c48 = arith.constant 48 : index
    %c0_13 = arith.constant 0 : index
    %32 = vector.load %arg3[%c48, %c0_13] : memref<608x128xf32, #tpu.memory_space<vmem>>, vector<32x128xf32>
    %33 = arith.truncf %31 : vector<32x32xf32> to vector<32x32xbf16>
    %34 = arith.truncf %32 : vector<32x128xf32> to vector<32x128xbf16>
    %cst_14 = arith.constant dense<0.000000e+00> : vector<32x128xf32>
    %35 = tpu.matmul %33, %34, %cst_14 {dimension_numbers = #tpu.dot_dimension_numbers<[1], [0], [0], [1], [0, 0, 1, 1], [], []>} : vector<32x32xbf16>, vector<32x128xbf16>, vector<32x128xf32> -> vector<32x128xf32>
    %c2 = arith.constant 2 : index
    %c0_15 = arith.constant 0 : index
    %36 = vector.load %arg4[%c2, %c0_15] : memref<32x128xf32, #tpu.memory_space<vmem>>, vector<1x128xf32>
    %37 = vector.broadcast %36 : vector<1x128xf32> to vector<32x128xf32>
    %38 = arith.addf %35, %37 : vector<32x128xf32>
    %39 = vector.extract_strided_slice %38 {offsets = [0, 0], sizes = [32, 16], strides = [1, 1]} : vector<32x128xf32> to vector<32x16xf32>
    %40 = vector.extract_strided_slice %38 {offsets = [0, 32], sizes = [32, 16], strides = [1, 1]} : vector<32x128xf32> to vector<32x16xf32>
    %41 = vector.extract_strided_slice %38 {offsets = [0, 64], sizes = [32, 16], strides = [1, 1]} : vector<32x128xf32> to vector<32x16xf32>
    %42 = arith.truncf %39 : vector<32x16xf32> to vector<32x16xbf16>
    %43 = arith.truncf %40 : vector<32x16xf32> to vector<32x16xbf16>
    %cst_16 = arith.constant dense<0.000000e+00> : vector<32x32xf32>
    %44 = tpu.matmul %42, %43, %cst_16 {dimension_numbers = #tpu.dot_dimension_numbers<[1], [1], [0], [0], [0, 0, 1, 0], [], []>} : vector<32x16xbf16>, vector<32x16xbf16>, vector<32x32xf32> -> vector<32x32xf32>
    %cst_17 = arith.constant 2.500000e-01 : f32
    %45 = vector.broadcast %cst_17 : f32 to vector<32x32xf32>
    %46 = arith.mulf %44, %45 : vector<32x32xf32>
    %47 = arith.addf %46, %2 : vector<32x32xf32>
    %cst_18 = arith.constant dense<0xFF800000> : vector<32xf32>
    %48 = vector.multi_reduction <maximumf>, %47, %cst_18 [1] : vector<32x32xf32> to vector<32xf32>
    %49 = vector.shape_cast %48 : vector<32xf32> to vector<32x1xf32>
    %50 = vector.broadcast %49 : vector<32x1xf32> to vector<32x32xf32>
    %51 = arith.subf %47, %50 : vector<32x32xf32>
    %52 = math.exp %51 : vector<32x32xf32>
    %cst_19 = arith.constant dense<0.000000e+00> : vector<32xf32>
    %53 = vector.multi_reduction <add>, %52, %cst_19 [1] : vector<32x32xf32> to vector<32xf32>
    %54 = vector.shape_cast %53 : vector<32xf32> to vector<32x1xf32>
    %55 = tpu.reciprocal %54 {approx = true} : vector<32x1xf32> -> vector<32x1xf32>
    %56 = vector.broadcast %55 : vector<32x1xf32> to vector<32x32xf32>
    %57 = arith.mulf %52, %56 : vector<32x32xf32>
    %58 = arith.truncf %57 : vector<32x32xf32> to vector<32x32xbf16>
    %59 = arith.truncf %41 : vector<32x16xf32> to vector<32x16xbf16>
    %cst_20 = arith.constant dense<0.000000e+00> : vector<32x16xf32>
    %60 = tpu.matmul %58, %59, %cst_20 {dimension_numbers = #tpu.dot_dimension_numbers<[1], [0], [0], [1], [0, 0, 1, 1], [], []>} : vector<32x32xbf16>, vector<32x16xbf16>, vector<32x16xf32> -> vector<32x16xf32>
    %61 = vector.extract_strided_slice %38 {offsets = [0, 16], sizes = [32, 16], strides = [1, 1]} : vector<32x128xf32> to vector<32x16xf32>
    %62 = vector.extract_strided_slice %38 {offsets = [0, 48], sizes = [32, 16], strides = [1, 1]} : vector<32x128xf32> to vector<32x16xf32>
    %63 = vector.extract_strided_slice %38 {offsets = [0, 80], sizes = [32, 16], strides = [1, 1]} : vector<32x128xf32> to vector<32x16xf32>
    %64 = arith.truncf %61 : vector<32x16xf32> to vector<32x16xbf16>
    %65 = arith.truncf %62 : vector<32x16xf32> to vector<32x16xbf16>
    %cst_21 = arith.constant dense<0.000000e+00> : vector<32x32xf32>
    %66 = tpu.matmul %64, %65, %cst_21 {dimension_numbers = #tpu.dot_dimension_numbers<[1], [1], [0], [0], [0, 0, 1, 0], [], []>} : vector<32x16xbf16>, vector<32x16xbf16>, vector<32x32xf32> -> vector<32x32xf32>
    %cst_22 = arith.constant 2.500000e-01 : f32
    %67 = vector.broadcast %cst_22 : f32 to vector<32x32xf32>
    %68 = arith.mulf %66, %67 : vector<32x32xf32>
    %69 = arith.addf %68, %2 : vector<32x32xf32>
    %cst_23 = arith.constant dense<0xFF800000> : vector<32xf32>
    %70 = vector.multi_reduction <maximumf>, %69, %cst_23 [1] : vector<32x32xf32> to vector<32xf32>
    %71 = vector.shape_cast %70 : vector<32xf32> to vector<32x1xf32>
    %72 = vector.broadcast %71 : vector<32x1xf32> to vector<32x32xf32>
    %73 = arith.subf %69, %72 : vector<32x32xf32>
    %74 = math.exp %73 : vector<32x32xf32>
    %cst_24 = arith.constant dense<0.000000e+00> : vector<32xf32>
    %75 = vector.multi_reduction <add>, %74, %cst_24 [1] : vector<32x32xf32> to vector<32xf32>
    %76 = vector.shape_cast %75 : vector<32xf32> to vector<32x1xf32>
    %77 = tpu.reciprocal %76 {approx = true} : vector<32x1xf32> -> vector<32x1xf32>
    %78 = vector.broadcast %77 : vector<32x1xf32> to vector<32x32xf32>
    %79 = arith.mulf %74, %78 : vector<32x32xf32>
    %80 = arith.truncf %79 : vector<32x32xf32> to vector<32x32xbf16>
    %81 = arith.truncf %63 : vector<32x16xf32> to vector<32x16xbf16>
    %cst_25 = arith.constant dense<0.000000e+00> : vector<32x16xf32>
    %82 = tpu.matmul %80, %81, %cst_25 {dimension_numbers = #tpu.dot_dimension_numbers<[1], [0], [0], [1], [0, 0, 1, 1], [], []>} : vector<32x32xbf16>, vector<32x16xbf16>, vector<32x16xf32> -> vector<32x16xf32>
    %83 = tpu.concatenate %60, %82 in 1 : vector<32x16xf32>, vector<32x16xf32> -> vector<32x32xf32>
    %c80 = arith.constant 80 : index
    %c0_26 = arith.constant 0 : index
    %84 = vector.load %arg3[%c80, %c0_26] : memref<608x128xf32, #tpu.memory_space<vmem>>, vector<32x32xf32>
    %85 = arith.truncf %83 : vector<32x32xf32> to vector<32x32xbf16>
    %86 = arith.truncf %84 : vector<32x32xf32> to vector<32x32xbf16>
    %cst_27 = arith.constant dense<0.000000e+00> : vector<32x32xf32>
    %87 = tpu.matmul %85, %86, %cst_27 {dimension_numbers = #tpu.dot_dimension_numbers<[1], [0], [0], [1], [0, 0, 1, 1], [], []>} : vector<32x32xbf16>, vector<32x32xbf16>, vector<32x32xf32> -> vector<32x32xf32>
    %c3 = arith.constant 3 : index
    %c0_28 = arith.constant 0 : index
    %88 = vector.load %arg4[%c3, %c0_28] : memref<32x128xf32, #tpu.memory_space<vmem>>, vector<1x32xf32>
    %89 = vector.broadcast %88 : vector<1x32xf32> to vector<32x32xf32>
    %90 = arith.addf %87, %89 : vector<32x32xf32>
    %91 = arith.addf %31, %90 : vector<32x32xf32>
    %c4 = arith.constant 4 : index
    %c0_29 = arith.constant 0 : index
    %92 = vector.load %arg4[%c4, %c0_29] : memref<32x128xf32, #tpu.memory_space<vmem>>, vector<1x32xf32>
    %c5 = arith.constant 5 : index
    %c0_30 = arith.constant 0 : index
    %93 = vector.load %arg4[%c5, %c0_30] : memref<32x128xf32, #tpu.memory_space<vmem>>, vector<1x32xf32>
    %cst_31 = arith.constant dense<0.000000e+00> : vector<32xf32>
    %94 = vector.multi_reduction <add>, %91, %cst_31 [1] : vector<32x32xf32> to vector<32xf32>
    %95 = vector.shape_cast %94 : vector<32xf32> to vector<32x1xf32>
    %cst_32 = arith.constant 3.200000e+01 : f32
    %96 = vector.broadcast %cst_32 : f32 to vector<32x1xf32>
    %97 = arith.divf %95, %96 : vector<32x1xf32>
    %98 = vector.broadcast %97 : vector<32x1xf32> to vector<32x32xf32>
    %99 = arith.subf %91, %98 : vector<32x32xf32>
    %100 = arith.mulf %99, %99 : vector<32x32xf32>
    %cst_33 = arith.constant dense<0.000000e+00> : vector<32xf32>
    %101 = vector.multi_reduction <add>, %100, %cst_33 [1] : vector<32x32xf32> to vector<32xf32>
    %102 = vector.shape_cast %101 : vector<32xf32> to vector<32x1xf32>
    %cst_34 = arith.constant 3.200000e+01 : f32
    %103 = vector.broadcast %cst_34 : f32 to vector<32x1xf32>
    %104 = arith.divf %102, %103 : vector<32x1xf32>
    %105 = vector.broadcast %97 : vector<32x1xf32> to vector<32x32xf32>
    %106 = arith.subf %91, %105 : vector<32x32xf32>
    %cst_35 = arith.constant 9.99999974E-6 : f32
    %107 = vector.broadcast %cst_35 : f32 to vector<32x1xf32>
    %108 = arith.addf %104, %107 : vector<32x1xf32>
    %109 = math.rsqrt %108 : vector<32x1xf32>
    %110 = vector.broadcast %109 : vector<32x1xf32> to vector<32x32xf32>
    %111 = arith.mulf %106, %110 : vector<32x32xf32>
    %112 = vector.broadcast %92 : vector<1x32xf32> to vector<32x32xf32>
    %113 = arith.mulf %111, %112 : vector<32x32xf32>
    %114 = vector.broadcast %93 : vector<1x32xf32> to vector<32x32xf32>
    %115 = arith.addf %113, %114 : vector<32x32xf32>
    %c112 = arith.constant 112 : index
    %c0_36 = arith.constant 0 : index
    %116 = vector.load %arg3[%c112, %c0_36] : memref<608x128xf32, #tpu.memory_space<vmem>>, vector<32x64xf32>
    %117 = arith.truncf %115 : vector<32x32xf32> to vector<32x32xbf16>
    %118 = arith.truncf %116 : vector<32x64xf32> to vector<32x64xbf16>
    %cst_37 = arith.constant dense<0.000000e+00> : vector<32x64xf32>
    %119 = tpu.matmul %117, %118, %cst_37 {dimension_numbers = #tpu.dot_dimension_numbers<[1], [0], [0], [1], [0, 0, 1, 1], [], []>} : vector<32x32xbf16>, vector<32x64xbf16>, vector<32x64xf32> -> vector<32x64xf32>
    %c6 = arith.constant 6 : index
    %c0_38 = arith.constant 0 : index
    %120 = vector.load %arg4[%c6, %c0_38] : memref<32x128xf32, #tpu.memory_space<vmem>>, vector<1x64xf32>
    %121 = vector.broadcast %120 : vector<1x64xf32> to vector<32x64xf32>
    %122 = arith.addf %119, %121 : vector<32x64xf32>
    %cst_39 = arith.constant 0.000000e+00 : f32
    %123 = vector.broadcast %cst_39 : f32 to vector<32x64xf32>
    %124 = arith.maximumf %122, %123 : vector<32x64xf32>
    %c144 = arith.constant 144 : index
    %c0_40 = arith.constant 0 : index
    %125 = vector.load %arg3[%c144, %c0_40] : memref<608x128xf32, #tpu.memory_space<vmem>>, vector<64x32xf32>
    %126 = arith.truncf %124 : vector<32x64xf32> to vector<32x64xbf16>
    %127 = arith.truncf %125 : vector<64x32xf32> to vector<64x32xbf16>
    %cst_41 = arith.constant dense<0.000000e+00> : vector<32x32xf32>
    %128 = tpu.matmul %126, %127, %cst_41 {dimension_numbers = #tpu.dot_dimension_numbers<[1], [0], [0], [1], [0, 0, 1, 1], [], []>} : vector<32x64xbf16>, vector<64x32xbf16>, vector<32x32xf32> -> vector<32x32xf32>
    %c7 = arith.constant 7 : index
    %c0_42 = arith.constant 0 : index
    %129 = vector.load %arg4[%c7, %c0_42] : memref<32x128xf32, #tpu.memory_space<vmem>>, vector<1x32xf32>
    %130 = vector.broadcast %129 : vector<1x32xf32> to vector<32x32xf32>
    %131 = arith.addf %128, %130 : vector<32x32xf32>
    %132 = arith.addf %115, %131 : vector<32x32xf32>
    %c8 = arith.constant 8 : index
    %c0_43 = arith.constant 0 : index
    %133 = vector.load %arg4[%c8, %c0_43] : memref<32x128xf32, #tpu.memory_space<vmem>>, vector<1x32xf32>
    %c9 = arith.constant 9 : index
    %c0_44 = arith.constant 0 : index
    %134 = vector.load %arg4[%c9, %c0_44] : memref<32x128xf32, #tpu.memory_space<vmem>>, vector<1x32xf32>
    %cst_45 = arith.constant dense<0.000000e+00> : vector<32xf32>
    %135 = vector.multi_reduction <add>, %132, %cst_45 [1] : vector<32x32xf32> to vector<32xf32>
    %136 = vector.shape_cast %135 : vector<32xf32> to vector<32x1xf32>
    %cst_46 = arith.constant 3.200000e+01 : f32
    %137 = vector.broadcast %cst_46 : f32 to vector<32x1xf32>
    %138 = arith.divf %136, %137 : vector<32x1xf32>
    %139 = vector.broadcast %138 : vector<32x1xf32> to vector<32x32xf32>
    %140 = arith.subf %132, %139 : vector<32x32xf32>
    %141 = arith.mulf %140, %140 : vector<32x32xf32>
    %cst_47 = arith.constant dense<0.000000e+00> : vector<32xf32>
    %142 = vector.multi_reduction <add>, %141, %cst_47 [1] : vector<32x32xf32> to vector<32xf32>
    %143 = vector.shape_cast %142 : vector<32xf32> to vector<32x1xf32>
    %cst_48 = arith.constant 3.200000e+01 : f32
    %144 = vector.broadcast %cst_48 : f32 to vector<32x1xf32>
    %145 = arith.divf %143, %144 : vector<32x1xf32>
    %146 = vector.broadcast %138 : vector<32x1xf32> to vector<32x32xf32>
    %147 = arith.subf %132, %146 : vector<32x32xf32>
    %cst_49 = arith.constant 9.99999974E-6 : f32
    %148 = vector.broadcast %cst_49 : f32 to vector<32x1xf32>
    %149 = arith.addf %145, %148 : vector<32x1xf32>
    %150 = math.rsqrt %149 : vector<32x1xf32>
    %151 = vector.broadcast %150 : vector<32x1xf32> to vector<32x32xf32>
    %152 = arith.mulf %147, %151 : vector<32x32xf32>
    %153 = vector.broadcast %133 : vector<1x32xf32> to vector<32x32xf32>
    %154 = arith.mulf %152, %153 : vector<32x32xf32>
    %155 = vector.broadcast %134 : vector<1x32xf32> to vector<32x32xf32>
    %156 = arith.addf %154, %155 : vector<32x32xf32>
    %c208 = arith.constant 208 : index
    %c0_50 = arith.constant 0 : index
    %157 = vector.load %arg3[%c208, %c0_50] : memref<608x128xf32, #tpu.memory_space<vmem>>, vector<32x128xf32>
    %158 = arith.truncf %156 : vector<32x32xf32> to vector<32x32xbf16>
    %159 = arith.truncf %157 : vector<32x128xf32> to vector<32x128xbf16>
    %cst_51 = arith.constant dense<0.000000e+00> : vector<32x128xf32>
    %160 = tpu.matmul %158, %159, %cst_51 {dimension_numbers = #tpu.dot_dimension_numbers<[1], [0], [0], [1], [0, 0, 1, 1], [], []>} : vector<32x32xbf16>, vector<32x128xbf16>, vector<32x128xf32> -> vector<32x128xf32>
    %c10 = arith.constant 10 : index
    %c0_52 = arith.constant 0 : index
    %161 = vector.load %arg4[%c10, %c0_52] : memref<32x128xf32, #tpu.memory_space<vmem>>, vector<1x128xf32>
    %162 = vector.broadcast %161 : vector<1x128xf32> to vector<32x128xf32>
    %163 = arith.addf %160, %162 : vector<32x128xf32>
    %164 = vector.extract_strided_slice %163 {offsets = [0, 0], sizes = [32, 16], strides = [1, 1]} : vector<32x128xf32> to vector<32x16xf32>
    %165 = vector.extract_strided_slice %163 {offsets = [0, 32], sizes = [32, 16], strides = [1, 1]} : vector<32x128xf32> to vector<32x16xf32>
    %166 = vector.extract_strided_slice %163 {offsets = [0, 64], sizes = [32, 16], strides = [1, 1]} : vector<32x128xf32> to vector<32x16xf32>
    %167 = arith.truncf %164 : vector<32x16xf32> to vector<32x16xbf16>
    %168 = arith.truncf %165 : vector<32x16xf32> to vector<32x16xbf16>
    %cst_53 = arith.constant dense<0.000000e+00> : vector<32x32xf32>
    %169 = tpu.matmul %167, %168, %cst_53 {dimension_numbers = #tpu.dot_dimension_numbers<[1], [1], [0], [0], [0, 0, 1, 0], [], []>} : vector<32x16xbf16>, vector<32x16xbf16>, vector<32x32xf32> -> vector<32x32xf32>
    %cst_54 = arith.constant 2.500000e-01 : f32
    %170 = vector.broadcast %cst_54 : f32 to vector<32x32xf32>
    %171 = arith.mulf %169, %170 : vector<32x32xf32>
    %172 = arith.addf %171, %2 : vector<32x32xf32>
    %cst_55 = arith.constant dense<0xFF800000> : vector<32xf32>
    %173 = vector.multi_reduction <maximumf>, %172, %cst_55 [1] : vector<32x32xf32> to vector<32xf32>
    %174 = vector.shape_cast %173 : vector<32xf32> to vector<32x1xf32>
    %175 = vector.broadcast %174 : vector<32x1xf32> to vector<32x32xf32>
    %176 = arith.subf %172, %175 : vector<32x32xf32>
    %177 = math.exp %176 : vector<32x32xf32>
    %cst_56 = arith.constant dense<0.000000e+00> : vector<32xf32>
    %178 = vector.multi_reduction <add>, %177, %cst_56 [1] : vector<32x32xf32> to vector<32xf32>
    %179 = vector.shape_cast %178 : vector<32xf32> to vector<32x1xf32>
    %180 = tpu.reciprocal %179 {approx = true} : vector<32x1xf32> -> vector<32x1xf32>
    %181 = vector.broadcast %180 : vector<32x1xf32> to vector<32x32xf32>
    %182 = arith.mulf %177, %181 : vector<32x32xf32>
    %183 = arith.truncf %182 : vector<32x32xf32> to vector<32x32xbf16>
    %184 = arith.truncf %166 : vector<32x16xf32> to vector<32x16xbf16>
    %cst_57 = arith.constant dense<0.000000e+00> : vector<32x16xf32>
    %185 = tpu.matmul %183, %184, %cst_57 {dimension_numbers = #tpu.dot_dimension_numbers<[1], [0], [0], [1], [0, 0, 1, 1], [], []>} : vector<32x32xbf16>, vector<32x16xbf16>, vector<32x16xf32> -> vector<32x16xf32>
    %186 = vector.extract_strided_slice %163 {offsets = [0, 16], sizes = [32, 16], strides = [1, 1]} : vector<32x128xf32> to vector<32x16xf32>
    %187 = vector.extract_strided_slice %163 {offsets = [0, 48], sizes = [32, 16], strides = [1, 1]} : vector<32x128xf32> to vector<32x16xf32>
    %188 = vector.extract_strided_slice %163 {offsets = [0, 80], sizes = [32, 16], strides = [1, 1]} : vector<32x128xf32> to vector<32x16xf32>
    %189 = arith.truncf %186 : vector<32x16xf32> to vector<32x16xbf16>
    %190 = arith.truncf %187 : vector<32x16xf32> to vector<32x16xbf16>
    %cst_58 = arith.constant dense<0.000000e+00> : vector<32x32xf32>
    %191 = tpu.matmul %189, %190, %cst_58 {dimension_numbers = #tpu.dot_dimension_numbers<[1], [1], [0], [0], [0, 0, 1, 0], [], []>} : vector<32x16xbf16>, vector<32x16xbf16>, vector<32x32xf32> -> vector<32x32xf32>
    %cst_59 = arith.constant 2.500000e-01 : f32
    %192 = vector.broadcast %cst_59 : f32 to vector<32x32xf32>
    %193 = arith.mulf %191, %192 : vector<32x32xf32>
    %194 = arith.addf %193, %2 : vector<32x32xf32>
    %cst_60 = arith.constant dense<0xFF800000> : vector<32xf32>
    %195 = vector.multi_reduction <maximumf>, %194, %cst_60 [1] : vector<32x32xf32> to vector<32xf32>
    %196 = vector.shape_cast %195 : vector<32xf32> to vector<32x1xf32>
    %197 = vector.broadcast %196 : vector<32x1xf32> to vector<32x32xf32>
    %198 = arith.subf %194, %197 : vector<32x32xf32>
    %199 = math.exp %198 : vector<32x32xf32>
    %cst_61 = arith.constant dense<0.000000e+00> : vector<32xf32>
    %200 = vector.multi_reduction <add>, %199, %cst_61 [1] : vector<32x32xf32> to vector<32xf32>
    %201 = vector.shape_cast %200 : vector<32xf32> to vector<32x1xf32>
    %202 = tpu.reciprocal %201 {approx = true} : vector<32x1xf32> -> vector<32x1xf32>
    %203 = vector.broadcast %202 : vector<32x1xf32> to vector<32x32xf32>
    %204 = arith.mulf %199, %203 : vector<32x32xf32>
    %205 = arith.truncf %204 : vector<32x32xf32> to vector<32x32xbf16>
    %206 = arith.truncf %188 : vector<32x16xf32> to vector<32x16xbf16>
    %cst_62 = arith.constant dense<0.000000e+00> : vector<32x16xf32>
    %207 = tpu.matmul %205, %206, %cst_62 {dimension_numbers = #tpu.dot_dimension_numbers<[1], [0], [0], [1], [0, 0, 1, 1], [], []>} : vector<32x32xbf16>, vector<32x16xbf16>, vector<32x16xf32> -> vector<32x16xf32>
    %208 = tpu.concatenate %185, %207 in 1 : vector<32x16xf32>, vector<32x16xf32> -> vector<32x32xf32>
    %c240 = arith.constant 240 : index
    %c0_63 = arith.constant 0 : index
    %209 = vector.load %arg3[%c240, %c0_63] : memref<608x128xf32, #tpu.memory_space<vmem>>, vector<32x32xf32>
    %210 = arith.truncf %208 : vector<32x32xf32> to vector<32x32xbf16>
    %211 = arith.truncf %209 : vector<32x32xf32> to vector<32x32xbf16>
    %cst_64 = arith.constant dense<0.000000e+00> : vector<32x32xf32>
    %212 = tpu.matmul %210, %211, %cst_64 {dimension_numbers = #tpu.dot_dimension_numbers<[1], [0], [0], [1], [0, 0, 1, 1], [], []>} : vector<32x32xbf16>, vector<32x32xbf16>, vector<32x32xf32> -> vector<32x32xf32>
    %c11 = arith.constant 11 : index
    %c0_65 = arith.constant 0 : index
    %213 = vector.load %arg4[%c11, %c0_65] : memref<32x128xf32, #tpu.memory_space<vmem>>, vector<1x32xf32>
    %214 = vector.broadcast %213 : vector<1x32xf32> to vector<32x32xf32>
    %215 = arith.addf %212, %214 : vector<32x32xf32>
    %216 = arith.addf %156, %215 : vector<32x32xf32>
    %c12 = arith.constant 12 : index
    %c0_66 = arith.constant 0 : index
    %217 = vector.load %arg4[%c12, %c0_66] : memref<32x128xf32, #tpu.memory_space<vmem>>, vector<1x32xf32>
    %c13 = arith.constant 13 : index
    %c0_67 = arith.constant 0 : index
    %218 = vector.load %arg4[%c13, %c0_67] : memref<32x128xf32, #tpu.memory_space<vmem>>, vector<1x32xf32>
    %cst_68 = arith.constant dense<0.000000e+00> : vector<32xf32>
    %219 = vector.multi_reduction <add>, %216, %cst_68 [1] : vector<32x32xf32> to vector<32xf32>
    %220 = vector.shape_cast %219 : vector<32xf32> to vector<32x1xf32>
    %cst_69 = arith.constant 3.200000e+01 : f32
    %221 = vector.broadcast %cst_69 : f32 to vector<32x1xf32>
    %222 = arith.divf %220, %221 : vector<32x1xf32>
    %223 = vector.broadcast %222 : vector<32x1xf32> to vector<32x32xf32>
    %224 = arith.subf %216, %223 : vector<32x32xf32>
    %225 = arith.mulf %224, %224 : vector<32x32xf32>
    %cst_70 = arith.constant dense<0.000000e+00> : vector<32xf32>
    %226 = vector.multi_reduction <add>, %225, %cst_70 [1] : vector<32x32xf32> to vector<32xf32>
    %227 = vector.shape_cast %226 : vector<32xf32> to vector<32x1xf32>
    %cst_71 = arith.constant 3.200000e+01 : f32
    %228 = vector.broadcast %cst_71 : f32 to vector<32x1xf32>
    %229 = arith.divf %227, %228 : vector<32x1xf32>
    %230 = vector.broadcast %222 : vector<32x1xf32> to vector<32x32xf32>
    %231 = arith.subf %216, %230 : vector<32x32xf32>
    %cst_72 = arith.constant 9.99999974E-6 : f32
    %232 = vector.broadcast %cst_72 : f32 to vector<32x1xf32>
    %233 = arith.addf %229, %232 : vector<32x1xf32>
    %234 = math.rsqrt %233 : vector<32x1xf32>
    %235 = vector.broadcast %234 : vector<32x1xf32> to vector<32x32xf32>
    %236 = arith.mulf %231, %235 : vector<32x32xf32>
    %237 = vector.broadcast %217 : vector<1x32xf32> to vector<32x32xf32>
    %238 = arith.mulf %236, %237 : vector<32x32xf32>
    %239 = vector.broadcast %218 : vector<1x32xf32> to vector<32x32xf32>
    %240 = arith.addf %238, %239 : vector<32x32xf32>
    %c272 = arith.constant 272 : index
    %c0_73 = arith.constant 0 : index
    %241 = vector.load %arg3[%c272, %c0_73] : memref<608x128xf32, #tpu.memory_space<vmem>>, vector<32x64xf32>
    %242 = arith.truncf %240 : vector<32x32xf32> to vector<32x32xbf16>
    %243 = arith.truncf %241 : vector<32x64xf32> to vector<32x64xbf16>
    %cst_74 = arith.constant dense<0.000000e+00> : vector<32x64xf32>
    %244 = tpu.matmul %242, %243, %cst_74 {dimension_numbers = #tpu.dot_dimension_numbers<[1], [0], [0], [1], [0, 0, 1, 1], [], []>} : vector<32x32xbf16>, vector<32x64xbf16>, vector<32x64xf32> -> vector<32x64xf32>
    %c14 = arith.constant 14 : index
    %c0_75 = arith.constant 0 : index
    %245 = vector.load %arg4[%c14, %c0_75] : memref<32x128xf32, #tpu.memory_space<vmem>>, vector<1x64xf32>
    %246 = vector.broadcast %245 : vector<1x64xf32> to vector<32x64xf32>
    %247 = arith.addf %244, %246 : vector<32x64xf32>
    %cst_76 = arith.constant 0.000000e+00 : f32
    %248 = vector.broadcast %cst_76 : f32 to vector<32x64xf32>
    %249 = arith.maximumf %247, %248 : vector<32x64xf32>
    %c304 = arith.constant 304 : index
    %c0_77 = arith.constant 0 : index
    %250 = vector.load %arg3[%c304, %c0_77] : memref<608x128xf32, #tpu.memory_space<vmem>>, vector<64x32xf32>
    %251 = arith.truncf %249 : vector<32x64xf32> to vector<32x64xbf16>
    %252 = arith.truncf %250 : vector<64x32xf32> to vector<64x32xbf16>
    %cst_78 = arith.constant dense<0.000000e+00> : vector<32x32xf32>
    %253 = tpu.matmul %251, %252, %cst_78 {dimension_numbers = #tpu.dot_dimension_numbers<[1], [0], [0], [1], [0, 0, 1, 1], [], []>} : vector<32x64xbf16>, vector<64x32xbf16>, vector<32x32xf32> -> vector<32x32xf32>
    %c15 = arith.constant 15 : index
    %c0_79 = arith.constant 0 : index
    %254 = vector.load %arg4[%c15, %c0_79] : memref<32x128xf32, #tpu.memory_space<vmem>>, vector<1x32xf32>
    %255 = vector.broadcast %254 : vector<1x32xf32> to vector<32x32xf32>
    %256 = arith.addf %253, %255 : vector<32x32xf32>
    %257 = arith.addf %240, %256 : vector<32x32xf32>
    %c16 = arith.constant 16 : index
    %c0_80 = arith.constant 0 : index
    %258 = vector.load %arg4[%c16, %c0_80] : memref<32x128xf32, #tpu.memory_space<vmem>>, vector<1x32xf32>
    %c17 = arith.constant 17 : index
    %c0_81 = arith.constant 0 : index
    %259 = vector.load %arg4[%c17, %c0_81] : memref<32x128xf32, #tpu.memory_space<vmem>>, vector<1x32xf32>
    %cst_82 = arith.constant dense<0.000000e+00> : vector<32xf32>
    %260 = vector.multi_reduction <add>, %257, %cst_82 [1] : vector<32x32xf32> to vector<32xf32>
    %261 = vector.shape_cast %260 : vector<32xf32> to vector<32x1xf32>
    %cst_83 = arith.constant 3.200000e+01 : f32
    %262 = vector.broadcast %cst_83 : f32 to vector<32x1xf32>
    %263 = arith.divf %261, %262 : vector<32x1xf32>
    %264 = vector.broadcast %263 : vector<32x1xf32> to vector<32x32xf32>
    %265 = arith.subf %257, %264 : vector<32x32xf32>
    %266 = arith.mulf %265, %265 : vector<32x32xf32>
    %cst_84 = arith.constant dense<0.000000e+00> : vector<32xf32>
    %267 = vector.multi_reduction <add>, %266, %cst_84 [1] : vector<32x32xf32> to vector<32xf32>
    %268 = vector.shape_cast %267 : vector<32xf32> to vector<32x1xf32>
    %cst_85 = arith.constant 3.200000e+01 : f32
    %269 = vector.broadcast %cst_85 : f32 to vector<32x1xf32>
    %270 = arith.divf %268, %269 : vector<32x1xf32>
    %271 = vector.broadcast %263 : vector<32x1xf32> to vector<32x32xf32>
    %272 = arith.subf %257, %271 : vector<32x32xf32>
    %cst_86 = arith.constant 9.99999974E-6 : f32
    %273 = vector.broadcast %cst_86 : f32 to vector<32x1xf32>
    %274 = arith.addf %270, %273 : vector<32x1xf32>
    %275 = math.rsqrt %274 : vector<32x1xf32>
    %276 = vector.broadcast %275 : vector<32x1xf32> to vector<32x32xf32>
    %277 = arith.mulf %272, %276 : vector<32x32xf32>
    %278 = vector.broadcast %258 : vector<1x32xf32> to vector<32x32xf32>
    %279 = arith.mulf %277, %278 : vector<32x32xf32>
    %280 = vector.broadcast %259 : vector<1x32xf32> to vector<32x32xf32>
    %281 = arith.addf %279, %280 : vector<32x32xf32>
    %282 = tpu.iota {dimensions = array<i32: 1>} : vector<16x32xi32>
    %283 = tpu.iota {dimensions = array<i32: 0>} : vector<16x32xi32>
    %cst_87 = arith.constant 0.000000e+00 : f32
    %284 = vector.broadcast %cst_87 : f32 to vector<16x32xf32>
    %c0_88 = arith.constant 0 : index
    %c0_89 = arith.constant 0 : index
    %285 = memref.load %arg1[%c0_88, %c0_89] : memref<8x4xi32, #tpu.memory_space<smem>>
    %c0_90 = arith.constant 0 : index
    %c1_91 = arith.constant 1 : index
    %286 = memref.load %arg1[%c0_90, %c1_91] : memref<8x4xi32, #tpu.memory_space<smem>>
    %c0_i32 = arith.constant 0 : i32
    %287 = vector.broadcast %c0_i32 : i32 to vector<16x32xi32>
    %288 = arith.cmpi eq, %283, %287 : vector<16x32xi32>
    %289 = vector.broadcast %286 : i32 to vector<16x32xi32>
    %290 = arith.cmpi eq, %282, %289 : vector<16x32xi32>
    %291 = arith.andi %288, %290 : vector<16x32xi1>
    %c8_i32 = arith.constant 8 : i32
    %292 = vector.broadcast %c8_i32 : i32 to vector<16x32xi32>
    %293 = arith.cmpi eq, %283, %292 : vector<16x32xi32>
    %c1_i32 = arith.constant 1 : i32
    %294 = arith.addi %286, %c1_i32 : i32
    %295 = vector.broadcast %294 : i32 to vector<16x32xi32>
    %296 = arith.cmpi eq, %282, %295 : vector<16x32xi32>
    %297 = arith.andi %293, %296 : vector<16x32xi1>
    %298 = arith.ori %291, %297 : vector<16x32xi1>
    %c0_i32_92 = arith.constant 0 : i32
    %299 = vector.broadcast %c0_i32_92 : i32 to vector<16x32xi32>
    %300 = arith.cmpi eq, %283, %299 : vector<16x32xi32>
    %301 = vector.broadcast %285 : i32 to vector<16x32xi32>
    %302 = arith.cmpi eq, %282, %301 : vector<16x32xi32>
    %303 = arith.andi %300, %302 : vector<16x32xi1>
    %c8_i32_93 = arith.constant 8 : i32
    %304 = vector.broadcast %c8_i32_93 : i32 to vector<16x32xi32>
    %305 = arith.cmpi eq, %283, %304 : vector<16x32xi32>
    %c1_i32_94 = arith.constant 1 : i32
    %306 = arith.addi %285, %c1_i32_94 : i32
    %307 = vector.broadcast %306 : i32 to vector<16x32xi32>
    %308 = arith.cmpi eq, %282, %307 : vector<16x32xi32>
    %309 = arith.andi %305, %308 : vector<16x32xi1>
    %310 = arith.ori %303, %309 : vector<16x32xi1>
    %311 = arith.extui %298 : vector<16x32xi1> to vector<16x32xi32>
    %312 = arith.sitofp %311 : vector<16x32xi32> to vector<16x32xf32>
    %313 = arith.addf %284, %312 : vector<16x32xf32>
    %314 = arith.extui %310 : vector<16x32xi1> to vector<16x32xi32>
    %315 = arith.sitofp %314 : vector<16x32xi32> to vector<16x32xf32>
    %316 = arith.subf %313, %315 : vector<16x32xf32>
    %c1_95 = arith.constant 1 : index
    %c0_96 = arith.constant 0 : index
    %317 = memref.load %arg1[%c1_95, %c0_96] : memref<8x4xi32, #tpu.memory_space<smem>>
    %c1_97 = arith.constant 1 : index
    %c1_98 = arith.constant 1 : index
    %318 = memref.load %arg1[%c1_97, %c1_98] : memref<8x4xi32, #tpu.memory_space<smem>>
    %c1_i32_99 = arith.constant 1 : i32
    %319 = vector.broadcast %c1_i32_99 : i32 to vector<16x32xi32>
    %320 = arith.cmpi eq, %283, %319 : vector<16x32xi32>
    %321 = vector.broadcast %318 : i32 to vector<16x32xi32>
    %322 = arith.cmpi eq, %282, %321 : vector<16x32xi32>
    %323 = arith.andi %320, %322 : vector<16x32xi1>
    %c9_i32 = arith.constant 9 : i32
    %324 = vector.broadcast %c9_i32 : i32 to vector<16x32xi32>
    %325 = arith.cmpi eq, %283, %324 : vector<16x32xi32>
    %c1_i32_100 = arith.constant 1 : i32
    %326 = arith.addi %318, %c1_i32_100 : i32
    %327 = vector.broadcast %326 : i32 to vector<16x32xi32>
    %328 = arith.cmpi eq, %282, %327 : vector<16x32xi32>
    %329 = arith.andi %325, %328 : vector<16x32xi1>
    %330 = arith.ori %323, %329 : vector<16x32xi1>
    %c1_i32_101 = arith.constant 1 : i32
    %331 = vector.broadcast %c1_i32_101 : i32 to vector<16x32xi32>
    %332 = arith.cmpi eq, %283, %331 : vector<16x32xi32>
    %333 = vector.broadcast %317 : i32 to vector<16x32xi32>
    %334 = arith.cmpi eq, %282, %333 : vector<16x32xi32>
    %335 = arith.andi %332, %334 : vector<16x32xi1>
    %c9_i32_102 = arith.constant 9 : i32
    %336 = vector.broadcast %c9_i32_102 : i32 to vector<16x32xi32>
    %337 = arith.cmpi eq, %283, %336 : vector<16x32xi32>
    %c1_i32_103 = arith.constant 1 : i32
    %338 = arith.addi %317, %c1_i32_103 : i32
    %339 = vector.broadcast %338 : i32 to vector<16x32xi32>
    %340 = arith.cmpi eq, %282, %339 : vector<16x32xi32>
    %341 = arith.andi %337, %340 : vector<16x32xi1>
    %342 = arith.ori %335, %341 : vector<16x32xi1>
    %343 = arith.extui %330 : vector<16x32xi1> to vector<16x32xi32>
    %344 = arith.sitofp %343 : vector<16x32xi32> to vector<16x32xf32>
    %345 = arith.addf %316, %344 : vector<16x32xf32>
    %346 = arith.extui %342 : vector<16x32xi1> to vector<16x32xi32>
    %347 = arith.sitofp %346 : vector<16x32xi32> to vector<16x32xf32>
    %348 = arith.subf %345, %347 : vector<16x32xf32>
    %c2_104 = arith.constant 2 : index
    %c0_105 = arith.constant 0 : index
    %349 = memref.load %arg1[%c2_104, %c0_105] : memref<8x4xi32, #tpu.memory_space<smem>>
    %c2_106 = arith.constant 2 : index
    %c1_107 = arith.constant 1 : index
    %350 = memref.load %arg1[%c2_106, %c1_107] : memref<8x4xi32, #tpu.memory_space<smem>>
    %c2_i32 = arith.constant 2 : i32
    %351 = vector.broadcast %c2_i32 : i32 to vector<16x32xi32>
    %352 = arith.cmpi eq, %283, %351 : vector<16x32xi32>
    %353 = vector.broadcast %350 : i32 to vector<16x32xi32>
    %354 = arith.cmpi eq, %282, %353 : vector<16x32xi32>
    %355 = arith.andi %352, %354 : vector<16x32xi1>
    %c10_i32 = arith.constant 10 : i32
    %356 = vector.broadcast %c10_i32 : i32 to vector<16x32xi32>
    %357 = arith.cmpi eq, %283, %356 : vector<16x32xi32>
    %c1_i32_108 = arith.constant 1 : i32
    %358 = arith.addi %350, %c1_i32_108 : i32
    %359 = vector.broadcast %358 : i32 to vector<16x32xi32>
    %360 = arith.cmpi eq, %282, %359 : vector<16x32xi32>
    %361 = arith.andi %357, %360 : vector<16x32xi1>
    %362 = arith.ori %355, %361 : vector<16x32xi1>
    %c2_i32_109 = arith.constant 2 : i32
    %363 = vector.broadcast %c2_i32_109 : i32 to vector<16x32xi32>
    %364 = arith.cmpi eq, %283, %363 : vector<16x32xi32>
    %365 = vector.broadcast %349 : i32 to vector<16x32xi32>
    %366 = arith.cmpi eq, %282, %365 : vector<16x32xi32>
    %367 = arith.andi %364, %366 : vector<16x32xi1>
    %c10_i32_110 = arith.constant 10 : i32
    %368 = vector.broadcast %c10_i32_110 : i32 to vector<16x32xi32>
    %369 = arith.cmpi eq, %283, %368 : vector<16x32xi32>
    %c1_i32_111 = arith.constant 1 : i32
    %370 = arith.addi %349, %c1_i32_111 : i32
    %371 = vector.broadcast %370 : i32 to vector<16x32xi32>
    %372 = arith.cmpi eq, %282, %371 : vector<16x32xi32>
    %373 = arith.andi %369, %372 : vector<16x32xi1>
    %374 = arith.ori %367, %373 : vector<16x32xi1>
    %375 = arith.extui %362 : vector<16x32xi1> to vector<16x32xi32>
    %376 = arith.sitofp %375 : vector<16x32xi32> to vector<16x32xf32>
    %377 = arith.addf %348, %376 : vector<16x32xf32>
    %378 = arith.extui %374 : vector<16x32xi1> to vector<16x32xi32>
    %379 = arith.sitofp %378 : vector<16x32xi32> to vector<16x32xf32>
    %380 = arith.subf %377, %379 : vector<16x32xf32>
    %c3_112 = arith.constant 3 : index
    %c0_113 = arith.constant 0 : index
    %381 = memref.load %arg1[%c3_112, %c0_113] : memref<8x4xi32, #tpu.memory_space<smem>>
    %c3_114 = arith.constant 3 : index
    %c1_115 = arith.constant 1 : index
    %382 = memref.load %arg1[%c3_114, %c1_115] : memref<8x4xi32, #tpu.memory_space<smem>>
    %c3_i32 = arith.constant 3 : i32
    %383 = vector.broadcast %c3_i32 : i32 to vector<16x32xi32>
    %384 = arith.cmpi eq, %283, %383 : vector<16x32xi32>
    %385 = vector.broadcast %382 : i32 to vector<16x32xi32>
    %386 = arith.cmpi eq, %282, %385 : vector<16x32xi32>
    %387 = arith.andi %384, %386 : vector<16x32xi1>
    %c11_i32 = arith.constant 11 : i32
    %388 = vector.broadcast %c11_i32 : i32 to vector<16x32xi32>
    %389 = arith.cmpi eq, %283, %388 : vector<16x32xi32>
    %c1_i32_116 = arith.constant 1 : i32
    %390 = arith.addi %382, %c1_i32_116 : i32
    %391 = vector.broadcast %390 : i32 to vector<16x32xi32>
    %392 = arith.cmpi eq, %282, %391 : vector<16x32xi32>
    %393 = arith.andi %389, %392 : vector<16x32xi1>
    %394 = arith.ori %387, %393 : vector<16x32xi1>
    %c3_i32_117 = arith.constant 3 : i32
    %395 = vector.broadcast %c3_i32_117 : i32 to vector<16x32xi32>
    %396 = arith.cmpi eq, %283, %395 : vector<16x32xi32>
    %397 = vector.broadcast %381 : i32 to vector<16x32xi32>
    %398 = arith.cmpi eq, %282, %397 : vector<16x32xi32>
    %399 = arith.andi %396, %398 : vector<16x32xi1>
    %c11_i32_118 = arith.constant 11 : i32
    %400 = vector.broadcast %c11_i32_118 : i32 to vector<16x32xi32>
    %401 = arith.cmpi eq, %283, %400 : vector<16x32xi32>
    %c1_i32_119 = arith.constant 1 : i32
    %402 = arith.addi %381, %c1_i32_119 : i32
    %403 = vector.broadcast %402 : i32 to vector<16x32xi32>
    %404 = arith.cmpi eq, %282, %403 : vector<16x32xi32>
    %405 = arith.andi %401, %404 : vector<16x32xi1>
    %406 = arith.ori %399, %405 : vector<16x32xi1>
    %407 = arith.extui %394 : vector<16x32xi1> to vector<16x32xi32>
    %408 = arith.sitofp %407 : vector<16x32xi32> to vector<16x32xf32>
    %409 = arith.addf %380, %408 : vector<16x32xf32>
    %410 = arith.extui %406 : vector<16x32xi1> to vector<16x32xi32>
    %411 = arith.sitofp %410 : vector<16x32xi32> to vector<16x32xf32>
    %412 = arith.subf %409, %411 : vector<16x32xf32>
    %c4_120 = arith.constant 4 : index
    %c0_121 = arith.constant 0 : index
    %413 = memref.load %arg1[%c4_120, %c0_121] : memref<8x4xi32, #tpu.memory_space<smem>>
    %c4_122 = arith.constant 4 : index
    %c1_123 = arith.constant 1 : index
    %414 = memref.load %arg1[%c4_122, %c1_123] : memref<8x4xi32, #tpu.memory_space<smem>>
    %c4_i32 = arith.constant 4 : i32
    %415 = vector.broadcast %c4_i32 : i32 to vector<16x32xi32>
    %416 = arith.cmpi eq, %283, %415 : vector<16x32xi32>
    %417 = vector.broadcast %414 : i32 to vector<16x32xi32>
    %418 = arith.cmpi eq, %282, %417 : vector<16x32xi32>
    %419 = arith.andi %416, %418 : vector<16x32xi1>
    %c12_i32 = arith.constant 12 : i32
    %420 = vector.broadcast %c12_i32 : i32 to vector<16x32xi32>
    %421 = arith.cmpi eq, %283, %420 : vector<16x32xi32>
    %c1_i32_124 = arith.constant 1 : i32
    %422 = arith.addi %414, %c1_i32_124 : i32
    %423 = vector.broadcast %422 : i32 to vector<16x32xi32>
    %424 = arith.cmpi eq, %282, %423 : vector<16x32xi32>
    %425 = arith.andi %421, %424 : vector<16x32xi1>
    %426 = arith.ori %419, %425 : vector<16x32xi1>
    %c4_i32_125 = arith.constant 4 : i32
    %427 = vector.broadcast %c4_i32_125 : i32 to vector<16x32xi32>
    %428 = arith.cmpi eq, %283, %427 : vector<16x32xi32>
    %429 = vector.broadcast %413 : i32 to vector<16x32xi32>
    %430 = arith.cmpi eq, %282, %429 : vector<16x32xi32>
    %431 = arith.andi %428, %430 : vector<16x32xi1>
    %c12_i32_126 = arith.constant 12 : i32
    %432 = vector.broadcast %c12_i32_126 : i32 to vector<16x32xi32>
    %433 = arith.cmpi eq, %283, %432 : vector<16x32xi32>
    %c1_i32_127 = arith.constant 1 : i32
    %434 = arith.addi %413, %c1_i32_127 : i32
    %435 = vector.broadcast %434 : i32 to vector<16x32xi32>
    %436 = arith.cmpi eq, %282, %435 : vector<16x32xi32>
    %437 = arith.andi %433, %436 : vector<16x32xi1>
    %438 = arith.ori %431, %437 : vector<16x32xi1>
    %439 = arith.extui %426 : vector<16x32xi1> to vector<16x32xi32>
    %440 = arith.sitofp %439 : vector<16x32xi32> to vector<16x32xf32>
    %441 = arith.addf %412, %440 : vector<16x32xf32>
    %442 = arith.extui %438 : vector<16x32xi1> to vector<16x32xi32>
    %443 = arith.sitofp %442 : vector<16x32xi32> to vector<16x32xf32>
    %444 = arith.subf %441, %443 : vector<16x32xf32>
    %c5_128 = arith.constant 5 : index
    %c0_129 = arith.constant 0 : index
    %445 = memref.load %arg1[%c5_128, %c0_129] : memref<8x4xi32, #tpu.memory_space<smem>>
    %c5_i32 = arith.constant 5 : i32
    %446 = vector.broadcast %c5_i32 : i32 to vector<16x32xi32>
    %447 = arith.cmpi eq, %283, %446 : vector<16x32xi32>
    %448 = vector.broadcast %445 : i32 to vector<16x32xi32>
    %449 = arith.cmpi eq, %282, %448 : vector<16x32xi32>
    %450 = arith.andi %447, %449 : vector<16x32xi1>
    %c13_i32 = arith.constant 13 : i32
    %451 = vector.broadcast %c13_i32 : i32 to vector<16x32xi32>
    %452 = arith.cmpi eq, %283, %451 : vector<16x32xi32>
    %c1_i32_130 = arith.constant 1 : i32
    %453 = arith.addi %445, %c1_i32_130 : i32
    %454 = vector.broadcast %453 : i32 to vector<16x32xi32>
    %455 = arith.cmpi eq, %282, %454 : vector<16x32xi32>
    %456 = arith.andi %452, %455 : vector<16x32xi1>
    %457 = arith.ori %450, %456 : vector<16x32xi1>
    %458 = arith.extui %457 : vector<16x32xi1> to vector<16x32xi32>
    %459 = arith.sitofp %458 : vector<16x32xi32> to vector<16x32xf32>
    %460 = arith.addf %444, %459 : vector<16x32xf32>
    %c6_131 = arith.constant 6 : index
    %c0_132 = arith.constant 0 : index
    %461 = memref.load %arg1[%c6_131, %c0_132] : memref<8x4xi32, #tpu.memory_space<smem>>
    %c6_i32 = arith.constant 6 : i32
    %462 = vector.broadcast %c6_i32 : i32 to vector<16x32xi32>
    %463 = arith.cmpi eq, %283, %462 : vector<16x32xi32>
    %464 = vector.broadcast %461 : i32 to vector<16x32xi32>
    %465 = arith.cmpi eq, %282, %464 : vector<16x32xi32>
    %466 = arith.andi %463, %465 : vector<16x32xi1>
    %c14_i32 = arith.constant 14 : i32
    %467 = vector.broadcast %c14_i32 : i32 to vector<16x32xi32>
    %468 = arith.cmpi eq, %283, %467 : vector<16x32xi32>
    %c1_i32_133 = arith.constant 1 : i32
    %469 = arith.addi %461, %c1_i32_133 : i32
    %470 = vector.broadcast %469 : i32 to vector<16x32xi32>
    %471 = arith.cmpi eq, %282, %470 : vector<16x32xi32>
    %472 = arith.andi %468, %471 : vector<16x32xi1>
    %473 = arith.ori %466, %472 : vector<16x32xi1>
    %474 = arith.extui %473 : vector<16x32xi1> to vector<16x32xi32>
    %475 = arith.sitofp %474 : vector<16x32xi32> to vector<16x32xf32>
    %476 = arith.addf %460, %475 : vector<16x32xf32>
    %477 = arith.truncf %476 : vector<16x32xf32> to vector<16x32xbf16>
    %478 = arith.truncf %281 : vector<32x32xf32> to vector<32x32xbf16>
    %cst_134 = arith.constant dense<0.000000e+00> : vector<16x32xf32>
    %479 = tpu.matmul %477, %478, %cst_134 {dimension_numbers = #tpu.dot_dimension_numbers<[1], [0], [0], [1], [0, 0, 1, 1], [], []>} : vector<16x32xbf16>, vector<32x32xbf16>, vector<16x32xf32> -> vector<16x32xf32>
    %480 = vector.extract_strided_slice %479 {offsets = [0, 0], sizes = [8, 32], strides = [1, 1]} : vector<16x32xf32> to vector<8x32xf32>
    %481 = vector.extract_strided_slice %479 {offsets = [8, 0], sizes = [8, 32], strides = [1, 1]} : vector<16x32xf32> to vector<8x32xf32>
    %482 = vector.extract_strided_slice %480 {offsets = [0, 0], sizes = [2, 32], strides = [1, 1]} : vector<8x32xf32> to vector<2x32xf32>
    %483 = vector.extract_strided_slice %481 {offsets = [0, 0], sizes = [2, 32], strides = [1, 1]} : vector<8x32xf32> to vector<2x32xf32>
    %c368 = arith.constant 368 : index
    %c0_135 = arith.constant 0 : index
    %484 = vector.load %arg3[%c368, %c0_135] : memref<608x128xf32, #tpu.memory_space<vmem>>, vector<32x24xf32>
    %485 = arith.truncf %482 : vector<2x32xf32> to vector<2x32xbf16>
    %486 = arith.truncf %484 : vector<32x24xf32> to vector<32x24xbf16>
    %cst_136 = arith.constant dense<0.000000e+00> : vector<2x24xf32>
    %487 = tpu.matmul %485, %486, %cst_136 {dimension_numbers = #tpu.dot_dimension_numbers<[1], [0], [0], [1], [0, 0, 1, 1], [], []>} : vector<2x32xbf16>, vector<32x24xbf16>, vector<2x24xf32> -> vector<2x24xf32>
    %c400 = arith.constant 400 : index
    %c0_137 = arith.constant 0 : index
    %488 = vector.load %arg3[%c400, %c0_137] : memref<608x128xf32, #tpu.memory_space<vmem>>, vector<32x24xf32>
    %489 = arith.truncf %483 : vector<2x32xf32> to vector<2x32xbf16>
    %490 = arith.truncf %488 : vector<32x24xf32> to vector<32x24xbf16>
    %cst_138 = arith.constant dense<0.000000e+00> : vector<2x24xf32>
    %491 = tpu.matmul %489, %490, %cst_138 {dimension_numbers = #tpu.dot_dimension_numbers<[1], [0], [0], [1], [0, 0, 1, 1], [], []>} : vector<2x32xbf16>, vector<32x24xbf16>, vector<2x24xf32> -> vector<2x24xf32>
    %492 = arith.addf %487, %491 : vector<2x24xf32>
    %c18 = arith.constant 18 : index
    %c0_139 = arith.constant 0 : index
    %493 = vector.load %arg4[%c18, %c0_139] : memref<32x128xf32, #tpu.memory_space<vmem>>, vector<1x24xf32>
    %494 = vector.broadcast %493 : vector<1x24xf32> to vector<2x24xf32>
    %495 = arith.addf %492, %494 : vector<2x24xf32>
    %c19 = arith.constant 19 : index
    %c0_140 = arith.constant 0 : index
    %496 = vector.load %arg4[%c19, %c0_140] : memref<32x128xf32, #tpu.memory_space<vmem>>, vector<1x24xf32>
    %c20 = arith.constant 20 : index
    %c0_141 = arith.constant 0 : index
    %497 = vector.load %arg4[%c20, %c0_141] : memref<32x128xf32, #tpu.memory_space<vmem>>, vector<1x24xf32>
    %cst_142 = arith.constant dense<0.000000e+00> : vector<2xf32>
    %498 = vector.multi_reduction <add>, %495, %cst_142 [1] : vector<2x24xf32> to vector<2xf32>
    %499 = vector.shape_cast %498 : vector<2xf32> to vector<2x1xf32>
    %cst_143 = arith.constant 2.400000e+01 : f32
    %500 = vector.broadcast %cst_143 : f32 to vector<2x1xf32>
    %501 = arith.divf %499, %500 : vector<2x1xf32>
    %502 = vector.broadcast %501 : vector<2x1xf32> to vector<2x24xf32>
    %503 = arith.subf %495, %502 : vector<2x24xf32>
    %504 = arith.mulf %503, %503 : vector<2x24xf32>
    %cst_144 = arith.constant dense<0.000000e+00> : vector<2xf32>
    %505 = vector.multi_reduction <add>, %504, %cst_144 [1] : vector<2x24xf32> to vector<2xf32>
    %506 = vector.shape_cast %505 : vector<2xf32> to vector<2x1xf32>
    %cst_145 = arith.constant 2.400000e+01 : f32
    %507 = vector.broadcast %cst_145 : f32 to vector<2x1xf32>
    %508 = arith.divf %506, %507 : vector<2x1xf32>
    %509 = vector.broadcast %501 : vector<2x1xf32> to vector<2x24xf32>
    %510 = arith.subf %495, %509 : vector<2x24xf32>
    %cst_146 = arith.constant 9.99999974E-6 : f32
    %511 = vector.broadcast %cst_146 : f32 to vector<2x1xf32>
    %512 = arith.addf %508, %511 : vector<2x1xf32>
    %513 = math.rsqrt %512 : vector<2x1xf32>
    %514 = vector.broadcast %513 : vector<2x1xf32> to vector<2x24xf32>
    %515 = arith.mulf %510, %514 : vector<2x24xf32>
    %516 = vector.broadcast %496 : vector<1x24xf32> to vector<2x24xf32>
    %517 = arith.mulf %515, %516 : vector<2x24xf32>
    %518 = vector.broadcast %497 : vector<1x24xf32> to vector<2x24xf32>
    %519 = arith.addf %517, %518 : vector<2x24xf32>
    %cst_147 = arith.constant 0.000000e+00 : f32
    %520 = vector.broadcast %cst_147 : f32 to vector<2x24xf32>
    %521 = arith.maximumf %519, %520 : vector<2x24xf32>
    %c432 = arith.constant 432 : index
    %c0_148 = arith.constant 0 : index
    %522 = vector.load %arg3[%c432, %c0_148] : memref<608x128xf32, #tpu.memory_space<vmem>>, vector<24x128xf32>
    %523 = arith.truncf %521 : vector<2x24xf32> to vector<2x24xbf16>
    %524 = arith.truncf %522 : vector<24x128xf32> to vector<24x128xbf16>
    %cst_149 = arith.constant dense<0.000000e+00> : vector<2x128xf32>
    %525 = tpu.matmul %523, %524, %cst_149 {dimension_numbers = #tpu.dot_dimension_numbers<[1], [0], [0], [1], [0, 0, 1, 1], [], []>} : vector<2x24xbf16>, vector<24x128xbf16>, vector<2x128xf32> -> vector<2x128xf32>
    %c21 = arith.constant 21 : index
    %c0_150 = arith.constant 0 : index
    %526 = vector.load %arg4[%c21, %c0_150] : memref<32x128xf32, #tpu.memory_space<vmem>>, vector<1x128xf32>
    %527 = vector.broadcast %526 : vector<1x128xf32> to vector<2x128xf32>
    %528 = arith.addf %525, %527 : vector<2x128xf32>
    %529 = vector.extract_strided_slice %480 {offsets = [2, 0], sizes = [3, 32], strides = [1, 1]} : vector<8x32xf32> to vector<3x32xf32>
    %530 = vector.extract_strided_slice %481 {offsets = [2, 0], sizes = [3, 32], strides = [1, 1]} : vector<8x32xf32> to vector<3x32xf32>
    %c456 = arith.constant 456 : index
    %c0_151 = arith.constant 0 : index
    %531 = vector.load %arg3[%c456, %c0_151] : memref<608x128xf32, #tpu.memory_space<vmem>>, vector<32x24xf32>
    %532 = arith.truncf %529 : vector<3x32xf32> to vector<3x32xbf16>
    %533 = arith.truncf %531 : vector<32x24xf32> to vector<32x24xbf16>
    %cst_152 = arith.constant dense<0.000000e+00> : vector<3x24xf32>
    %534 = tpu.matmul %532, %533, %cst_152 {dimension_numbers = #tpu.dot_dimension_numbers<[1], [0], [0], [1], [0, 0, 1, 1], [], []>} : vector<3x32xbf16>, vector<32x24xbf16>, vector<3x24xf32> -> vector<3x24xf32>
    %c488 = arith.constant 488 : index
    %c0_153 = arith.constant 0 : index
    %535 = vector.load %arg3[%c488, %c0_153] : memref<608x128xf32, #tpu.memory_space<vmem>>, vector<32x24xf32>
    %536 = arith.truncf %530 : vector<3x32xf32> to vector<3x32xbf16>
    %537 = arith.truncf %535 : vector<32x24xf32> to vector<32x24xbf16>
    %cst_154 = arith.constant dense<0.000000e+00> : vector<3x24xf32>
    %538 = tpu.matmul %536, %537, %cst_154 {dimension_numbers = #tpu.dot_dimension_numbers<[1], [0], [0], [1], [0, 0, 1, 1], [], []>} : vector<3x32xbf16>, vector<32x24xbf16>, vector<3x24xf32> -> vector<3x24xf32>
    %539 = arith.addf %534, %538 : vector<3x24xf32>
    %c22 = arith.constant 22 : index
    %c0_155 = arith.constant 0 : index
    %540 = vector.load %arg4[%c22, %c0_155] : memref<32x128xf32, #tpu.memory_space<vmem>>, vector<1x24xf32>
    %541 = vector.broadcast %540 : vector<1x24xf32> to vector<3x24xf32>
    %542 = arith.addf %539, %541 : vector<3x24xf32>
    %c23 = arith.constant 23 : index
    %c0_156 = arith.constant 0 : index
    %543 = vector.load %arg4[%c23, %c0_156] : memref<32x128xf32, #tpu.memory_space<vmem>>, vector<1x24xf32>
    %c24 = arith.constant 24 : index
    %c0_157 = arith.constant 0 : index
    %544 = vector.load %arg4[%c24, %c0_157] : memref<32x128xf32, #tpu.memory_space<vmem>>, vector<1x24xf32>
    %cst_158 = arith.constant dense<0.000000e+00> : vector<3xf32>
    %545 = vector.multi_reduction <add>, %542, %cst_158 [1] : vector<3x24xf32> to vector<3xf32>
    %546 = vector.shape_cast %545 : vector<3xf32> to vector<3x1xf32>
    %cst_159 = arith.constant 2.400000e+01 : f32
    %547 = vector.broadcast %cst_159 : f32 to vector<3x1xf32>
    %548 = arith.divf %546, %547 : vector<3x1xf32>
    %549 = vector.broadcast %548 : vector<3x1xf32> to vector<3x24xf32>
    %550 = arith.subf %542, %549 : vector<3x24xf32>
    %551 = arith.mulf %550, %550 : vector<3x24xf32>
    %cst_160 = arith.constant dense<0.000000e+00> : vector<3xf32>
    %552 = vector.multi_reduction <add>, %551, %cst_160 [1] : vector<3x24xf32> to vector<3xf32>
    %553 = vector.shape_cast %552 : vector<3xf32> to vector<3x1xf32>
    %cst_161 = arith.constant 2.400000e+01 : f32
    %554 = vector.broadcast %cst_161 : f32 to vector<3x1xf32>
    %555 = arith.divf %553, %554 : vector<3x1xf32>
    %556 = vector.broadcast %548 : vector<3x1xf32> to vector<3x24xf32>
    %557 = arith.subf %542, %556 : vector<3x24xf32>
    %cst_162 = arith.constant 9.99999974E-6 : f32
    %558 = vector.broadcast %cst_162 : f32 to vector<3x1xf32>
    %559 = arith.addf %555, %558 : vector<3x1xf32>
    %560 = math.rsqrt %559 : vector<3x1xf32>
    %561 = vector.broadcast %560 : vector<3x1xf32> to vector<3x24xf32>
    %562 = arith.mulf %557, %561 : vector<3x24xf32>
    %563 = vector.broadcast %543 : vector<1x24xf32> to vector<3x24xf32>
    %564 = arith.mulf %562, %563 : vector<3x24xf32>
    %565 = vector.broadcast %544 : vector<1x24xf32> to vector<3x24xf32>
    %566 = arith.addf %564, %565 : vector<3x24xf32>
    %cst_163 = arith.constant 0.000000e+00 : f32
    %567 = vector.broadcast %cst_163 : f32 to vector<3x24xf32>
    %568 = arith.maximumf %566, %567 : vector<3x24xf32>
    %c520 = arith.constant 520 : index
    %c0_164 = arith.constant 0 : index
    %569 = vector.load %arg3[%c520, %c0_164] : memref<608x128xf32, #tpu.memory_space<vmem>>, vector<24x128xf32>
    %570 = arith.truncf %568 : vector<3x24xf32> to vector<3x24xbf16>
    %571 = arith.truncf %569 : vector<24x128xf32> to vector<24x128xbf16>
    %cst_165 = arith.constant dense<0.000000e+00> : vector<3x128xf32>
    %572 = tpu.matmul %570, %571, %cst_165 {dimension_numbers = #tpu.dot_dimension_numbers<[1], [0], [0], [1], [0, 0, 1, 1], [], []>} : vector<3x24xbf16>, vector<24x128xbf16>, vector<3x128xf32> -> vector<3x128xf32>
    %c25 = arith.constant 25 : index
    %c0_166 = arith.constant 0 : index
    %573 = vector.load %arg4[%c25, %c0_166] : memref<32x128xf32, #tpu.memory_space<vmem>>, vector<1x128xf32>
    %574 = vector.broadcast %573 : vector<1x128xf32> to vector<3x128xf32>
    %575 = arith.addf %572, %574 : vector<3x128xf32>
    %576 = vector.extract_strided_slice %480 {offsets = [5, 0], sizes = [2, 32], strides = [1, 1]} : vector<8x32xf32> to vector<2x32xf32>
    %577 = vector.extract_strided_slice %481 {offsets = [5, 0], sizes = [2, 32], strides = [1, 1]} : vector<8x32xf32> to vector<2x32xf32>
    %c544 = arith.constant 544 : index
    %c0_167 = arith.constant 0 : index
    %578 = vector.load %arg3[%c544, %c0_167] : memref<608x128xf32, #tpu.memory_space<vmem>>, vector<32x128xf32>
    %579 = arith.truncf %576 : vector<2x32xf32> to vector<2x32xbf16>
    %580 = arith.truncf %578 : vector<32x128xf32> to vector<32x128xbf16>
    %cst_168 = arith.constant dense<0.000000e+00> : vector<2x128xf32>
    %581 = tpu.matmul %579, %580, %cst_168 {dimension_numbers = #tpu.dot_dimension_numbers<[1], [0], [0], [1], [0, 0, 1, 1], [], []>} : vector<2x32xbf16>, vector<32x128xbf16>, vector<2x128xf32> -> vector<2x128xf32>
    %c576 = arith.constant 576 : index
    %c0_169 = arith.constant 0 : index
    %582 = vector.load %arg3[%c576, %c0_169] : memref<608x128xf32, #tpu.memory_space<vmem>>, vector<32x128xf32>
    %583 = arith.truncf %577 : vector<2x32xf32> to vector<2x32xbf16>
    %584 = arith.truncf %582 : vector<32x128xf32> to vector<32x128xbf16>
    %cst_170 = arith.constant dense<0.000000e+00> : vector<2x128xf32>
    %585 = tpu.matmul %583, %584, %cst_170 {dimension_numbers = #tpu.dot_dimension_numbers<[1], [0], [0], [1], [0, 0, 1, 1], [], []>} : vector<2x32xbf16>, vector<32x128xbf16>, vector<2x128xf32> -> vector<2x128xf32>
    %586 = arith.addf %581, %585 : vector<2x128xf32>
    %c26 = arith.constant 26 : index
    %c0_171 = arith.constant 0 : index
    %587 = vector.load %arg4[%c26, %c0_171] : memref<32x128xf32, #tpu.memory_space<vmem>>, vector<1x128xf32>
    %588 = vector.broadcast %587 : vector<1x128xf32> to vector<2x128xf32>
    %589 = arith.addf %586, %588 : vector<2x128xf32>
    %cst_172 = arith.constant dense<0xFF800000> : vector<2xf32>
    %590 = vector.multi_reduction <maximumf>, %528, %cst_172 [1] : vector<2x128xf32> to vector<2xf32>
    %591 = vector.shape_cast %590 : vector<2xf32> to vector<2x1xf32>
    %592 = vector.broadcast %591 : vector<2x1xf32> to vector<2x128xf32>
    %593 = arith.subf %528, %592 : vector<2x128xf32>
    %594 = math.exp %593 : vector<2x128xf32>
    %cst_173 = arith.constant dense<0.000000e+00> : vector<2xf32>
    %595 = vector.multi_reduction <add>, %594, %cst_173 [1] : vector<2x128xf32> to vector<2xf32>
    %596 = vector.shape_cast %595 : vector<2xf32> to vector<2x1xf32>
    %597 = math.log %596 : vector<2x1xf32>
    %598 = arith.addf %597, %591 : vector<2x1xf32>
    %599 = tpu.iota {dimensions = array<i32: 1>} : vector<2x128xi32>
    %600 = tpu.iota {dimensions = array<i32: 0>} : vector<2x128xi32>
    %cst_174 = arith.constant 0.000000e+00 : f32
    %601 = vector.broadcast %cst_174 : f32 to vector<2x128xf32>
    %c0_175 = arith.constant 0 : index
    %c2_176 = arith.constant 2 : index
    %602 = memref.load %arg1[%c0_175, %c2_176] : memref<8x4xi32, #tpu.memory_space<smem>>
    %c0_i32_177 = arith.constant 0 : i32
    %603 = vector.broadcast %c0_i32_177 : i32 to vector<2x128xi32>
    %604 = arith.cmpi eq, %600, %603 : vector<2x128xi32>
    %605 = vector.broadcast %602 : i32 to vector<2x128xi32>
    %606 = arith.cmpi eq, %599, %605 : vector<2x128xi32>
    %607 = arith.andi %604, %606 : vector<2x128xi1>
    %cst_178 = arith.constant 1.000000e+00 : f32
    %cst_179 = arith.constant 0.000000e+00 : f32
    %608 = vector.broadcast %cst_178 : f32 to vector<2x128xf32>
    %609 = vector.broadcast %cst_179 : f32 to vector<2x128xf32>
    %610 = arith.select %607, %608, %609 : vector<2x128xi1>, vector<2x128xf32>
    %611 = arith.addf %601, %610 : vector<2x128xf32>
    %c1_180 = arith.constant 1 : index
    %c2_181 = arith.constant 2 : index
    %612 = memref.load %arg1[%c1_180, %c2_181] : memref<8x4xi32, #tpu.memory_space<smem>>
    %c1_i32_182 = arith.constant 1 : i32
    %613 = vector.broadcast %c1_i32_182 : i32 to vector<2x128xi32>
    %614 = arith.cmpi eq, %600, %613 : vector<2x128xi32>
    %615 = vector.broadcast %612 : i32 to vector<2x128xi32>
    %616 = arith.cmpi eq, %599, %615 : vector<2x128xi32>
    %617 = arith.andi %614, %616 : vector<2x128xi1>
    %cst_183 = arith.constant 1.000000e+00 : f32
    %cst_184 = arith.constant 0.000000e+00 : f32
    %618 = vector.broadcast %cst_183 : f32 to vector<2x128xf32>
    %619 = vector.broadcast %cst_184 : f32 to vector<2x128xf32>
    %620 = arith.select %617, %618, %619 : vector<2x128xi1>, vector<2x128xf32>
    %621 = arith.addf %611, %620 : vector<2x128xf32>
    %622 = arith.mulf %528, %621 : vector<2x128xf32>
    %cst_185 = arith.constant dense<0.000000e+00> : vector<2xf32>
    %623 = vector.multi_reduction <add>, %622, %cst_185 [1] : vector<2x128xf32> to vector<2xf32>
    %624 = vector.shape_cast %623 : vector<2xf32> to vector<2x1xf32>
    %625 = arith.subf %598, %624 : vector<2x1xf32>
    %626 = vector.shape_cast %625 : vector<2x1xf32> to vector<1x2x1xf32>
    %cst_186 = arith.constant dense<0.000000e+00> : vector<1xf32>
    %627 = vector.multi_reduction <add>, %626, %cst_186 [1, 2] : vector<1x2x1xf32> to vector<1xf32>
    %628 = vector.shape_cast %627 : vector<1xf32> to vector<1x1x1xf32>
    %629 = vector.extract %628[0, 0, 0] : f32 from vector<1x1x1xf32>
    %cst_187 = arith.constant dense<0xFF800000> : vector<3xf32>
    %630 = vector.multi_reduction <maximumf>, %575, %cst_187 [1] : vector<3x128xf32> to vector<3xf32>
    %631 = vector.shape_cast %630 : vector<3xf32> to vector<3x1xf32>
    %632 = vector.broadcast %631 : vector<3x1xf32> to vector<3x128xf32>
    %633 = arith.subf %575, %632 : vector<3x128xf32>
    %634 = math.exp %633 : vector<3x128xf32>
    %cst_188 = arith.constant dense<0.000000e+00> : vector<3xf32>
    %635 = vector.multi_reduction <add>, %634, %cst_188 [1] : vector<3x128xf32> to vector<3xf32>
    %636 = vector.shape_cast %635 : vector<3xf32> to vector<3x1xf32>
    %637 = math.log %636 : vector<3x1xf32>
    %638 = arith.addf %637, %631 : vector<3x1xf32>
    %639 = tpu.iota {dimensions = array<i32: 1>} : vector<3x128xi32>
    %640 = tpu.iota {dimensions = array<i32: 0>} : vector<3x128xi32>
    %cst_189 = arith.constant 0.000000e+00 : f32
    %641 = vector.broadcast %cst_189 : f32 to vector<3x128xf32>
    %c2_190 = arith.constant 2 : index
    %c2_191 = arith.constant 2 : index
    %642 = memref.load %arg1[%c2_190, %c2_191] : memref<8x4xi32, #tpu.memory_space<smem>>
    %c0_i32_192 = arith.constant 0 : i32
    %643 = vector.broadcast %c0_i32_192 : i32 to vector<3x128xi32>
    %644 = arith.cmpi eq, %640, %643 : vector<3x128xi32>
    %645 = vector.broadcast %642 : i32 to vector<3x128xi32>
    %646 = arith.cmpi eq, %639, %645 : vector<3x128xi32>
    %647 = arith.andi %644, %646 : vector<3x128xi1>
    %cst_193 = arith.constant 1.000000e+00 : f32
    %cst_194 = arith.constant 0.000000e+00 : f32
    %648 = vector.broadcast %cst_193 : f32 to vector<3x128xf32>
    %649 = vector.broadcast %cst_194 : f32 to vector<3x128xf32>
    %650 = arith.select %647, %648, %649 : vector<3x128xi1>, vector<3x128xf32>
    %651 = arith.addf %641, %650 : vector<3x128xf32>
    %c3_195 = arith.constant 3 : index
    %c2_196 = arith.constant 2 : index
    %652 = memref.load %arg1[%c3_195, %c2_196] : memref<8x4xi32, #tpu.memory_space<smem>>
    %c1_i32_197 = arith.constant 1 : i32
    %653 = vector.broadcast %c1_i32_197 : i32 to vector<3x128xi32>
    %654 = arith.cmpi eq, %640, %653 : vector<3x128xi32>
    %655 = vector.broadcast %652 : i32 to vector<3x128xi32>
    %656 = arith.cmpi eq, %639, %655 : vector<3x128xi32>
    %657 = arith.andi %654, %656 : vector<3x128xi1>
    %cst_198 = arith.constant 1.000000e+00 : f32
    %cst_199 = arith.constant 0.000000e+00 : f32
    %658 = vector.broadcast %cst_198 : f32 to vector<3x128xf32>
    %659 = vector.broadcast %cst_199 : f32 to vector<3x128xf32>
    %660 = arith.select %657, %658, %659 : vector<3x128xi1>, vector<3x128xf32>
    %661 = arith.addf %651, %660 : vector<3x128xf32>
    %c4_200 = arith.constant 4 : index
    %c2_201 = arith.constant 2 : index
    %662 = memref.load %arg1[%c4_200, %c2_201] : memref<8x4xi32, #tpu.memory_space<smem>>
    %c2_i32_202 = arith.constant 2 : i32
    %663 = vector.broadcast %c2_i32_202 : i32 to vector<3x128xi32>
    %664 = arith.cmpi eq, %640, %663 : vector<3x128xi32>
    %665 = vector.broadcast %662 : i32 to vector<3x128xi32>
    %666 = arith.cmpi eq, %639, %665 : vector<3x128xi32>
    %667 = arith.andi %664, %666 : vector<3x128xi1>
    %cst_203 = arith.constant 1.000000e+00 : f32
    %cst_204 = arith.constant 0.000000e+00 : f32
    %668 = vector.broadcast %cst_203 : f32 to vector<3x128xf32>
    %669 = vector.broadcast %cst_204 : f32 to vector<3x128xf32>
    %670 = arith.select %667, %668, %669 : vector<3x128xi1>, vector<3x128xf32>
    %671 = arith.addf %661, %670 : vector<3x128xf32>
    %672 = arith.mulf %575, %671 : vector<3x128xf32>
    %cst_205 = arith.constant dense<0.000000e+00> : vector<3xf32>
    %673 = vector.multi_reduction <add>, %672, %cst_205 [1] : vector<3x128xf32> to vector<3xf32>
    %674 = vector.shape_cast %673 : vector<3xf32> to vector<3x1xf32>
    %675 = arith.subf %638, %674 : vector<3x1xf32>
    %676 = vector.shape_cast %675 : vector<3x1xf32> to vector<1x3x1xf32>
    %cst_206 = arith.constant dense<0.000000e+00> : vector<1xf32>
    %677 = vector.multi_reduction <add>, %676, %cst_206 [1, 2] : vector<1x3x1xf32> to vector<1xf32>
    %678 = vector.shape_cast %677 : vector<1xf32> to vector<1x1x1xf32>
    %679 = vector.extract %678[0, 0, 0] : f32 from vector<1x1x1xf32>
    %680 = arith.addf %629, %679 : f32
    %cst_207 = arith.constant dense<0xFF800000> : vector<2xf32>
    %681 = vector.multi_reduction <maximumf>, %589, %cst_207 [1] : vector<2x128xf32> to vector<2xf32>
    %682 = vector.shape_cast %681 : vector<2xf32> to vector<2x1xf32>
    %683 = vector.broadcast %682 : vector<2x1xf32> to vector<2x128xf32>
    %684 = arith.subf %589, %683 : vector<2x128xf32>
    %685 = math.exp %684 : vector<2x128xf32>
    %cst_208 = arith.constant dense<0.000000e+00> : vector<2xf32>
    %686 = vector.multi_reduction <add>, %685, %cst_208 [1] : vector<2x128xf32> to vector<2xf32>
    %687 = vector.shape_cast %686 : vector<2xf32> to vector<2x1xf32>
    %688 = math.log %687 : vector<2x1xf32>
    %689 = arith.addf %688, %682 : vector<2x1xf32>
    %690 = tpu.iota {dimensions = array<i32: 1>} : vector<2x128xi32>
    %691 = tpu.iota {dimensions = array<i32: 0>} : vector<2x128xi32>
    %cst_209 = arith.constant 0.000000e+00 : f32
    %692 = vector.broadcast %cst_209 : f32 to vector<2x128xf32>
    %c5_210 = arith.constant 5 : index
    %c2_211 = arith.constant 2 : index
    %693 = memref.load %arg1[%c5_210, %c2_211] : memref<8x4xi32, #tpu.memory_space<smem>>
    %c0_i32_212 = arith.constant 0 : i32
    %694 = vector.broadcast %c0_i32_212 : i32 to vector<2x128xi32>
    %695 = arith.cmpi eq, %691, %694 : vector<2x128xi32>
    %696 = vector.broadcast %693 : i32 to vector<2x128xi32>
    %697 = arith.cmpi eq, %690, %696 : vector<2x128xi32>
    %698 = arith.andi %695, %697 : vector<2x128xi1>
    %cst_213 = arith.constant 1.000000e+00 : f32
    %cst_214 = arith.constant 0.000000e+00 : f32
    %699 = vector.broadcast %cst_213 : f32 to vector<2x128xf32>
    %700 = vector.broadcast %cst_214 : f32 to vector<2x128xf32>
    %701 = arith.select %698, %699, %700 : vector<2x128xi1>, vector<2x128xf32>
    %702 = arith.addf %692, %701 : vector<2x128xf32>
    %c6_215 = arith.constant 6 : index
    %c2_216 = arith.constant 2 : index
    %703 = memref.load %arg1[%c6_215, %c2_216] : memref<8x4xi32, #tpu.memory_space<smem>>
    %c1_i32_217 = arith.constant 1 : i32
    %704 = vector.broadcast %c1_i32_217 : i32 to vector<2x128xi32>
    %705 = arith.cmpi eq, %691, %704 : vector<2x128xi32>
    %706 = vector.broadcast %703 : i32 to vector<2x128xi32>
    %707 = arith.cmpi eq, %690, %706 : vector<2x128xi32>
    %708 = arith.andi %705, %707 : vector<2x128xi1>
    %cst_218 = arith.constant 1.000000e+00 : f32
    %cst_219 = arith.constant 0.000000e+00 : f32
    %709 = vector.broadcast %cst_218 : f32 to vector<2x128xf32>
    %710 = vector.broadcast %cst_219 : f32 to vector<2x128xf32>
    %711 = arith.select %708, %709, %710 : vector<2x128xi1>, vector<2x128xf32>
    %712 = arith.addf %702, %711 : vector<2x128xf32>
    %713 = arith.mulf %589, %712 : vector<2x128xf32>
    %cst_220 = arith.constant dense<0.000000e+00> : vector<2xf32>
    %714 = vector.multi_reduction <add>, %713, %cst_220 [1] : vector<2x128xf32> to vector<2xf32>
    %715 = vector.shape_cast %714 : vector<2xf32> to vector<2x1xf32>
    %716 = arith.subf %689, %715 : vector<2x1xf32>
    %717 = vector.shape_cast %716 : vector<2x1xf32> to vector<1x2x1xf32>
    %cst_221 = arith.constant dense<0.000000e+00> : vector<1xf32>
    %718 = vector.multi_reduction <add>, %717, %cst_221 [1, 2] : vector<1x2x1xf32> to vector<1xf32>
    %719 = vector.shape_cast %718 : vector<1xf32> to vector<1x1x1xf32>
    %720 = vector.extract %719[0, 0, 0] : f32 from vector<1x1x1xf32>
    %721 = arith.addf %680, %720 : f32
    %c0_222 = arith.constant 0 : index
    %c0_223 = arith.constant 0 : index
    %722 = vector.load %arg5[%c0_222, %c0_223] : memref<8x128xf32, #tpu.memory_space<vmem>>, vector<2x128xf32>
    tpu.vector_store %arg5[%c0_222, %c0_223], %528 {strides = array<i32>} : memref<8x128xf32, #tpu.memory_space<vmem>>, vector<2x128xf32>,
    %c2_224 = arith.constant 2 : index
    %c0_225 = arith.constant 0 : index
    %723 = vector.load %arg5[%c2_224, %c0_225] : memref<8x128xf32, #tpu.memory_space<vmem>>, vector<3x128xf32>
    tpu.vector_store %arg5[%c2_224, %c0_225], %575 {strides = array<i32>} : memref<8x128xf32, #tpu.memory_space<vmem>>, vector<3x128xf32>,
    %c5_226 = arith.constant 5 : index
    %c0_227 = arith.constant 0 : index
    %724 = vector.load %arg5[%c5_226, %c0_227] : memref<8x128xf32, #tpu.memory_space<vmem>>, vector<2x128xf32>
    tpu.vector_store %arg5[%c5_226, %c0_227], %589 {strides = array<i32>} : memref<8x128xf32, #tpu.memory_space<vmem>>, vector<2x128xf32>,
    %cst_228 = arith.constant 1.000000e+00 : f32
    %725 = vector.broadcast %cst_228 : f32 to vector<1x128xf32>
    %726 = vector.broadcast %721 : f32 to vector<1x128xf32>
    %727 = arith.mulf %726, %725 : vector<1x128xf32>
    %c7_229 = arith.constant 7 : index
    %c0_230 = arith.constant 0 : index
    %728 = vector.load %arg5[%c7_229, %c0_230] : memref<8x128xf32, #tpu.memory_space<vmem>>, vector<1x128xf32>
    tpu.vector_store %arg5[%c7_229, %c0_230], %727 {strides = array<i32>} : memref<8x128xf32, #tpu.memory_space<vmem>>, vector<1x128xf32>,
    return
  }
  func.func @transform_0(%arg0: i32, %arg1: memref<8x4xi32, #tpu.memory_space<smem>>) -> (i32, i32) {
    %c0_i32 = arith.constant 0 : i32
    %c0_i32_0 = arith.constant 0 : i32
    %c0_i32_1 = arith.constant 0 : i32
    return %c0_i32, %c0_i32_0 : i32, i32
  }
  func.func @transform_1(%arg0: i32, %arg1: memref<8x4xi32, #tpu.memory_space<smem>>) -> (i32, i32) {
    %c0_i32 = arith.constant 0 : i32
    %c0_i32_0 = arith.constant 0 : i32
    %c0_i32_1 = arith.constant 0 : i32
    return %c0_i32, %c0_i32_0 : i32, i32
  }
  func.func @transform_2(%arg0: i32, %arg1: memref<8x4xi32, #tpu.memory_space<smem>>) -> (i32, i32) {
    %c0_i32 = arith.constant 0 : i32
    %c0_i32_0 = arith.constant 0 : i32
    %c0_i32_1 = arith.constant 0 : i32
    return %c0_i32, %c0_i32_0 : i32, i32
  }
  func.func @transform_3(%arg0: i32, %arg1: memref<8x4xi32, #tpu.memory_space<smem>>) -> (i32, i32) {
    %c0_i32 = arith.constant 0 : i32
    %c0_i32_0 = arith.constant 0 : i32
    %c0_i32_1 = arith.constant 0 : i32
    return %c0_i32, %c0_i32_0 : i32, i32
  }
}

</mosaic_0001>

<llo_original>
// kernel: tpu_custom_call.1
$region0: #{tpu_custom_call.1}
  #allocation0 [shape = 'u32[]', space=smem, size = 0x4, offset = 0x4, fixed_abs, tag = 'smem constant byte address 0x4 - core index']
  #allocation1 [shape = 'u32[144,128]{1,0:T(1,128)}', space=vmem, size = 0x12000, scoped, tag = 'internal scratch']
  #allocation2 [shape = 's32[1]{0}', space=sflag, size = 0x4, scoped, tag = 'scoped memory for tpu_custom_call.1']
  #allocation3 [shape = 'u8[4096]{0}', space=smem, size = 0x1000, scoped, tag = 'prefetched SMEM operand 0']
  %s0 = inlined_call_operand.vmem [shape: s32[8,4], index: 0, kind: input, shape index: {}]
  %s1 = inlined_call_operand.hbm [shape: f32[96,128], index: 1, kind: input, shape index: {}]
  %s2 = inlined_call_operand.hbm [shape: f32[608,128], index: 2, kind: input, shape index: {}]
  %s3 = inlined_call_operand.hbm [shape: f32[32,128], index: 3, kind: input, shape index: {}]
  %s4 = inlined_call_operand.hbm [shape: f32[8,128], index: 4, kind: output, shape index: {}]
  %s5 = sld [smem:[#allocation0]]
  $region34: #{tpu_custom_call.1} parent=0
    _
  %s7 = ssub.s32 1, %s5
  %s8 = scalar_select 0, %s7, %s5
  %s9 = sshll.u32 %s0, 4
  %s10 = int_to_ptr.vmem [resolvable:$true] %s9
  %12 = dma.vmem_to_smem %s10, 128, [#allocation3], [#allocation2]
  %13 = dma.done [#allocation2], 128
  %14 = sfence
  $region1: #{tpu_custom_call.1} parent=0
    #allocation4 [shape = 'u8[49152]{0}', space=vmem, size = 0xc000, scoped, tag = 'input window, operand 1, single buffered']
    #allocation5 [shape = 's32[1]{0}', space=sflag, size = 0x4, scoped, tag = 'scoped memory for tpu_custom_call.1']
    #allocation6 [shape = 's32[1]{0}', space=sflag, size = 0x4, scoped, tag = 'scoped memory for tpu_custom_call.1']
    #allocation7 [shape = 'u8[311296]{0}', space=vmem, size = 0x4c000, scoped, tag = 'input window, operand 2, single buffered']
    #allocation8 [shape = 's32[1]{0}', space=sflag, size = 0x4, scoped, tag = 'scoped memory for tpu_custom_call.1']
    #allocation9 [shape = 'u8[16384]{0}', space=vmem, size = 0x4000, scoped, tag = 'input window, operand 3, single buffered']
    #allocation10 [shape = 'u8[4096]{0}', space=vmem, size = 0x1000, scoped, tag = 'output window, operand 0, single buffered']
    %15 = vsyncpa [#allocation5], 0
    %16 = vsyncpa [#allocation8], 0
    %17 = vsyncpa [#allocation6], 0
    // Predicated region
    $region2: #{tpu_custom_call.1} parent=1 // pred_check
      _
    $region3: #{tpu_custom_call.1} parent=1 // pred_check_branch
      %19 = sbr.rel (0) target = $region5
    $region4: #{tpu_custom_call.1} parent=1 // pred_region
      %s21 = ssub.s32 1536, 1536
      %22 = vsyncadd [#allocation5], %s21
      %s23 = sshll.u32 [#allocation4], 4
      %s24 = int_to_ptr.vmem [resolvable:$true] %s23
      %29 = dma.hbm_to_vmem [thread:$0]  %s1, 1536, %s24, [#allocation5], 128, 128, 8
    $region5: #{tpu_custom_call.1} parent=1 // pred_fallthru
      _
    // Predicated region
    $region6: #{tpu_custom_call.1} parent=1 // pred_check
      _
    $region7: #{tpu_custom_call.1} parent=1 // pred_check_branch
      %31 = sbr.rel (0) target = $region9
    $region8: #{tpu_custom_call.1} parent=1 // pred_region
      %s33 = ssub.s32 9728, 9728
      %34 = vsyncadd [#allocation8], %s33
      %s35 = sshll.u32 [#allocation7], 4
      %s36 = int_to_ptr.vmem [resolvable:$true] %s35
      %41 = dma.hbm_to_vmem [thread:$0]  %s2, 9728, %s36, [#allocation8], 128, 128, 8
    $region9: #{tpu_custom_call.1} parent=1 // pred_fallthru
      _
    // Predicated region
    $region10: #{tpu_custom_call.1} parent=1 // pred_check
      _
    $region11: #{tpu_custom_call.1} parent=1 // pred_check_branch
      %43 = sbr.rel (0) target = $region13
    $region12: #{tpu_custom_call.1} parent=1 // pred_region
      %s45 = ssub.s32 512, 512
      %46 = vsyncadd [#allocation8], %s45
      %s47 = sshll.u32 [#allocation9], 4
      %s48 = int_to_ptr.vmem [resolvable:$true] %s47
      %53 = dma.hbm_to_vmem [thread:$0]  %s3, 512, %s48, [#allocation8], 128, 128, 8
    $region13: #{tpu_custom_call.1} parent=1 // pred_fallthru
      _
    // Predicated region
    $region14: #{tpu_custom_call.1} parent=1 // pred_check
      _
    $region15: #{tpu_custom_call.1} parent=1 // pred_check_branch
      %55 = sbr.rel (0) target = $region17
    $region16: #{tpu_custom_call.1} parent=1 // pred_region
      %56 = dma.done [#allocation5], 1536
    $region17: #{tpu_custom_call.1} parent=1 // pred_fallthru
      _
    // Predicated region
    $region18: #{tpu_custom_call.1} parent=1 // pred_check
      _
    $region19: #{tpu_custom_call.1} parent=1 // pred_check_branch
      %58 = sbr.rel (0) target = $region21
    $region20: #{tpu_custom_call.1} parent=1 // pred_region
      %59 = dma.done [#allocation8], 9728
    $region21: #{tpu_custom_call.1} parent=1 // pred_fallthru
      _
    // Predicated region
    $region22: #{tpu_custom_call.1} parent=1 // pred_check
      _
    $region23: #{tpu_custom_call.1} parent=1 // pred_check_branch
      %61 = sbr.rel (0) target = $region25
    $region24: #{tpu_custom_call.1} parent=1 // pred_region
      %62 = dma.done [#allocation8], 512
    $region25: #{tpu_custom_call.1} parent=1 // pred_fallthru
      _
    %v64 = vld [vmem:[#allocation4] sm:$0xff]
    %v65 = vld [vmem:[#allocation4 + $0x8] sm:$0xff]
    %v66 = vld [vmem:[#allocation4 + $0x10] sm:$0xff]
    %v67 = vld [vmem:[#allocation4 + $0x18] sm:$0xff]
    %v68 = vld [vmem:[#allocation4 + $0x20] sm:$0xff]
    %v69 = vld [vmem:[#allocation4 + $0x28] sm:$0xff]
    %v70 = vld [vmem:[#allocation4 + $0x30] sm:$0xff]
    %v71 = vld [vmem:[#allocation4 + $0x38] sm:$0xff]
    %v72 = vld [vmem:[#allocation4 + $0x40] sm:$0xff]
    %v73 = vld [vmem:[#allocation4 + $0x48] sm:$0xff]
    %v74 = vld [vmem:[#allocation4 + $0x50] sm:$0xff]
    %v75 = vld [vmem:[#allocation4 + $0x58] sm:$0xff]
    %v76 = vld [vmem:[#allocation7] sm:$0xff]
    %v77 = vld [vmem:[#allocation7 + $0x8] sm:$0xff]
    %v78 = vld [vmem:[#allocation7 + $0x10] sm:$0xff]
    %v79 = vld [vmem:[#allocation7 + $0x18] sm:$0xff]
    %v80 = vld [vmem:[#allocation7 + $0x20] sm:$0xff]
    %v81 = vld [vmem:[#allocation7 + $0x28] sm:$0xff]
    %v82 = vpack.c.bf16 %v65, %v64
    %v83 = vpack.c.bf16 %v67, %v66
    %v84 = vpack.c.bf16 %v77, %v76
    %v85 = vpack.c.bf16 %v79, %v78
    %v86 = vpack.c.bf16 %v81, %v80
    %vm87 = vcmask 392192
    %v89 = vsel %vm87, %v82, 0
    %v92 = vsel %vm87, %v83, 0
    %94 = vmatprep.subr.bf16.mxu0 0
    %95 = vmatpush1.bf16.msra.mxu0 0
    %96 = vmatprep.subr.bf16.mxu0 0
    %97 = vmatpush1.bf16.msra.mxu0 0
    %98 = vmatprep.subr.bf16.mxu0 0
    %99 = vmatpush1.bf16.msra.mxu0 0
    %100 = vmatprep.subr.bf16.mxu0 0
    %101 = vmatpush1.bf16.msra.mxu0 0
    %102 = vmatprep.subr.bf16.mxu0 0
    %103 = vmatpush1.bf16.msra.mxu0 0
    %104 = vmatprep.subr.bf16.mxu0 0
    %105 = vmatpush1.bf16.msra.mxu0 %v86
    %106 = vmatprep.subr.bf16.mxu0 0
    %107 = vmatpush1.bf16.msra.mxu0 %v85
    %108 = vmatprep.subr.bf16.mxu0 0
    %109 = vmatpush1.bf16.msra.mxu0 %v84
    %110 = vmatprep.subr.bf16.mxu0 0
    %111 = vmatpush2.bf16.msra.mxu0 0
    %112 = vmatprep.subr.bf16.mxu0 0
    %113 = vmatpush2.bf16.msra.mxu0 0
    %114 = vmatprep.subr.bf16.mxu0 0
    %115 = vmatpush2.bf16.msra.mxu0 0
    %116 = vmatprep.subr.bf16.mxu0 0
    %117 = vmatpush2.bf16.msra.mxu0 0
    %118 = vmatprep.subr.bf16.mxu0 0
    %119 = vmatpush2.bf16.msra.mxu0 0
    %120 = vmatprep.subr.bf16.mxu0 0
    %121 = vmatpush2.bf16.msra.mxu0 0
    %122 = vmatprep.subr.bf16.mxu0 0
    %123 = vmatpush2.bf16.msra.mxu0 0
    %124 = vmatprep.subr.bf16.mxu0 0
    %125 = vmatpush2.bf16.msra.mxu0 0
    %126 = vmatprep.mubr.bf16.mxu0 0
    %127 = vmatmul.mubr.bf16.gmra.mxu0 %v89
    %v128 = vpop.f32.mrf.mxu0
    %v129 = vadd.f32 %v68, %v128
    %v130 = vpop.f32.mrf.mxu0
    %v131 = vpop.f32.mrf.mxu0
    %v132 = vadd.f32 %v69, %v131
    %v133 = vpop.f32.mrf.mxu0
    %134 = vmatprep.mubr.bf16.mxu0 0
    %135 = vmatmul.mubr.bf16.gmra.mxu0 %v92
    %v136 = vpop.f32.mrf.mxu0
    %v137 = vadd.f32 %v70, %v136
    %v138 = vpop.f32.mrf.mxu0
    %v139 = vpop.f32.mrf.mxu0
    %v140 = vadd.f32 %v71, %v139
    %v141 = vpop.f32.mrf.mxu0
    %142 = vdwg.mxu0
    %v143 = vld [vmem:[#allocation9] sm:$0x1]
    %v144 = vld [vmem:[#allocation9 + $0x1] sm:$0x1]
    %vm145 = vcmask 261120
    %v146 = vsel %vm145, %v129, 0.0
    %147 = vadd.xlane.f32.xlu0 %v146
    %v148 = vpop.xlane.xlu0 %147
    %v149 = vsel %vm145, %v132, 0.0
    %150 = vadd.xlane.f32.xlu0 %v149
    %v151 = vpop.xlane.xlu0 %150
    %v152 = vsel %vm145, %v137, 0.0
    %153 = vadd.xlane.f32.xlu0 %v152
    %v154 = vpop.xlane.xlu0 %153
    %v155 = vsel %vm145, %v140, 0.0
    %156 = vadd.xlane.f32.xlu0 %v155
    %v157 = vpop.xlane.xlu0 %156
    %v158 = vrcp.pop 32.0
    %v159 = vmul.f32 %v148, %v158
    %v160 = vmul.f32 %v151, %v158
    %v161 = vmul.f32 %v154, %v158
    %v162 = vmul.f32 %v157, %v158
    %v163 = vsub.f32 %v129, %v159
    %v164 = vsub.f32 %v132, %v160
    %v165 = vsub.f32 %v137, %v161
    %v166 = vsub.f32 %v140, %v162
    %v167 = vmul.f32 %v163, %v163
    %v168 = vmul.f32 %v164, %v164
    %v169 = vmul.f32 %v165, %v165
    %v170 = vmul.f32 %v166, %v166
    %v171 = vsel %vm145, %v167, 0.0
    %172 = vadd.xlane.f32.xlu0 %v171
    %v173 = vpop.xlane.xlu0 %172
    %v174 = vsel %vm145, %v168, 0.0
    %175 = vadd.xlane.f32.xlu0 %v174
    %v176 = vpop.xlane.xlu0 %175
    %v177 = vsel %vm145, %v169, 0.0
    %178 = vadd.xlane.f32.xlu0 %v177
    %v179 = vpop.xlane.xlu0 %178
    %v180 = vsel %vm145, %v170, 0.0
    %181 = vadd.xlane.f32.xlu0 %v180
    %v182 = vpop.xlane.xlu0 %181
    %v183 = vmul.f32 %v173, %v158
    %v184 = vmul.f32 %v176, %v158
    %v185 = vmul.f32 %v179, %v158
    %v186 = vmul.f32 %v182, %v158
    %v187 = vadd.f32 %v183, 1e-05
    %v188 = vadd.f32 %v184, 1e-05
    %v189 = vadd.f32 %v185, 1e-05
    %v190 = vadd.f32 %v186, 1e-05
    %v191 = vrsqrt.pop %v187
    %v192 = vrsqrt.pop %v188
    %v193 = vrsqrt.pop %v189
    %v194 = vrsqrt.pop %v190
    %v195 = vmul.f32 %v163, %v191
    %v196 = vmul.f32 %v164, %v192
    %v197 = vmul.f32 %v165, %v193
    %v198 = vmul.f32 %v166, %v194
    %v199 = vlaneseq
    %v200 = vshrl.u32 %v199, 7
    %v201 = vsub.s32 0, %v200
    %v202 = vrot.slane %v143, %v201
    %v203 = vmul.f32 %v195, %v202
    %v204 = vmul.f32 %v196, %v202
    %v205 = vmul.f32 %v197, %v202
    %v206 = vmul.f32 %v198, %v202
    %v207 = vlaneseq
    %v208 = vshrl.u32 %v207, 7
    %v209 = vsub.s32 0, %v208
    %v210 = vrot.slane %v144, %v209
    %v211 = vadd.f32 %v203, %v210
    %v212 = vadd.f32 %v204, %v210
    %v213 = vadd.f32 %v205, %v210
    %v214 = vadd.f32 %v206, %v210
    %v215 = vld [vmem:[#allocation7 + $0x30] sm:$0xff]
    %v216 = vld [vmem:[#allocation7 + $0x38] sm:$0xff]
    %v217 = vld [vmem:[#allocation7 + $0x40] sm:$0xff]
    %v218 = vld [vmem:[#allocation7 + $0x48] sm:$0xff]
    %v219 = vpack.c.bf16 %v212, %v211
    %v220 = vpack.c.bf16 %v214, %v213
    %v221 = vpack.c.bf16 %v216, %v215
    %v222 = vpack.c.bf16 %v218, %v217
    %v223 = vld [vmem:[#allocation9 + $0x2] sm:$0x1]
    %v224 = vlaneseq
    %v225 = vshrl.u32 %v224, 7
    %v226 = vsub.s32 0, %v225
    %v227 = vrot.slane %v223, %v226
    %v229 = vsel %vm145, %v219, 0
    %v232 = vsel %vm145, %v220, 0
    %234 = vmatprep.subr.bf16.mxu0 0
    %235 = vmatpush1.bf16.msra.mxu0 0
    %236 = vmatprep.subr.bf16.mxu0 0
    %237 = vmatpush1.bf16.msra.mxu0 0
    %238 = vmatprep.subr.bf16.mxu0 0
    %239 = vmatpush1.bf16.msra.mxu0 0
    %240 = vmatprep.subr.bf16.mxu0 0
    %241 = vmatpush1.bf16.msra.mxu0 0
    %242 = vmatprep.subr.bf16.mxu0 0
    %243 = vmatpush1.bf16.msra.mxu0 0
    %244 = vmatprep.subr.bf16.mxu0 0
    %245 = vmatpush1.bf16.msra.mxu0 0
    %246 = vmatprep.subr.bf16.mxu0 0
    %247 = vmatpush1.bf16.msra.mxu0 %v222
    %248 = vmatprep.subr.bf16.mxu0 0
    %249 = vmatpush1.bf16.msra.mxu0 %v221
    %250 = vmatprep.subr.bf16.mxu0 0
    %251 = vmatpush2.bf16.msra.mxu0 0
    %252 = vmatprep.subr.bf16.mxu0 0
    %253 = vmatpush2.bf16.msra.mxu0 0
    %254 = vmatprep.subr.bf16.mxu0 0
    %255 = vmatpush2.bf16.msra.mxu0 0
    %256 = vmatprep.subr.bf16.mxu0 0
    %257 = vmatpush2.bf16.msra.mxu0 0
    %258 = vmatprep.subr.bf16.mxu0 0
    %259 = vmatpush2.bf16.msra.mxu0 0
    %260 = vmatprep.subr.bf16.mxu0 0
    %261 = vmatpush2.bf16.msra.mxu0 0
    %262 = vmatprep.subr.bf16.mxu0 0
    %263 = vmatpush2.bf16.msra.mxu0 0
    %264 = vmatprep.subr.bf16.mxu0 0
    %265 = vmatpush2.bf16.msra.mxu0 0
    %266 = vmatprep.mubr.bf16.mxu0 0
    %267 = vmatmul.mubr.bf16.gmra.mxu0 %v229
    %v268 = vpop.f32.mrf.mxu0
    %v269 = vadd.f32 %v227, %v268
    %v270 = vpop.f32.mrf.mxu0
    %v271 = vpop.f32.mrf.mxu0
    %v272 = vadd.f32 %v227, %v271
    %v273 = vpop.f32.mrf.mxu0
    %274 = vmatprep.mubr.bf16.mxu0 0
    %275 = vmatmul.mubr.bf16.gmra.mxu0 %v232
    %v276 = vpop.f32.mrf.mxu0
    %v277 = vadd.f32 %v227, %v276
    %v278 = vpop.f32.mrf.mxu0
    %v279 = vpop.f32.mrf.mxu0
    %v280 = vadd.f32 %v227, %v279
    %v281 = vpop.f32.mrf.mxu0
    %282 = vdwg.mxu0
    %v283 = vpack.c.bf16 %v272, %v269
    %v284 = vpack.c.bf16 %v280, %v277
    %287 = vrot.lane.b32.xlu0 %v283, 96
    %v288 = vpop.permute.xlu0 %287
    %289 = vrot.lane.b32.xlu0 %v284, 96
    %v290 = vpop.permute.xlu0 %289
    %vm291 = vcmask 130048
    %v293 = vsel %vm291, %v283, 0
    %v296 = vsel %vm291, %v284, 0
    %v299 = vsel %vm291, %v288, 0
    %v302 = vsel %vm291, %v290, 0
    %304 = vmatprep.subr.bf16.mxu0 0
    %305 = vmatpush1.bf16.xpose.msra.mxu0 0
    %306 = vmatprep.subr.bf16.mxu0 0
    %307 = vmatpush1.bf16.xpose.msra.mxu0 0
    %308 = vmatprep.subr.bf16.mxu0 0
    %309 = vmatpush1.bf16.xpose.msra.mxu0 0
    %310 = vmatprep.subr.bf16.mxu0 0
    %311 = vmatpush1.bf16.xpose.msra.mxu0 0
    %312 = vmatprep.subr.bf16.mxu0 0
    %313 = vmatpush1.bf16.xpose.msra.mxu0 0
    %314 = vmatprep.subr.bf16.mxu0 0
    %315 = vmatpush1.bf16.xpose.msra.mxu0 0
    %316 = vmatprep.subr.bf16.mxu0 0
    %317 = vmatpush1.bf16.xpose.msra.mxu0 %v302
    %318 = vmatprep.subr.bf16.mxu0 0
    %319 = vmatpush1.bf16.xpose.msra.mxu0 %v299
    %320 = vmatprep.subr.bf16.mxu0 0
    %321 = vmatpush2.bf16.xpose.msra.mxu0 0
    %322 = vmatprep.subr.bf16.mxu0 0
    %323 = vmatpush2.bf16.xpose.msra.mxu0 0
    %324 = vmatprep.subr.bf16.mxu0 0
    %325 = vmatpush2.bf16.xpose.msra.mxu0 0
    %326 = vmatprep.subr.bf16.mxu0 0
    %327 = vmatpush2.bf16.xpose.msra.mxu0 0
    %328 = vmatprep.subr.bf16.mxu0 0
    %329 = vmatpush2.bf16.xpose.msra.mxu0 0
    %330 = vmatprep.subr.bf16.mxu0 0
    %331 = vmatpush2.bf16.xpose.msra.mxu0 0
    %332 = vmatprep.subr.bf16.mxu0 0
    %333 = vmatpush2.bf16.xpose.msra.mxu0 0
    %334 = vmatprep.subr.bf16.mxu0 0
    %335 = vmatpush2.bf16.xpose.msra.mxu0 0
    %336 = vmatprep.mubr.bf16.mxu0 0
    %337 = vmatmul.mubr.bf16.gmra.mxu0 %v293
    %v338 = vpop.f32.mrf.mxu0
    %v339 = vadd.f32 0.0, %v338
    %v340 = vpop.f32.mrf.mxu0
    %v341 = vpop.f32.mrf.mxu0
    %v342 = vadd.f32 0.0, %v341
    %v343 = vpop.f32.mrf.mxu0
    %344 = vmatprep.mubr.bf16.mxu0 0
    %345 = vmatmul.mubr.bf16.gmra.mxu0 %v296
    %v346 = vpop.f32.mrf.mxu0
    %v347 = vadd.f32 0.0, %v346
    %v348 = vpop.f32.mrf.mxu0
    %v349 = vpop.f32.mrf.mxu0
    %v350 = vadd.f32 0.0, %v349
    %v351 = vpop.f32.mrf.mxu0
    %352 = vdwg.mxu0
    %v353 = vmul.f32 %v339, 0.25
    %v354 = vmul.f32 %v342, 0.25
    %v355 = vmul.f32 %v347, 0.25
    %v356 = vmul.f32 %v350, 0.25
    %v357 = vadd.f32 %v353, %v72
    %v358 = vadd.f32 %v354, %v73
    %v359 = vadd.f32 %v355, %v74
    %v360 = vadd.f32 %v356, %v75
    %v361 = vsel %vm145, %v357, -inf
    %362 = vmax.xlane.f32.xlu0 %v361
    %v363 = vpop.xlane.xlu0 %362
    %v364 = vsel %vm145, %v358, -inf
    %365 = vmax.xlane.f32.xlu0 %v364
    %v366 = vpop.xlane.xlu0 %365
    %v367 = vsel %vm145, %v359, -inf
    %368 = vmax.xlane.f32.xlu0 %v367
    %v369 = vpop.xlane.xlu0 %368
    %v370 = vsel %vm145, %v360, -inf
    %371 = vmax.xlane.f32.xlu0 %v370
    %v372 = vpop.xlane.xlu0 %371
    %v373 = vsub.f32 %v357, %v363
    %v374 = vsub.f32 %v358, %v366
    %v375 = vsub.f32 %v359, %v369
    %v376 = vsub.f32 %v360, %v372
    %v377 = vmul.f32 %v373, 1.442695
    %v378 = vpow.pop %v377
    %v379 = vmul.f32 %v374, 1.442695
    %v380 = vpow.pop %v379
    %v381 = vmul.f32 %v375, 1.442695
    %v382 = vpow.pop %v381
    %v383 = vmul.f32 %v376, 1.442695
    %v384 = vpow.pop %v383
    %v385 = vsel %vm145, %v378, 0.0
    %386 = vadd.xlane.f32.xlu0 %v385
    %v387 = vpop.xlane.xlu0 %386
    %v388 = vsel %vm145, %v380, 0.0
    %389 = vadd.xlane.f32.xlu0 %v388
    %v390 = vpop.xlane.xlu0 %389
    %v391 = vsel %vm145, %v382, 0.0
    %392 = vadd.xlane.f32.xlu0 %v391
    %v393 = vpop.xlane.xlu0 %392
    %v394 = vsel %vm145, %v384, 0.0
    %395 = vadd.xlane.f32.xlu0 %v394
    %v396 = vpop.xlane.xlu0 %395
    %v397 = vrcp.pop %v387
    %v398 = vrcp.pop %v390
    %v399 = vrcp.pop %v393
    %v400 = vrcp.pop %v396
    %v401 = vmul.f32 %v378, %v397
    %v402 = vmul.f32 %v380, %v398
    %v403 = vmul.f32 %v382, %v399
    %v404 = vmul.f32 %v384, %v400
    %v405 = vpack.c.bf16 %v402, %v401
    %v406 = vpack.c.bf16 %v404, %v403
    %407 = vrot.lane.b32.xlu0 %v283, 64
    %v408 = vpop.permute.xlu0 %407
    %409 = vrot.lane.b32.xlu0 %v284, 64
    %v410 = vpop.permute.xlu0 %409
    %v414 = vsel %vm145, %v405, 0
    %v417 = vsel %vm145, %v406, 0
    %419 = vmatprep.subr.bf16.mxu0 0
    %420 = vmatpush1.bf16.msra.mxu0 0
    %421 = vmatprep.subr.bf16.mxu0 0
    %422 = vmatpush1.bf16.msra.mxu0 0
    %423 = vmatprep.subr.bf16.mxu0 0
    %424 = vmatpush1.bf16.msra.mxu0 0
    %425 = vmatprep.subr.bf16.mxu0 0
    %426 = vmatpush1.bf16.msra.mxu0 0
    %427 = vmatprep.subr.bf16.mxu0 0
    %428 = vmatpush1.bf16.msra.mxu0 0
    %429 = vmatprep.subr.bf16.mxu0 0
    %430 = vmatpush1.bf16.msra.mxu0 0
    %431 = vmatprep.subr.bf16.mxu0 0
    %432 = vmatpush1.bf16.msra.mxu0 %v410
    %433 = vmatprep.subr.bf16.mxu0 0
    %434 = vmatpush1.bf16.msra.mxu0 %v408
    %435 = vmatprep.subr.bf16.mxu0 0
    %436 = vmatpush2.bf16.msra.mxu0 0
    %437 = vmatprep.subr.bf16.mxu0 0
    %438 = vmatpush2.bf16.msra.mxu0 0
    %439 = vmatprep.subr.bf16.mxu0 0
    %440 = vmatpush2.bf16.msra.mxu0 0
    %441 = vmatprep.subr.bf16.mxu0 0
    %442 = vmatpush2.bf16.msra.mxu0 0
    %443 = vmatprep.subr.bf16.mxu0 0
    %444 = vmatpush2.bf16.msra.mxu0 0
    %445 = vmatprep.subr.bf16.mxu0 0
    %446 = vmatpush2.bf16.msra.mxu0 0
    %447 = vmatprep.subr.bf16.mxu0 0
    %448 = vmatpush2.bf16.msra.mxu0 0
    %449 = vmatprep.subr.bf16.mxu0 0
    %450 = vmatpush2.bf16.msra.mxu0 0
    %451 = vmatprep.mubr.bf16.mxu0 0
    %452 = vmatmul.mubr.bf16.gmra.mxu0 %v414
    %v453 = vpop.f32.mrf.mxu0
    %v454 = vadd.f32 0.0, %v453
    %v455 = vpop.f32.mrf.mxu0
    %v456 = vpop.f32.mrf.mxu0
    %v457 = vadd.f32 0.0, %v456
    %v458 = vpop.f32.mrf.mxu0
    %459 = vmatprep.mubr.bf16.mxu0 0
    %460 = vmatmul.mubr.bf16.gmra.mxu0 %v417
    %v461 = vpop.f32.mrf.mxu0
    %v462 = vadd.f32 0.0, %v461
    %v463 = vpop.f32.mrf.mxu0
    %v464 = vpop.f32.mrf.mxu0
    %v465 = vadd.f32 0.0, %v464
    %v466 = vpop.f32.mrf.mxu0
    %467 = vdwg.mxu0
    %468 = vrot.lane.b32.xlu0 %v283, 112
    %v469 = vpop.permute.xlu0 %468
    %470 = vrot.lane.b32.xlu0 %v284, 112
    %v471 = vpop.permute.xlu0 %470
    %472 = vrot.lane.b32.xlu0 %v283, 80
    %v473 = vpop.permute.xlu0 %472
    %474 = vrot.lane.b32.xlu0 %v284, 80
    %v475 = vpop.permute.xlu0 %474
    %v477 = vsel %vm291, %v469, 0
    %v480 = vsel %vm291, %v471, 0
    %v483 = vsel %vm291, %v473, 0
    %v486 = vsel %vm291, %v475, 0
    %488 = vmatprep.subr.bf16.mxu0 0
    %489 = vmatpush1.bf16.xpose.msra.mxu0 0
    %490 = vmatprep.subr.bf16.mxu0 0
    %491 = vmatpush1.bf16.xpose.msra.mxu0 0
    %492 = vmatprep.subr.bf16.mxu0 0
    %493 = vmatpush1.bf16.xpose.msra.mxu0 0
    %494 = vmatprep.subr.bf16.mxu0 0
    %495 = vmatpush1.bf16.xpose.msra.mxu0 0
    %496 = vmatprep.subr.bf16.mxu0 0
    %497 = vmatpush1.bf16.xpose.msra.mxu0 0
    %498 = vmatprep.subr.bf16.mxu0 0
    %499 = vmatpush1.bf16.xpose.msra.mxu0 0
    %500 = vmatprep.subr.bf16.mxu0 0
    %501 = vmatpush1.bf16.xpose.msra.mxu0 %v486
    %502 = vmatprep.subr.bf16.mxu0 0
    %503 = vmatpush1.bf16.xpose.msra.mxu0 %v483
    %504 = vmatprep.subr.bf16.mxu0 0
    %505 = vmatpush2.bf16.xpose.msra.mxu0 0
    %506 = vmatprep.subr.bf16.mxu0 0
    %507 = vmatpush2.bf16.xpose.msra.mxu0 0
    %508 = vmatprep.subr.bf16.mxu0 0
    %509 = vmatpush2.bf16.xpose.msra.mxu0 0
    %510 = vmatprep.subr.bf16.mxu0 0
    %511 = vmatpush2.bf16.xpose.msra.mxu0 0
    %512 = vmatprep.subr.bf16.mxu0 0
    %513 = vmatpush2.bf16.xpose.msra.mxu0 0
    %514 = vmatprep.subr.bf16.mxu0 0
    %515 = vmatpush2.bf16.xpose.msra.mxu0 0
    %516 = vmatprep.subr.bf16.mxu0 0
    %517 = vmatpush2.bf16.xpose.msra.mxu0 0
    %518 = vmatprep.subr.bf16.mxu0 0
    %519 = vmatpush2.bf16.xpose.msra.mxu0 0
    %520 = vmatprep.mubr.bf16.mxu0 0
    %521 = vmatmul.mubr.bf16.gmra.mxu0 %v477
    %v522 = vpop.f32.mrf.mxu0
    %v523 = vadd.f32 0.0, %v522
    %v524 = vpop.f32.mrf.mxu0
    %v525 = vpop.f32.mrf.mxu0
    %v526 = vadd.f32 0.0, %v525
    %v527 = vpop.f32.mrf.mxu0
    %528 = vmatprep.mubr.bf16.mxu0 0
    %529 = vmatmul.mubr.bf16.gmra.mxu0 %v480
    %v530 = vpop.f32.mrf.mxu0
    %v531 = vadd.f32 0.0, %v530
    %v532 = vpop.f32.mrf.mxu0
    %v533 = vpop.f32.mrf.mxu0
    %v534 = vadd.f32 0.0, %v533
    %v535 = vpop.f32.mrf.mxu0
    %536 = vdwg.mxu0
    %v537 = vmul.f32 %v523, 0.25
    %v538 = vmul.f32 %v526, 0.25
    %v539 = vmul.f32 %v531, 0.25
    %v540 = vmul.f32 %v534, 0.25
    %v541 = vadd.f32 %v537, %v72
    %v542 = vadd.f32 %v538, %v73
    %v543 = vadd.f32 %v539, %v74
    %v544 = vadd.f32 %v540, %v75
    %v545 = vsel %vm145, %v541, -inf
    %546 = vmax.xlane.f32.xlu0 %v545
    %v547 = vpop.xlane.xlu0 %546
    %v548 = vsel %vm145, %v542, -inf
    %549 = vmax.xlane.f32.xlu0 %v548
    %v550 = vpop.xlane.xlu0 %549
    %v551 = vsel %vm145, %v543, -inf
    %552 = vmax.xlane.f32.xlu0 %v551
    %v553 = vpop.xlane.xlu0 %552
    %v554 = vsel %vm145, %v544, -inf
    %555 = vmax.xlane.f32.xlu0 %v554
    %v556 = vpop.xlane.xlu0 %555
    %v557 = vsub.f32 %v541, %v547
    %v558 = vsub.f32 %v542, %v550
    %v559 = vsub.f32 %v543, %v553
    %v560 = vsub.f32 %v544, %v556
    %v561 = vmul.f32 %v557, 1.442695
    %v562 = vpow.pop %v561
    %v563 = vmul.f32 %v558, 1.442695
    %v564 = vpow.pop %v563
    %v565 = vmul.f32 %v559, 1.442695
    %v566 = vpow.pop %v565
    %v567 = vmul.f32 %v560, 1.442695
    %v568 = vpow.pop %v567
    %v569 = vsel %vm145, %v562, 0.0
    %570 = vadd.xlane.f32.xlu0 %v569
    %v571 = vpop.xlane.xlu0 %570
    %v572 = vsel %vm145, %v564, 0.0
    %573 = vadd.xlane.f32.xlu0 %v572
    %v574 = vpop.xlane.xlu0 %573
    %v575 = vsel %vm145, %v566, 0.0
    %576 = vadd.xlane.f32.xlu0 %v575
    %v577 = vpop.xlane.xlu0 %576
    %v578 = vsel %vm145, %v568, 0.0
    %579 = vadd.xlane.f32.xlu0 %v578
    %v580 = vpop.xlane.xlu0 %579
    %v581 = vrcp.pop %v571
    %v582 = vrcp.pop %v574
    %v583 = vrcp.pop %v577
    %v584 = vrcp.pop %v580
    %v585 = vmul.f32 %v562, %v581
    %v586 = vmul.f32 %v564, %v582
    %v587 = vmul.f32 %v566, %v583
    %v588 = vmul.f32 %v568, %v584
    %v589 = vpack.c.bf16 %v586, %v585
    %v590 = vpack.c.bf16 %v588, %v587
    %591 = vrot.lane.b32.xlu0 %v283, 48
    %v592 = vpop.permute.xlu0 %591
    %593 = vrot.lane.b32.xlu0 %v284, 48
    %v594 = vpop.permute.xlu0 %593
    %v598 = vsel %vm145, %v589, 0
    %v601 = vsel %vm145, %v590, 0
    %603 = vmatprep.subr.bf16.mxu0 0
    %604 = vmatpush1.bf16.msra.mxu0 0
    %605 = vmatprep.subr.bf16.mxu0 0
    %606 = vmatpush1.bf16.msra.mxu0 0
    %607 = vmatprep.subr.bf16.mxu0 0
    %608 = vmatpush1.bf16.msra.mxu0 0
    %609 = vmatprep.subr.bf16.mxu0 0
    %610 = vmatpush1.bf16.msra.mxu0 0
    %611 = vmatprep.subr.bf16.mxu0 0
    %612 = vmatpush1.bf16.msra.mxu0 0
    %613 = vmatprep.subr.bf16.mxu0 0
    %614 = vmatpush1.bf16.msra.mxu0 0
    %615 = vmatprep.subr.bf16.mxu0 0
    %616 = vmatpush1.bf16.msra.mxu0 %v594
    %617 = vmatprep.subr.bf16.mxu0 0
    %618 = vmatpush1.bf16.msra.mxu0 %v592
    %619 = vmatprep.subr.bf16.mxu0 0
    %620 = vmatpush2.bf16.msra.mxu0 0
    %621 = vmatprep.subr.bf16.mxu0 0
    %622 = vmatpush2.bf16.msra.mxu0 0
    %623 = vmatprep.subr.bf16.mxu0 0
    %624 = vmatpush2.bf16.msra.mxu0 0
    %625 = vmatprep.subr.bf16.mxu0 0
    %626 = vmatpush2.bf16.msra.mxu0 0
    %627 = vmatprep.subr.bf16.mxu0 0
    %628 = vmatpush2.bf16.msra.mxu0 0
    %629 = vmatprep.subr.bf16.mxu0 0
    %630 = vmatpush2.bf16.msra.mxu0 0
    %631 = vmatprep.subr.bf16.mxu0 0
    %632 = vmatpush2.bf16.msra.mxu0 0
    %633 = vmatprep.subr.bf16.mxu0 0
    %634 = vmatpush2.bf16.msra.mxu0 0
    %635 = vmatprep.mubr.bf16.mxu0 0
    %636 = vmatmul.mubr.bf16.gmra.mxu0 %v598
    %v637 = vpop.f32.mrf.mxu0
    %v638 = vadd.f32 0.0, %v637
    %v639 = vpop.f32.mrf.mxu0
    %v640 = vpop.f32.mrf.mxu0
    %v641 = vadd.f32 0.0, %v640
    %v642 = vpop.f32.mrf.mxu0
    %643 = vmatprep.mubr.bf16.mxu0 0
    %644 = vmatmul.mubr.bf16.gmra.mxu0 %v601
    %v645 = vpop.f32.mrf.mxu0
    %v646 = vadd.f32 0.0, %v645
    %v647 = vpop.f32.mrf.mxu0
    %v648 = vpop.f32.mrf.mxu0
    %v649 = vadd.f32 0.0, %v648
    %v650 = vpop.f32.mrf.mxu0
    %651 = vdwg.mxu0
    %656 = vrot.lane.b32.xlu0 %v638, 16
    %v657 = vpop.permute.xlu0 %656
    %658 = vrot.lane.b32.xlu0 %v641, 16
    %v659 = vpop.permute.xlu0 %658
    %660 = vrot.lane.b32.xlu0 %v646, 16
    %v661 = vpop.permute.xlu0 %660
    %662 = vrot.lane.b32.xlu0 %v649, 16
    %v663 = vpop.permute.xlu0 %662
    %v668 = vsel %vm291, %v454, %v657
    %v669 = vsel %vm291, %v457, %v659
    %v670 = vsel %vm291, %v462, %v661
    %v671 = vsel %vm291, %v465, %v663
    %v672 = vld [vmem:[#allocation7 + $0x50] sm:$0xff]
    %v673 = vld [vmem:[#allocation7 + $0x58] sm:$0xff]
    %v674 = vld [vmem:[#allocation7 + $0x60] sm:$0xff]
    %v675 = vld [vmem:[#allocation7 + $0x68] sm:$0xff]
    %v676 = vpack.c.bf16 %v669, %v668
    %v677 = vpack.c.bf16 %v671, %v670
    %v678 = vpack.c.bf16 %v673, %v672
    %v679 = vpack.c.bf16 %v675, %v674
    %v680 = vld [vmem:[#allocation9 + $0x3] sm:$0x1]
    %v681 = vlaneseq
    %v682 = vshrl.u32 %v681, 7
    %v683 = vsub.s32 0, %v682
    %v684 = vrot.slane %v680, %v683
    %v686 = vsel %vm145, %v676, 0
    %v689 = vsel %vm145, %v677, 0
    %691 = vmatprep.subr.bf16.mxu0 0
    %692 = vmatpush1.bf16.msra.mxu0 0
    %693 = vmatprep.subr.bf16.mxu0 0
    %694 = vmatpush1.bf16.msra.mxu0 0
    %695 = vmatprep.subr.bf16.mxu0 0
    %696 = vmatpush1.bf16.msra.mxu0 0
    %697 = vmatprep.subr.bf16.mxu0 0
    %698 = vmatpush1.bf16.msra.mxu0 0
    %699 = vmatprep.subr.bf16.mxu0 0
    %700 = vmatpush1.bf16.msra.mxu0 0
    %701 = vmatprep.subr.bf16.mxu0 0
    %702 = vmatpush1.bf16.msra.mxu0 0
    %703 = vmatprep.subr.bf16.mxu0 0
    %704 = vmatpush1.bf16.msra.mxu0 %v679
    %705 = vmatprep.subr.bf16.mxu0 0
    %706 = vmatpush1.bf16.msra.mxu0 %v678
    %707 = vmatprep.subr.bf16.mxu0 0
    %708 = vmatpush2.bf16.msra.mxu0 0
    %709 = vmatprep.subr.bf16.mxu0 0
    %710 = vmatpush2.bf16.msra.mxu0 0
    %711 = vmatprep.subr.bf16.mxu0 0
    %712 = vmatpush2.bf16.msra.mxu0 0
    %713 = vmatprep.subr.bf16.mxu0 0
    %714 = vmatpush2.bf16.msra.mxu0 0
    %715 = vmatprep.subr.bf16.mxu0 0
    %716 = vmatpush2.bf16.msra.mxu0 0
    %717 = vmatprep.subr.bf16.mxu0 0
    %718 = vmatpush2.bf16.msra.mxu0 0
    %719 = vmatprep.subr.bf16.mxu0 0
    %720 = vmatpush2.bf16.msra.mxu0 0
    %721 = vmatprep.subr.bf16.mxu0 0
    %722 = vmatpush2.bf16.msra.mxu0 0
    %723 = vmatprep.mubr.bf16.mxu0 0
    %724 = vmatmul.mubr.bf16.gmra.mxu0 %v686
    %v725 = vpop.f32.mrf.mxu0
    %v726 = vadd.f32 %v684, %v725
    %v727 = vpop.f32.mrf.mxu0
    %v728 = vpop.f32.mrf.mxu0
    %v729 = vadd.f32 %v684, %v728
    %v730 = vpop.f32.mrf.mxu0
    %731 = vmatprep.mubr.bf16.mxu0 0
    %732 = vmatmul.mubr.bf16.gmra.mxu0 %v689
    %v733 = vpop.f32.mrf.mxu0
    %v734 = vadd.f32 %v684, %v733
    %v735 = vpop.f32.mrf.mxu0
    %v736 = vpop.f32.mrf.mxu0
    %v737 = vadd.f32 %v684, %v736
    %v738 = vpop.f32.mrf.mxu0
    %739 = vdwg.mxu0
    %v740 = vadd.f32 %v211, %v726
    %v741 = vadd.f32 %v212, %v729
    %v742 = vadd.f32 %v213, %v734
    %v743 = vadd.f32 %v214, %v737
    %v744 = vld [vmem:[#allocation9 + $0x4] sm:$0x1]
    %v745 = vld [vmem:[#allocation9 + $0x5] sm:$0x1]
    %v746 = vsel %vm145, %v740, 0.0
    %747 = vadd.xlane.f32.xlu0 %v746
    %v748 = vpop.xlane.xlu0 %747
    %v749 = vsel %vm145, %v741, 0.0
    %750 = vadd.xlane.f32.xlu0 %v749
    %v751 = vpop.xlane.xlu0 %750
    %v752 = vsel %vm145, %v742, 0.0
    %753 = vadd.xlane.f32.xlu0 %v752
    %v754 = vpop.xlane.xlu0 %753
    %v755 = vsel %vm145, %v743, 0.0
    %756 = vadd.xlane.f32.xlu0 %v755
    %v757 = vpop.xlane.xlu0 %756
    %v758 = vmul.f32 %v748, %v158
    %v759 = vmul.f32 %v751, %v158
    %v760 = vmul.f32 %v754, %v158
    %v761 = vmul.f32 %v757, %v158
    %v762 = vsub.f32 %v740, %v758
    %v763 = vsub.f32 %v741, %v759
    %v764 = vsub.f32 %v742, %v760
    %v765 = vsub.f32 %v743, %v761
    %v766 = vmul.f32 %v762, %v762
    %v767 = vmul.f32 %v763, %v763
    %v768 = vmul.f32 %v764, %v764
    %v769 = vmul.f32 %v765, %v765
    %v770 = vsel %vm145, %v766, 0.0
    %771 = vadd.xlane.f32.xlu0 %v770
    %v772 = vpop.xlane.xlu0 %771
    %v773 = vsel %vm145, %v767, 0.0
    %774 = vadd.xlane.f32.xlu0 %v773
    %v775 = vpop.xlane.xlu0 %774
    %v776 = vsel %vm145, %v768, 0.0
    %777 = vadd.xlane.f32.xlu0 %v776
    %v778 = vpop.xlane.xlu0 %777
    %v779 = vsel %vm145, %v769, 0.0
    %780 = vadd.xlane.f32.xlu0 %v779
    %v781 = vpop.xlane.xlu0 %780
    %v782 = vmul.f32 %v772, %v158
    %v783 = vmul.f32 %v775, %v158
    %v784 = vmul.f32 %v778, %v158
    %v785 = vmul.f32 %v781, %v158
    %v786 = vadd.f32 %v782, 1e-05
    %v787 = vadd.f32 %v783, 1e-05
    %v788 = vadd.f32 %v784, 1e-05
    %v789 = vadd.f32 %v785, 1e-05
    %v790 = vrsqrt.pop %v786
    %v791 = vrsqrt.pop %v787
    %v792 = vrsqrt.pop %v788
    %v793 = vrsqrt.pop %v789
    %v794 = vmul.f32 %v762, %v790
    %v795 = vmul.f32 %v763, %v791
    %v796 = vmul.f32 %v764, %v792
    %v797 = vmul.f32 %v765, %v793
    %v798 = vlaneseq
    %v799 = vshrl.u32 %v798, 7
    %v800 = vsub.s32 0, %v799
    %v801 = vrot.slane %v744, %v800
    %v802 = vmul.f32 %v794, %v801
    %v803 = vmul.f32 %v795, %v801
    %v804 = vmul.f32 %v796, %v801
    %v805 = vmul.f32 %v797, %v801
    %v806 = vlaneseq
    %v807 = vshrl.u32 %v806, 7
    %v808 = vsub.s32 0, %v807
    %v809 = vrot.slane %v745, %v808
    %v810 = vadd.f32 %v802, %v809
    %v811 = vadd.f32 %v803, %v809
    %v812 = vadd.f32 %v804, %v809
    %v813 = vadd.f32 %v805, %v809
    %v814 = vld [vmem:[#allocation7 + $0x70] sm:$0xff]
    %v815 = vld [vmem:[#allocation7 + $0x78] sm:$0xff]
    %v816 = vld [vmem:[#allocation7 + $0x80] sm:$0xff]
    %v817 = vld [vmem:[#allocation7 + $0x88] sm:$0xff]
    %v818 = vpack.c.bf16 %v811, %v810
    %v819 = vpack.c.bf16 %v813, %v812
    %v820 = vpack.c.bf16 %v815, %v814
    %v821 = vpack.c.bf16 %v817, %v816
    %v822 = vld [vmem:[#allocation9 + $0x6] sm:$0x1]
    %v823 = vlaneseq
    %v824 = vshrl.u32 %v823, 7
    %v825 = vsub.s32 0, %v824
    %v826 = vrot.slane %v822, %v825
    %v828 = vsel %vm145, %v818, 0
    %v831 = vsel %vm145, %v819, 0
    %833 = vmatprep.subr.bf16.mxu0 0
    %834 = vmatpush1.bf16.msra.mxu0 0
    %835 = vmatprep.subr.bf16.mxu0 0
    %836 = vmatpush1.bf16.msra.mxu0 0
    %837 = vmatprep.subr.bf16.mxu0 0
    %838 = vmatpush1.bf16.msra.mxu0 0
    %839 = vmatprep.subr.bf16.mxu0 0
    %840 = vmatpush1.bf16.msra.mxu0 0
    %841 = vmatprep.subr.bf16.mxu0 0
    %842 = vmatpush1.bf16.msra.mxu0 0
    %843 = vmatprep.subr.bf16.mxu0 0
    %844 = vmatpush1.bf16.msra.mxu0 0
    %845 = vmatprep.subr.bf16.mxu0 0
    %846 = vmatpush1.bf16.msra.mxu0 %v821
    %847 = vmatprep.subr.bf16.mxu0 0
    %848 = vmatpush1.bf16.msra.mxu0 %v820
    %849 = vmatprep.subr.bf16.mxu0 0
    %850 = vmatpush2.bf16.msra.mxu0 0
    %851 = vmatprep.subr.bf16.mxu0 0
    %852 = vmatpush2.bf16.msra.mxu0 0
    %853 = vmatprep.subr.bf16.mxu0 0
    %854 = vmatpush2.bf16.msra.mxu0 0
    %855 = vmatprep.subr.bf16.mxu0 0
    %856 = vmatpush2.bf16.msra.mxu0 0
    %857 = vmatprep.subr.bf16.mxu0 0
    %858 = vmatpush2.bf16.msra.mxu0 0
    %859 = vmatprep.subr.bf16.mxu0 0
    %860 = vmatpush2.bf16.msra.mxu0 0
    %861 = vmatprep.subr.bf16.mxu0 0
    %862 = vmatpush2.bf16.msra.mxu0 0
    %863 = vmatprep.subr.bf16.mxu0 0
    %864 = vmatpush2.bf16.msra.mxu0 0
    %865 = vmatprep.mubr.bf16.mxu0 0
    %866 = vmatmul.mubr.bf16.gmra.mxu0 %v828
    %v867 = vpop.f32.mrf.mxu0
    %v868 = vadd.f32 %v826, %v867
    %v869 = vpop.f32.mrf.mxu0
    %v870 = vpop.f32.mrf.mxu0
    %v871 = vadd.f32 %v826, %v870
    %v872 = vpop.f32.mrf.mxu0
    %873 = vmatprep.mubr.bf16.mxu0 0
    %874 = vmatmul.mubr.bf16.gmra.mxu0 %v831
    %v875 = vpop.f32.mrf.mxu0
    %v876 = vadd.f32 %v826, %v875
    %v877 = vpop.f32.mrf.mxu0
    %v878 = vpop.f32.mrf.mxu0
    %v879 = vadd.f32 %v826, %v878
    %v880 = vpop.f32.mrf.mxu0
    %881 = vdwg.mxu0
    %v882 = vmax.f32 %v868, 0.0
    %v883 = vmax.f32 %v871, 0.0
    %v884 = vmax.f32 %v876, 0.0
    %v885 = vmax.f32 %v879, 0.0
    %v886 = vld [vmem:[#allocation7 + $0x90] sm:$0xff]
    %v887 = vld [vmem:[#allocation7 + $0x98] sm:$0xff]
    %v888 = vld [vmem:[#allocation7 + $0xa0] sm:$0xff]
    %v889 = vld [vmem:[#allocation7 + $0xa8] sm:$0xff]
    %v890 = vld [vmem:[#allocation7 + $0xb0] sm:$0xff]
    %v891 = vld [vmem:[#allocation7 + $0xb8] sm:$0xff]
    %v892 = vld [vmem:[#allocation7 + $0xc0] sm:$0xff]
    %v893 = vld [vmem:[#allocation7 + $0xc8] sm:$0xff]
    %v894 = vpack.c.bf16 %v883, %v882
    %v895 = vpack.c.bf16 %v885, %v884
    %v896 = vpack.c.bf16 %v887, %v886
    %v897 = vpack.c.bf16 %v889, %v888
    %v898 = vpack.c.bf16 %v891, %v890
    %v899 = vpack.c.bf16 %v893, %v892
    %v900 = vld [vmem:[#allocation9 + $0x7] sm:$0x1]
    %v901 = vlaneseq
    %v902 = vshrl.u32 %v901, 7
    %v903 = vsub.s32 0, %v902
    %v904 = vrot.slane %v900, %v903
    %vm905 = vcmask 523264
    %v907 = vsel %vm905, %v894, 0
    %v910 = vsel %vm905, %v895, 0
    %912 = vmatprep.subr.bf16.mxu0 0
    %913 = vmatpush1.bf16.msra.mxu0 0
    %914 = vmatprep.subr.bf16.mxu0 0
    %915 = vmatpush1.bf16.msra.mxu0 0
    %916 = vmatprep.subr.bf16.mxu0 0
    %917 = vmatpush1.bf16.msra.mxu0 0
    %918 = vmatprep.subr.bf16.mxu0 0
    %919 = vmatpush1.bf16.msra.mxu0 0
    %920 = vmatprep.subr.bf16.mxu0 0
    %921 = vmatpush1.bf16.msra.mxu0 %v899
    %922 = vmatprep.subr.bf16.mxu0 0
    %923 = vmatpush1.bf16.msra.mxu0 %v898
    %924 = vmatprep.subr.bf16.mxu0 0
    %925 = vmatpush1.bf16.msra.mxu0 %v897
    %926 = vmatprep.subr.bf16.mxu0 0
    %927 = vmatpush1.bf16.msra.mxu0 %v896
    %928 = vmatprep.subr.bf16.mxu0 0
    %929 = vmatpush2.bf16.msra.mxu0 0
    %930 = vmatprep.subr.bf16.mxu0 0
    %931 = vmatpush2.bf16.msra.mxu0 0
    %932 = vmatprep.subr.bf16.mxu0 0
    %933 = vmatpush2.bf16.msra.mxu0 0
    %934 = vmatprep.subr.bf16.mxu0 0
    %935 = vmatpush2.bf16.msra.mxu0 0
    %936 = vmatprep.subr.bf16.mxu0 0
    %937 = vmatpush2.bf16.msra.mxu0 0
    %938 = vmatprep.subr.bf16.mxu0 0
    %939 = vmatpush2.bf16.msra.mxu0 0
    %940 = vmatprep.subr.bf16.mxu0 0
    %941 = vmatpush2.bf16.msra.mxu0 0
    %942 = vmatprep.subr.bf16.mxu0 0
    %943 = vmatpush2.bf16.msra.mxu0 0
    %944 = vmatprep.mubr.bf16.mxu0 0
    %945 = vmatmul.mubr.bf16.gmra.mxu0 %v907
    %v946 = vpop.f32.mrf.mxu0
    %v947 = vadd.f32 %v904, %v946
    %v948 = vpop.f32.mrf.mxu0
    %v949 = vpop.f32.mrf.mxu0
    %v950 = vadd.f32 %v904, %v949
    %v951 = vpop.f32.mrf.mxu0
    %952 = vmatprep.mubr.bf16.mxu0 0
    %953 = vmatmul.mubr.bf16.gmra.mxu0 %v910
    %v954 = vpop.f32.mrf.mxu0
    %v955 = vadd.f32 %v904, %v954
    %v956 = vpop.f32.mrf.mxu0
    %v957 = vpop.f32.mrf.mxu0
    %v958 = vadd.f32 %v904, %v957
    %v959 = vpop.f32.mrf.mxu0
    %960 = vdwg.mxu0
    %v961 = vadd.f32 %v810, %v947
    %v962 = vadd.f32 %v811, %v950
    %v963 = vadd.f32 %v812, %v955
    %v964 = vadd.f32 %v813, %v958
    %v965 = vld [vmem:[#allocation9 + $0x8] sm:$0x1]
    %v966 = vld [vmem:[#allocation9 + $0x9] sm:$0x1]
    %v967 = vsel %vm145, %v961, 0.0
    %968 = vadd.xlane.f32.xlu0 %v967
    %v969 = vpop.xlane.xlu0 %968
    %v970 = vsel %vm145, %v962, 0.0
    %971 = vadd.xlane.f32.xlu0 %v970
    %v972 = vpop.xlane.xlu0 %971
    %v973 = vsel %vm145, %v963, 0.0
    %974 = vadd.xlane.f32.xlu0 %v973
    %v975 = vpop.xlane.xlu0 %974
    %v976 = vsel %vm145, %v964, 0.0
    %977 = vadd.xlane.f32.xlu0 %v976
    %v978 = vpop.xlane.xlu0 %977
    %v979 = vmul.f32 %v969, %v158
    %v980 = vmul.f32 %v972, %v158
    %v981 = vmul.f32 %v975, %v158
    %v982 = vmul.f32 %v978, %v158
    %v983 = vsub.f32 %v961, %v979
    %v984 = vsub.f32 %v962, %v980
    %v985 = vsub.f32 %v963, %v981
    %v986 = vsub.f32 %v964, %v982
    %v987 = vmul.f32 %v983, %v983
    %v988 = vmul.f32 %v984, %v984
    %v989 = vmul.f32 %v985, %v985
    %v990 = vmul.f32 %v986, %v986
    %v991 = vsel %vm145, %v987, 0.0
    %992 = vadd.xlane.f32.xlu0 %v991
    %v993 = vpop.xlane.xlu0 %992
    %v994 = vsel %vm145, %v988, 0.0
    %995 = vadd.xlane.f32.xlu0 %v994
    %v996 = vpop.xlane.xlu0 %995
    %v997 = vsel %vm145, %v989, 0.0
    %998 = vadd.xlane.f32.xlu0 %v997
    %v999 = vpop.xlane.xlu0 %998
    %v1000 = vsel %vm145, %v990, 0.0
    %1001 = vadd.xlane.f32.xlu0 %v1000
    %v1002 = vpop.xlane.xlu0 %1001
    %v1003 = vmul.f32 %v993, %v158
    %v1004 = vmul.f32 %v996, %v158
    %v1005 = vmul.f32 %v999, %v158
    %v1006 = vmul.f32 %v1002, %v158
    %v1007 = vadd.f32 %v1003, 1e-05
    %v1008 = vadd.f32 %v1004, 1e-05
    %v1009 = vadd.f32 %v1005, 1e-05
    %v1010 = vadd.f32 %v1006, 1e-05
    %v1011 = vrsqrt.pop %v1007
    %v1012 = vrsqrt.pop %v1008
    %v1013 = vrsqrt.pop %v1009
    %v1014 = vrsqrt.pop %v1010
    %v1015 = vmul.f32 %v983, %v1011
    %v1016 = vmul.f32 %v984, %v1012
    %v1017 = vmul.f32 %v985, %v1013
    %v1018 = vmul.f32 %v986, %v1014
    %v1019 = vlaneseq
    %v1020 = vshrl.u32 %v1019, 7
    %v1021 = vsub.s32 0, %v1020
    %v1022 = vrot.slane %v965, %v1021
    %v1023 = vmul.f32 %v1015, %v1022
    %v1024 = vmul.f32 %v1016, %v1022
    %v1025 = vmul.f32 %v1017, %v1022
    %v1026 = vmul.f32 %v1018, %v1022
    %v1027 = vlaneseq
    %v1028 = vshrl.u32 %v1027, 7
    %v1029 = vsub.s32 0, %v1028
    %v1030 = vrot.slane %v966, %v1029
    %v1031 = vadd.f32 %v1023, %v1030
    %v1032 = vadd.f32 %v1024, %v1030
    %v1033 = vadd.f32 %v1025, %v1030
    %v1034 = vadd.f32 %v1026, %v1030
    %v1035 = vld [vmem:[#allocation7 + $0xd0] sm:$0xff]
    %v1036 = vld [vmem:[#allocation7 + $0xd8] sm:$0xff]
    %v1037 = vld [vmem:[#allocation7 + $0xe0] sm:$0xff]
    %v1038 = vld [vmem:[#allocation7 + $0xe8] sm:$0xff]
    %v1039 = vpack.c.bf16 %v1032, %v1031
    %v1040 = vpack.c.bf16 %v1034, %v1033
    %v1041 = vpack.c.bf16 %v1036, %v1035
    %v1042 = vpack.c.bf16 %v1038, %v1037
    %v1043 = vld [vmem:[#allocation9 + $0xa] sm:$0x1]
    %v1044 = vlaneseq
    %v1045 = vshrl.u32 %v1044, 7
    %v1046 = vsub.s32 0, %v1045
    %v1047 = vrot.slane %v1043, %v1046
    %v1049 = vsel %vm145, %v1039, 0
    %v1052 = vsel %vm145, %v1040, 0
    %1054 = vmatprep.subr.bf16.mxu0 0
    %1055 = vmatpush1.bf16.msra.mxu0 0
    %1056 = vmatprep.subr.bf16.mxu0 0
    %1057 = vmatpush1.bf16.msra.mxu0 0
    %1058 = vmatprep.subr.bf16.mxu0 0
    %1059 = vmatpush1.bf16.msra.mxu0 0
    %1060 = vmatprep.subr.bf16.mxu0 0
    %1061 = vmatpush1.bf16.msra.mxu0 0
    %1062 = vmatprep.subr.bf16.mxu0 0
    %1063 = vmatpush1.bf16.msra.mxu0 0
    %1064 = vmatprep.subr.bf16.mxu0 0
    %1065 = vmatpush1.bf16.msra.mxu0 0
    %1066 = vmatprep.subr.bf16.mxu0 0
    %1067 = vmatpush1.bf16.msra.mxu0 %v1042
    %1068 = vmatprep.subr.bf16.mxu0 0
    %1069 = vmatpush1.bf16.msra.mxu0 %v1041
    %1070 = vmatprep.subr.bf16.mxu0 0
    %1071 = vmatpush2.bf16.msra.mxu0 0
    %1072 = vmatprep.subr.bf16.mxu0 0
    %1073 = vmatpush2.bf16.msra.mxu0 0
    %1074 = vmatprep.subr.bf16.mxu0 0
    %1075 = vmatpush2.bf16.msra.mxu0 0
    %1076 = vmatprep.subr.bf16.mxu0 0
    %1077 = vmatpush2.bf16.msra.mxu0 0
    %1078 = vmatprep.subr.bf16.mxu0 0
    %1079 = vmatpush2.bf16.msra.mxu0 0
    %1080 = vmatprep.subr.bf16.mxu0 0
    %1081 = vmatpush2.bf16.msra.mxu0 0
    %1082 = vmatprep.subr.bf16.mxu0 0
    %1083 = vmatpush2.bf16.msra.mxu0 0
    %1084 = vmatprep.subr.bf16.mxu0 0
    %1085 = vmatpush2.bf16.msra.mxu0 0
    %1086 = vmatprep.mubr.bf16.mxu0 0
    %1087 = vmatmul.mubr.bf16.gmra.mxu0 %v1049
    %v1088 = vpop.f32.mrf.mxu0
    %v1089 = vadd.f32 %v1047, %v1088
    %v1090 = vpop.f32.mrf.mxu0
    %v1091 = vpop.f32.mrf.mxu0
    %v1092 = vadd.f32 %v1047, %v1091
    %v1093 = vpop.f32.mrf.mxu0
    %1094 = vmatprep.mubr.bf16.mxu0 0
    %1095 = vmatmul.mubr.bf16.gmra.mxu0 %v1052
    %v1096 = vpop.f32.mrf.mxu0
    %v1097 = vadd.f32 %v1047, %v1096
    %v1098 = vpop.f32.mrf.mxu0
    %v1099 = vpop.f32.mrf.mxu0
    %v1100 = vadd.f32 %v1047, %v1099
    %v1101 = vpop.f32.mrf.mxu0
    %1102 = vdwg.mxu0
    %v1103 = vpack.c.bf16 %v1092, %v1089
    %v1104 = vpack.c.bf16 %v1100, %v1097
    %1107 = vrot.lane.b32.xlu0 %v1103, 96
    %v1108 = vpop.permute.xlu0 %1107
    %1109 = vrot.lane.b32.xlu0 %v1104, 96
    %v1110 = vpop.permute.xlu0 %1109
    %v1112 = vsel %vm291, %v1103, 0
    %v1115 = vsel %vm291, %v1104, 0
    %v1118 = vsel %vm291, %v1108, 0
    %v1121 = vsel %vm291, %v1110, 0
    %1123 = vmatprep.subr.bf16.mxu0 0
    %1124 = vmatpush1.bf16.xpose.msra.mxu0 0
    %1125 = vmatprep.subr.bf16.mxu0 0
    %1126 = vmatpush1.bf16.xpose.msra.mxu0 0
    %1127 = vmatprep.subr.bf16.mxu0 0
    %1128 = vmatpush1.bf16.xpose.msra.mxu0 0
    %1129 = vmatprep.subr.bf16.mxu0 0
    %1130 = vmatpush1.bf16.xpose.msra.mxu0 0
    %1131 = vmatprep.subr.bf16.mxu0 0
    %1132 = vmatpush1.bf16.xpose.msra.mxu0 0
    %1133 = vmatprep.subr.bf16.mxu0 0
    %1134 = vmatpush1.bf16.xpose.msra.mxu0 0
    %1135 = vmatprep.subr.bf16.mxu0 0
    %1136 = vmatpush1.bf16.xpose.msra.mxu0 %v1121
    %1137 = vmatprep.subr.bf16.mxu0 0
    %1138 = vmatpush1.bf16.xpose.msra.mxu0 %v1118
    %1139 = vmatprep.subr.bf16.mxu0 0
    %1140 = vmatpush2.bf16.xpose.msra.mxu0 0
    %1141 = vmatprep.subr.bf16.mxu0 0
    %1142 = vmatpush2.bf16.xpose.msra.mxu0 0
    %1143 = vmatprep.subr.bf16.mxu0 0
    %1144 = vmatpush2.bf16.xpose.msra.mxu0 0
    %1145 = vmatprep.subr.bf16.mxu0 0
    %1146 = vmatpush2.bf16.xpose.msra.mxu0 0
    %1147 = vmatprep.subr.bf16.mxu0 0
    %1148 = vmatpush2.bf16.xpose.msra.mxu0 0
    %1149 = vmatprep.subr.bf16.mxu0 0
    %1150 = vmatpush2.bf16.xpose.msra.mxu0 0
    %1151 = vmatprep.subr.bf16.mxu0 0
    %1152 = vmatpush2.bf16.xpose.msra.mxu0 0
    %1153 = vmatprep.subr.bf16.mxu0 0
    %1154 = vmatpush2.bf16.xpose.msra.mxu0 0
    %1155 = vmatprep.mubr.bf16.mxu0 0
    %1156 = vmatmul.mubr.bf16.gmra.mxu0 %v1112
    %v1157 = vpop.f32.mrf.mxu0
    %v1158 = vadd.f32 0.0, %v1157
    %v1159 = vpop.f32.mrf.mxu0
    %v1160 = vpop.f32.mrf.mxu0
    %v1161 = vadd.f32 0.0, %v1160
    %v1162 = vpop.f32.mrf.mxu0
    %1163 = vmatprep.mubr.bf16.mxu0 0
    %1164 = vmatmul.mubr.bf16.gmra.mxu0 %v1115
    %v1165 = vpop.f32.mrf.mxu0
    %v1166 = vadd.f32 0.0, %v1165
    %v1167 = vpop.f32.mrf.mxu0
    %v1168 = vpop.f32.mrf.mxu0
    %v1169 = vadd.f32 0.0, %v1168
    %v1170 = vpop.f32.mrf.mxu0
    %1171 = vdwg.mxu0
    %v1172 = vmul.f32 %v1158, 0.25
    %v1173 = vmul.f32 %v1161, 0.25
    %v1174 = vmul.f32 %v1166, 0.25
    %v1175 = vmul.f32 %v1169, 0.25
    %v1176 = vadd.f32 %v1172, %v72
    %v1177 = vadd.f32 %v1173, %v73
    %v1178 = vadd.f32 %v1174, %v74
    %v1179 = vadd.f32 %v1175, %v75
    %v1180 = vsel %vm145, %v1176, -inf
    %1181 = vmax.xlane.f32.xlu0 %v1180
    %v1182 = vpop.xlane.xlu0 %1181
    %v1183 = vsel %vm145, %v1177, -inf
    %1184 = vmax.xlane.f32.xlu0 %v1183
    %v1185 = vpop.xlane.xlu0 %1184
    %v1186 = vsel %vm145, %v1178, -inf
    %1187 = vmax.xlane.f32.xlu0 %v1186
    %v1188 = vpop.xlane.xlu0 %1187
    %v1189 = vsel %vm145, %v1179, -inf
    %1190 = vmax.xlane.f32.xlu0 %v1189
    %v1191 = vpop.xlane.xlu0 %1190
    %v1192 = vsub.f32 %v1176, %v1182
    %v1193 = vsub.f32 %v1177, %v1185
    %v1194 = vsub.f32 %v1178, %v1188
    %v1195 = vsub.f32 %v1179, %v1191
    %v1196 = vmul.f32 %v1192, 1.442695
    %v1197 = vpow.pop %v1196
    %v1198 = vmul.f32 %v1193, 1.442695
    %v1199 = vpow.pop %v1198
    %v1200 = vmul.f32 %v1194, 1.442695
    %v1201 = vpow.pop %v1200
    %v1202 = vmul.f32 %v1195, 1.442695
    %v1203 = vpow.pop %v1202
    %v1204 = vsel %vm145, %v1197, 0.0
    %1205 = vadd.xlane.f32.xlu0 %v1204
    %v1206 = vpop.xlane.xlu0 %1205
    %v1207 = vsel %vm145, %v1199, 0.0
    %1208 = vadd.xlane.f32.xlu0 %v1207
    %v1209 = vpop.xlane.xlu0 %1208
    %v1210 = vsel %vm145, %v1201, 0.0
    %1211 = vadd.xlane.f32.xlu0 %v1210
    %v1212 = vpop.xlane.xlu0 %1211
    %v1213 = vsel %vm145, %v1203, 0.0
    %1214 = vadd.xlane.f32.xlu0 %v1213
    %v1215 = vpop.xlane.xlu0 %1214
    %v1216 = vrcp.pop %v1206
    %v1217 = vrcp.pop %v1209
    %v1218 = vrcp.pop %v1212
    %v1219 = vrcp.pop %v1215
    %v1220 = vmul.f32 %v1197, %v1216
    %v1221 = vmul.f32 %v1199, %v1217
    %v1222 = vmul.f32 %v1201, %v1218
    %v1223 = vmul.f32 %v1203, %v1219
    %v1224 = vpack.c.bf16 %v1221, %v1220
    %v1225 = vpack.c.bf16 %v1223, %v1222
    %1226 = vrot.lane.b32.xlu0 %v1103, 64
    %v1227 = vpop.permute.xlu0 %1226
    %1228 = vrot.lane.b32.xlu0 %v1104, 64
    %v1229 = vpop.permute.xlu0 %1228
    %v1233 = vsel %vm145, %v1224, 0
    %v1236 = vsel %vm145, %v1225, 0
    %1238 = vmatprep.subr.bf16.mxu0 0
    %1239 = vmatpush1.bf16.msra.mxu0 0
    %1240 = vmatprep.subr.bf16.mxu0 0
    %1241 = vmatpush1.bf16.msra.mxu0 0
    %1242 = vmatprep.subr.bf16.mxu0 0
    %1243 = vmatpush1.bf16.msra.mxu0 0
    %1244 = vmatprep.subr.bf16.mxu0 0
    %1245 = vmatpush1.bf16.msra.mxu0 0
    %1246 = vmatprep.subr.bf16.mxu0 0
    %1247 = vmatpush1.bf16.msra.mxu0 0
    %1248 = vmatprep.subr.bf16.mxu0 0
    %1249 = vmatpush1.bf16.msra.mxu0 0
    %1250 = vmatprep.subr.bf16.mxu0 0
    %1251 = vmatpush1.bf16.msra.mxu0 %v1229
    %1252 = vmatprep.subr.bf16.mxu0 0
    %1253 = vmatpush1.bf16.msra.mxu0 %v1227
    %1254 = vmatprep.subr.bf16.mxu0 0
    %1255 = vmatpush2.bf16.msra.mxu0 0
    %1256 = vmatprep.subr.bf16.mxu0 0
    %1257 = vmatpush2.bf16.msra.mxu0 0
    %1258 = vmatprep.subr.bf16.mxu0 0
    %1259 = vmatpush2.bf16.msra.mxu0 0
    %1260 = vmatprep.subr.bf16.mxu0 0
    %1261 = vmatpush2.bf16.msra.mxu0 0
    %1262 = vmatprep.subr.bf16.mxu0 0
    %1263 = vmatpush2.bf16.msra.mxu0 0
    %1264 = vmatprep.subr.bf16.mxu0 0
    %1265 = vmatpush2.bf16.msra.mxu0 0
    %1266 = vmatprep.subr.bf16.mxu0 0
    %1267 = vmatpush2.bf16.msra.mxu0 0
    %1268 = vmatprep.subr.bf16.mxu0 0
    %1269 = vmatpush2.bf16.msra.mxu0 0
    %1270 = vmatprep.mubr.bf16.mxu0 0
    %1271 = vmatmul.mubr.bf16.gmra.mxu0 %v1233
    %v1272 = vpop.f32.mrf.mxu0
    %v1273 = vadd.f32 0.0, %v1272
    %v1274 = vpop.f32.mrf.mxu0
    %v1275 = vpop.f32.mrf.mxu0
    %v1276 = vadd.f32 0.0, %v1275
    %v1277 = vpop.f32.mrf.mxu0
    %1278 = vmatprep.mubr.bf16.mxu0 0
    %1279 = vmatmul.mubr.bf16.gmra.mxu0 %v1236
    %v1280 = vpop.f32.mrf.mxu0
    %v1281 = vadd.f32 0.0, %v1280
    %v1282 = vpop.f32.mrf.mxu0
    %v1283 = vpop.f32.mrf.mxu0
    %v1284 = vadd.f32 0.0, %v1283
    %v1285 = vpop.f32.mrf.mxu0
    %1286 = vdwg.mxu0
    %1287 = vrot.lane.b32.xlu0 %v1103, 112
    %v1288 = vpop.permute.xlu0 %1287
    %1289 = vrot.lane.b32.xlu0 %v1104, 112
    %v1290 = vpop.permute.xlu0 %1289
    %1291 = vrot.lane.b32.xlu0 %v1103, 80
    %v1292 = vpop.permute.xlu0 %1291
    %1293 = vrot.lane.b32.xlu0 %v1104, 80
    %v1294 = vpop.permute.xlu0 %1293
    %v1296 = vsel %vm291, %v1288, 0
    %v1299 = vsel %vm291, %v1290, 0
    %v1302 = vsel %vm291, %v1292, 0
    %v1305 = vsel %vm291, %v1294, 0
    %1307 = vmatprep.subr.bf16.mxu0 0
    %1308 = vmatpush1.bf16.xpose.msra.mxu0 0
    %1309 = vmatprep.subr.bf16.mxu0 0
    %1310 = vmatpush1.bf16.xpose.msra.mxu0 0
    %1311 = vmatprep.subr.bf16.mxu0 0
    %1312 = vmatpush1.bf16.xpose.msra.mxu0 0
    %1313 = vmatprep.subr.bf16.mxu0 0
    %1314 = vmatpush1.bf16.xpose.msra.mxu0 0
    %1315 = vmatprep.subr.bf16.mxu0 0
    %1316 = vmatpush1.bf16.xpose.msra.mxu0 0
    %1317 = vmatprep.subr.bf16.mxu0 0
    %1318 = vmatpush1.bf16.xpose.msra.mxu0 0
    %1319 = vmatprep.subr.bf16.mxu0 0
    %1320 = vmatpush1.bf16.xpose.msra.mxu0 %v1305
    %1321 = vmatprep.subr.bf16.mxu0 0
    %1322 = vmatpush1.bf16.xpose.msra.mxu0 %v1302
    %1323 = vmatprep.subr.bf16.mxu0 0
    %1324 = vmatpush2.bf16.xpose.msra.mxu0 0
    %1325 = vmatprep.subr.bf16.mxu0 0
    %1326 = vmatpush2.bf16.xpose.msra.mxu0 0
    %1327 = vmatprep.subr.bf16.mxu0 0
    %1328 = vmatpush2.bf16.xpose.msra.mxu0 0
    %1329 = vmatprep.subr.bf16.mxu0 0
    %1330 = vmatpush2.bf16.xpose.msra.mxu0 0
    %1331 = vmatprep.subr.bf16.mxu0 0
    %1332 = vmatpush2.bf16.xpose.msra.mxu0 0
    %1333 = vmatprep.subr.bf16.mxu0 0
    %1334 = vmatpush2.bf16.xpose.msra.mxu0 0
    %1335 = vmatprep.subr.bf16.mxu0 0
    %1336 = vmatpush2.bf16.xpose.msra.mxu0 0
    %1337 = vmatprep.subr.bf16.mxu0 0
    %1338 = vmatpush2.bf16.xpose.msra.mxu0 0
    %1339 = vmatprep.mubr.bf16.mxu0 0
    %1340 = vmatmul.mubr.bf16.gmra.mxu0 %v1296
    %v1341 = vpop.f32.mrf.mxu0
    %v1342 = vadd.f32 0.0, %v1341
    %v1343 = vpop.f32.mrf.mxu0
    %v1344 = vpop.f32.mrf.mxu0
    %v1345 = vadd.f32 0.0, %v1344
    %v1346 = vpop.f32.mrf.mxu0
    %1347 = vmatprep.mubr.bf16.mxu0 0
    %1348 = vmatmul.mubr.bf16.gmra.mxu0 %v1299
    %v1349 = vpop.f32.mrf.mxu0
    %v1350 = vadd.f32 0.0, %v1349
    %v1351 = vpop.f32.mrf.mxu0
    %v1352 = vpop.f32.mrf.mxu0
    %v1353 = vadd.f32 0.0, %v1352
    %v1354 = vpop.f32.mrf.mxu0
    %1355 = vdwg.mxu0
    %v1356 = vmul.f32 %v1342, 0.25
    %v1357 = vmul.f32 %v1345, 0.25
    %v1358 = vmul.f32 %v1350, 0.25
    %v1359 = vmul.f32 %v1353, 0.25
    %v1360 = vadd.f32 %v1356, %v72
    %v1361 = vadd.f32 %v1357, %v73
    %v1362 = vadd.f32 %v1358, %v74
    %v1363 = vadd.f32 %v1359, %v75
    %v1364 = vsel %vm145, %v1360, -inf
    %1365 = vmax.xlane.f32.xlu0 %v1364
    %v1366 = vpop.xlane.xlu0 %1365
    %v1367 = vsel %vm145, %v1361, -inf
    %1368 = vmax.xlane.f32.xlu0 %v1367
    %v1369 = vpop.xlane.xlu0 %1368
    %v1370 = vsel %vm145, %v1362, -inf
    %1371 = vmax.xlane.f32.xlu0 %v1370
    %v1372 = vpop.xlane.xlu0 %1371
    %v1373 = vsel %vm145, %v1363, -inf
    %1374 = vmax.xlane.f32.xlu0 %v1373
    %v1375 = vpop.xlane.xlu0 %1374
    %v1376 = vsub.f32 %v1360, %v1366
    %v1377 = vsub.f32 %v1361, %v1369
    %v1378 = vsub.f32 %v1362, %v1372
    %v1379 = vsub.f32 %v1363, %v1375
    %v1380 = vmul.f32 %v1376, 1.442695
    %v1381 = vpow.pop %v1380
    %v1382 = vmul.f32 %v1377, 1.442695
    %v1383 = vpow.pop %v1382
    %v1384 = vmul.f32 %v1378, 1.442695
    %v1385 = vpow.pop %v1384
    %v1386 = vmul.f32 %v1379, 1.442695
    %v1387 = vpow.pop %v1386
    %v1388 = vsel %vm145, %v1381, 0.0
    %1389 = vadd.xlane.f32.xlu0 %v1388
    %v1390 = vpop.xlane.xlu0 %1389
    %v1391 = vsel %vm145, %v1383, 0.0
    %1392 = vadd.xlane.f32.xlu0 %v1391
    %v1393 = vpop.xlane.xlu0 %1392
    %v1394 = vsel %vm145, %v1385, 0.0
    %1395 = vadd.xlane.f32.xlu0 %v1394
    %v1396 = vpop.xlane.xlu0 %1395
    %v1397 = vsel %vm145, %v1387, 0.0
    %1398 = vadd.xlane.f32.xlu0 %v1397
    %v1399 = vpop.xlane.xlu0 %1398
    %v1400 = vrcp.pop %v1390
    %v1401 = vrcp.pop %v1393
    %v1402 = vrcp.pop %v1396
    %v1403 = vrcp.pop %v1399
    %v1404 = vmul.f32 %v1381, %v1400
    %v1405 = vmul.f32 %v1383, %v1401
    %v1406 = vmul.f32 %v1385, %v1402
    %v1407 = vmul.f32 %v1387, %v1403
    %v1408 = vpack.c.bf16 %v1405, %v1404
    %v1409 = vpack.c.bf16 %v1407, %v1406
    %1410 = vrot.lane.b32.xlu0 %v1103, 48
    %v1411 = vpop.permute.xlu0 %1410
    %1412 = vrot.lane.b32.xlu0 %v1104, 48
    %v1413 = vpop.permute.xlu0 %1412
    %v1417 = vsel %vm145, %v1408, 0
    %v1420 = vsel %vm145, %v1409, 0
    %1422 = vmatprep.subr.bf16.mxu0 0
    %1423 = vmatpush1.bf16.msra.mxu0 0
    %1424 = vmatprep.subr.bf16.mxu0 0
    %1425 = vmatpush1.bf16.msra.mxu0 0
    %1426 = vmatprep.subr.bf16.mxu0 0
    %1427 = vmatpush1.bf16.msra.mxu0 0
    %1428 = vmatprep.subr.bf16.mxu0 0
    %1429 = vmatpush1.bf16.msra.mxu0 0
    %1430 = vmatprep.subr.bf16.mxu0 0
    %1431 = vmatpush1.bf16.msra.mxu0 0
    %1432 = vmatprep.subr.bf16.mxu0 0
    %1433 = vmatpush1.bf16.msra.mxu0 0
    %1434 = vmatprep.subr.bf16.mxu0 0
    %1435 = vmatpush1.bf16.msra.mxu0 %v1413
    %1436 = vmatprep.subr.bf16.mxu0 0
    %1437 = vmatpush1.bf16.msra.mxu0 %v1411
    %1438 = vmatprep.subr.bf16.mxu0 0
    %1439 = vmatpush2.bf16.msra.mxu0 0
    %1440 = vmatprep.subr.bf16.mxu0 0
    %1441 = vmatpush2.bf16.msra.mxu0 0
    %1442 = vmatprep.subr.bf16.mxu0 0
    %1443 = vmatpush2.bf16.msra.mxu0 0
    %1444 = vmatprep.subr.bf16.mxu0 0
    %1445 = vmatpush2.bf16.msra.mxu0 0
    %1446 = vmatprep.subr.bf16.mxu0 0
    %1447 = vmatpush2.bf16.msra.mxu0 0
    %1448 = vmatprep.subr.bf16.mxu0 0
    %1449 = vmatpush2.bf16.msra.mxu0 0
    %1450 = vmatprep.subr.bf16.mxu0 0
    %1451 = vmatpush2.bf16.msra.mxu0 0
    %1452 = vmatprep.subr.bf16.mxu0 0
    %1453 = vmatpush2.bf16.msra.mxu0 0
    %1454 = vmatprep.mubr.bf16.mxu0 0
    %1455 = vmatmul.mubr.bf16.gmra.mxu0 %v1417
    %v1456 = vpop.f32.mrf.mxu0
    %v1457 = vadd.f32 0.0, %v1456
    %v1458 = vpop.f32.mrf.mxu0
    %v1459 = vpop.f32.mrf.mxu0
    %v1460 = vadd.f32 0.0, %v1459
    %v1461 = vpop.f32.mrf.mxu0
    %1462 = vmatprep.mubr.bf16.mxu0 0
    %1463 = vmatmul.mubr.bf16.gmra.mxu0 %v1420
    %v1464 = vpop.f32.mrf.mxu0
    %v1465 = vadd.f32 0.0, %v1464
    %v1466 = vpop.f32.mrf.mxu0
    %v1467 = vpop.f32.mrf.mxu0
    %v1468 = vadd.f32 0.0, %v1467
    %v1469 = vpop.f32.mrf.mxu0
    %1470 = vdwg.mxu0
    %1475 = vrot.lane.b32.xlu0 %v1457, 16
    %v1476 = vpop.permute.xlu0 %1475
    %1477 = vrot.lane.b32.xlu0 %v1460, 16
    %v1478 = vpop.permute.xlu0 %1477
    %1479 = vrot.lane.b32.xlu0 %v1465, 16
    %v1480 = vpop.permute.xlu0 %1479
    %1481 = vrot.lane.b32.xlu0 %v1468, 16
    %v1482 = vpop.permute.xlu0 %1481
    %v1487 = vsel %vm291, %v1273, %v1476
    %v1488 = vsel %vm291, %v1276, %v1478
    %v1489 = vsel %vm291, %v1281, %v1480
    %v1490 = vsel %vm291, %v1284, %v1482
    %v1491 = vld [vmem:[#allocation7 + $0xf0] sm:$0xff]
    %v1492 = vld [vmem:[#allocation7 + $0xf8] sm:$0xff]
    %v1493 = vld [vmem:[#allocation7 + $0x100] sm:$0xff]
    %v1494 = vld [vmem:[#allocation7 + $0x108] sm:$0xff]
    %v1495 = vpack.c.bf16 %v1488, %v1487
    %v1496 = vpack.c.bf16 %v1490, %v1489
    %v1497 = vpack.c.bf16 %v1492, %v1491
    %v1498 = vpack.c.bf16 %v1494, %v1493
    %v1499 = vld [vmem:[#allocation9 + $0xb] sm:$0x1]
    %v1500 = vlaneseq
    %v1501 = vshrl.u32 %v1500, 7
    %v1502 = vsub.s32 0, %v1501
    %v1503 = vrot.slane %v1499, %v1502
    %v1505 = vsel %vm145, %v1495, 0
    %v1508 = vsel %vm145, %v1496, 0
    %1510 = vmatprep.subr.bf16.mxu0 0
    %1511 = vmatpush1.bf16.msra.mxu0 0
    %1512 = vmatprep.subr.bf16.mxu0 0
    %1513 = vmatpush1.bf16.msra.mxu0 0
    %1514 = vmatprep.subr.bf16.mxu0 0
    %1515 = vmatpush1.bf16.msra.mxu0 0
    %1516 = vmatprep.subr.bf16.mxu0 0
    %1517 = vmatpush1.bf16.msra.mxu0 0
    %1518 = vmatprep.subr.bf16.mxu0 0
    %1519 = vmatpush1.bf16.msra.mxu0 0
    %1520 = vmatprep.subr.bf16.mxu0 0
    %1521 = vmatpush1.bf16.msra.mxu0 0
    %1522 = vmatprep.subr.bf16.mxu0 0
    %1523 = vmatpush1.bf16.msra.mxu0 %v1498
    %1524 = vmatprep.subr.bf16.mxu0 0
    %1525 = vmatpush1.bf16.msra.mxu0 %v1497
    %1526 = vmatprep.subr.bf16.mxu0 0
    %1527 = vmatpush2.bf16.msra.mxu0 0
    %1528 = vmatprep.subr.bf16.mxu0 0
    %1529 = vmatpush2.bf16.msra.mxu0 0
    %1530 = vmatprep.subr.bf16.mxu0 0
    %1531 = vmatpush2.bf16.msra.mxu0 0
    %1532 = vmatprep.subr.bf16.mxu0 0
    %1533 = vmatpush2.bf16.msra.mxu0 0
    %1534 = vmatprep.subr.bf16.mxu0 0
    %1535 = vmatpush2.bf16.msra.mxu0 0
    %1536 = vmatprep.subr.bf16.mxu0 0
    %1537 = vmatpush2.bf16.msra.mxu0 0
    %1538 = vmatprep.subr.bf16.mxu0 0
    %1539 = vmatpush2.bf16.msra.mxu0 0
    %1540 = vmatprep.subr.bf16.mxu0 0
    %1541 = vmatpush2.bf16.msra.mxu0 0
    %1542 = vmatprep.mubr.bf16.mxu0 0
    %1543 = vmatmul.mubr.bf16.gmra.mxu0 %v1505
    %v1544 = vpop.f32.mrf.mxu0
    %v1545 = vadd.f32 %v1503, %v1544
    %v1546 = vpop.f32.mrf.mxu0
    %v1547 = vpop.f32.mrf.mxu0
    %v1548 = vadd.f32 %v1503, %v1547
    %v1549 = vpop.f32.mrf.mxu0
    %1550 = vmatprep.mubr.bf16.mxu0 0
    %1551 = vmatmul.mubr.bf16.gmra.mxu0 %v1508
    %v1552 = vpop.f32.mrf.mxu0
    %v1553 = vadd.f32 %v1503, %v1552
    %v1554 = vpop.f32.mrf.mxu0
    %v1555 = vpop.f32.mrf.mxu0
    %v1556 = vadd.f32 %v1503, %v1555
    %v1557 = vpop.f32.mrf.mxu0
    %1558 = vdwg.mxu0
    %v1559 = vadd.f32 %v1031, %v1545
    %v1560 = vadd.f32 %v1032, %v1548
    %v1561 = vadd.f32 %v1033, %v1553
    %v1562 = vadd.f32 %v1034, %v1556
    %v1563 = vld [vmem:[#allocation9 + $0xc] sm:$0x1]
    %v1564 = vld [vmem:[#allocation9 + $0xd] sm:$0x1]
    %v1565 = vsel %vm145, %v1559, 0.0
    %1566 = vadd.xlane.f32.xlu0 %v1565
    %v1567 = vpop.xlane.xlu0 %1566
    %v1568 = vsel %vm145, %v1560, 0.0
    %1569 = vadd.xlane.f32.xlu0 %v1568
    %v1570 = vpop.xlane.xlu0 %1569
    %v1571 = vsel %vm145, %v1561, 0.0
    %1572 = vadd.xlane.f32.xlu0 %v1571
    %v1573 = vpop.xlane.xlu0 %1572
    %v1574 = vsel %vm145, %v1562, 0.0
    %1575 = vadd.xlane.f32.xlu0 %v1574
    %v1576 = vpop.xlane.xlu0 %1575
    %v1577 = vmul.f32 %v1567, %v158
    %v1578 = vmul.f32 %v1570, %v158
    %v1579 = vmul.f32 %v1573, %v158
    %v1580 = vmul.f32 %v1576, %v158
    %v1581 = vsub.f32 %v1559, %v1577
    %v1582 = vsub.f32 %v1560, %v1578
    %v1583 = vsub.f32 %v1561, %v1579
    %v1584 = vsub.f32 %v1562, %v1580
    %v1585 = vmul.f32 %v1581, %v1581
    %v1586 = vmul.f32 %v1582, %v1582
    %v1587 = vmul.f32 %v1583, %v1583
    %v1588 = vmul.f32 %v1584, %v1584
    %v1589 = vsel %vm145, %v1585, 0.0
    %1590 = vadd.xlane.f32.xlu0 %v1589
    %v1591 = vpop.xlane.xlu0 %1590
    %v1592 = vsel %vm145, %v1586, 0.0
    %1593 = vadd.xlane.f32.xlu0 %v1592
    %v1594 = vpop.xlane.xlu0 %1593
    %v1595 = vsel %vm145, %v1587, 0.0
    %1596 = vadd.xlane.f32.xlu0 %v1595
    %v1597 = vpop.xlane.xlu0 %1596
    %v1598 = vsel %vm145, %v1588, 0.0
    %1599 = vadd.xlane.f32.xlu0 %v1598
    %v1600 = vpop.xlane.xlu0 %1599
    %v1601 = vmul.f32 %v1591, %v158
    %v1602 = vmul.f32 %v1594, %v158
    %v1603 = vmul.f32 %v1597, %v158
    %v1604 = vmul.f32 %v1600, %v158
    %v1605 = vadd.f32 %v1601, 1e-05
    %v1606 = vadd.f32 %v1602, 1e-05
    %v1607 = vadd.f32 %v1603, 1e-05
    %v1608 = vadd.f32 %v1604, 1e-05
    %v1609 = vrsqrt.pop %v1605
    %v1610 = vrsqrt.pop %v1606
    %v1611 = vrsqrt.pop %v1607
    %v1612 = vrsqrt.pop %v1608
    %v1613 = vmul.f32 %v1581, %v1609
    %v1614 = vmul.f32 %v1582, %v1610
    %v1615 = vmul.f32 %v1583, %v1611
    %v1616 = vmul.f32 %v1584, %v1612
    %v1617 = vlaneseq
    %v1618 = vshrl.u32 %v1617, 7
    %v1619 = vsub.s32 0, %v1618
    %v1620 = vrot.slane %v1563, %v1619
    %v1621 = vmul.f32 %v1613, %v1620
    %v1622 = vmul.f32 %v1614, %v1620
    %v1623 = vmul.f32 %v1615, %v1620
    %v1624 = vmul.f32 %v1616, %v1620
    %v1625 = vlaneseq
    %v1626 = vshrl.u32 %v1625, 7
    %v1627 = vsub.s32 0, %v1626
    %v1628 = vrot.slane %v1564, %v1627
    %v1629 = vadd.f32 %v1621, %v1628
    %v1630 = vadd.f32 %v1622, %v1628
    %v1631 = vadd.f32 %v1623, %v1628
    %v1632 = vadd.f32 %v1624, %v1628
    %v1633 = vld [vmem:[#allocation7 + $0x110] sm:$0xff]
    %v1634 = vld [vmem:[#allocation7 + $0x118] sm:$0xff]
    %v1635 = vld [vmem:[#allocation7 + $0x120] sm:$0xff]
    %v1636 = vld [vmem:[#allocation7 + $0x128] sm:$0xff]
    %v1637 = vpack.c.bf16 %v1630, %v1629
    %v1638 = vpack.c.bf16 %v1632, %v1631
    %v1639 = vpack.c.bf16 %v1634, %v1633
    %v1640 = vpack.c.bf16 %v1636, %v1635
    %v1641 = vld [vmem:[#allocation9 + $0xe] sm:$0x1]
    %v1642 = vlaneseq
    %v1643 = vshrl.u32 %v1642, 7
    %v1644 = vsub.s32 0, %v1643
    %v1645 = vrot.slane %v1641, %v1644
    %v1647 = vsel %vm145, %v1637, 0
    %v1650 = vsel %vm145, %v1638, 0
    %1652 = vmatprep.subr.bf16.mxu0 0
    %1653 = vmatpush1.bf16.msra.mxu0 0
    %1654 = vmatprep.subr.bf16.mxu0 0
    %1655 = vmatpush1.bf16.msra.mxu0 0
    %1656 = vmatprep.subr.bf16.mxu0 0
    %1657 = vmatpush1.bf16.msra.mxu0 0
    %1658 = vmatprep.subr.bf16.mxu0 0
    %1659 = vmatpush1.bf16.msra.mxu0 0
    %1660 = vmatprep.subr.bf16.mxu0 0
    %1661 = vmatpush1.bf16.msra.mxu0 0
    %1662 = vmatprep.subr.bf16.mxu0 0
    %1663 = vmatpush1.bf16.msra.mxu0 0
    %1664 = vmatprep.subr.bf16.mxu0 0
    %1665 = vmatpush1.bf16.msra.mxu0 %v1640
    %1666 = vmatprep.subr.bf16.mxu0 0
    %1667 = vmatpush1.bf16.msra.mxu0 %v1639
    %1668 = vmatprep.subr.bf16.mxu0 0
    %1669 = vmatpush2.bf16.msra.mxu0 0
    %1670 = vmatprep.subr.bf16.mxu0 0
    %1671 = vmatpush2.bf16.msra.mxu0 0
    %1672 = vmatprep.subr.bf16.mxu0 0
    %1673 = vmatpush2.bf16.msra.mxu0 0
    %1674 = vmatprep.subr.bf16.mxu0 0
    %1675 = vmatpush2.bf16.msra.mxu0 0
    %1676 = vmatprep.subr.bf16.mxu0 0
    %1677 = vmatpush2.bf16.msra.mxu0 0
    %1678 = vmatprep.subr.bf16.mxu0 0
    %1679 = vmatpush2.bf16.msra.mxu0 0
    %1680 = vmatprep.subr.bf16.mxu0 0
    %1681 = vmatpush2.bf16.msra.mxu0 0
    %1682 = vmatprep.subr.bf16.mxu0 0
    %1683 = vmatpush2.bf16.msra.mxu0 0
    %1684 = vmatprep.mubr.bf16.mxu0 0
    %1685 = vmatmul.mubr.bf16.gmra.mxu0 %v1647
    %v1686 = vpop.f32.mrf.mxu0
    %v1687 = vadd.f32 %v1645, %v1686
    %v1688 = vpop.f32.mrf.mxu0
    %v1689 = vpop.f32.mrf.mxu0
    %v1690 = vadd.f32 %v1645, %v1689
    %v1691 = vpop.f32.mrf.mxu0
    %1692 = vmatprep.mubr.bf16.mxu0 0
    %1693 = vmatmul.mubr.bf16.gmra.mxu0 %v1650
    %v1694 = vpop.f32.mrf.mxu0
    %v1695 = vadd.f32 %v1645, %v1694
    %v1696 = vpop.f32.mrf.mxu0
    %v1697 = vpop.f32.mrf.mxu0
    %v1698 = vadd.f32 %v1645, %v1697
    %v1699 = vpop.f32.mrf.mxu0
    %1700 = vdwg.mxu0
    %v1701 = vmax.f32 %v1687, 0.0
    %v1702 = vmax.f32 %v1690, 0.0
    %v1703 = vmax.f32 %v1695, 0.0
    %v1704 = vmax.f32 %v1698, 0.0
    %v1705 = vld [vmem:[#allocation7 + $0x130] sm:$0xff]
    %v1706 = vld [vmem:[#allocation7 + $0x138] sm:$0xff]
    %v1707 = vld [vmem:[#allocation7 + $0x140] sm:$0xff]
    %v1708 = vld [vmem:[#allocation7 + $0x148] sm:$0xff]
    %v1709 = vld [vmem:[#allocation7 + $0x150] sm:$0xff]
    %v1710 = vld [vmem:[#allocation7 + $0x158] sm:$0xff]
    %v1711 = vld [vmem:[#allocation7 + $0x160] sm:$0xff]
    %v1712 = vld [vmem:[#allocation7 + $0x168] sm:$0xff]
    %v1713 = vpack.c.bf16 %v1702, %v1701
    %v1714 = vpack.c.bf16 %v1704, %v1703
    %v1715 = vpack.c.bf16 %v1706, %v1705
    %v1716 = vpack.c.bf16 %v1708, %v1707
    %v1717 = vpack.c.bf16 %v1710, %v1709
    %v1718 = vpack.c.bf16 %v1712, %v1711
    %v1719 = vld [vmem:[#allocation9 + $0xf] sm:$0x1]
    %v1720 = vlaneseq
    %v1721 = vshrl.u32 %v1720, 7
    %v1722 = vsub.s32 0, %v1721
    %v1723 = vrot.slane %v1719, %v1722
    %v1725 = vsel %vm905, %v1713, 0
    %v1728 = vsel %vm905, %v1714, 0
    %1730 = vmatprep.subr.bf16.mxu0 0
    %1731 = vmatpush1.bf16.msra.mxu0 0
    %1732 = vmatprep.subr.bf16.mxu0 0
    %1733 = vmatpush1.bf16.msra.mxu0 0
    %1734 = vmatprep.subr.bf16.mxu0 0
    %1735 = vmatpush1.bf16.msra.mxu0 0
    %1736 = vmatprep.subr.bf16.mxu0 0
    %1737 = vmatpush1.bf16.msra.mxu0 0
    %1738 = vmatprep.subr.bf16.mxu0 0
    %1739 = vmatpush1.bf16.msra.mxu0 %v1718
    %1740 = vmatprep.subr.bf16.mxu0 0
    %1741 = vmatpush1.bf16.msra.mxu0 %v1717
    %1742 = vmatprep.subr.bf16.mxu0 0
    %1743 = vmatpush1.bf16.msra.mxu0 %v1716
    %1744 = vmatprep.subr.bf16.mxu0 0
    %1745 = vmatpush1.bf16.msra.mxu0 %v1715
    %1746 = vmatprep.subr.bf16.mxu0 0
    %1747 = vmatpush2.bf16.msra.mxu0 0
    %1748 = vmatprep.subr.bf16.mxu0 0
    %1749 = vmatpush2.bf16.msra.mxu0 0
    %1750 = vmatprep.subr.bf16.mxu0 0
    %1751 = vmatpush2.bf16.msra.mxu0 0
    %1752 = vmatprep.subr.bf16.mxu0 0
    %1753 = vmatpush2.bf16.msra.mxu0 0
    %1754 = vmatprep.subr.bf16.mxu0 0
    %1755 = vmatpush2.bf16.msra.mxu0 0
    %1756 = vmatprep.subr.bf16.mxu0 0
    %1757 = vmatpush2.bf16.msra.mxu0 0
    %1758 = vmatprep.subr.bf16.mxu0 0
    %1759 = vmatpush2.bf16.msra.mxu0 0
    %1760 = vmatprep.subr.bf16.mxu0 0
    %1761 = vmatpush2.bf16.msra.mxu0 0
    %1762 = vmatprep.mubr.bf16.mxu0 0
    %1763 = vmatmul.mubr.bf16.gmra.mxu0 %v1725
    %v1764 = vpop.f32.mrf.mxu0
    %v1765 = vadd.f32 %v1723, %v1764
    %v1766 = vpop.f32.mrf.mxu0
    %v1767 = vpop.f32.mrf.mxu0
    %v1768 = vadd.f32 %v1723, %v1767
    %v1769 = vpop.f32.mrf.mxu0
    %1770 = vmatprep.mubr.bf16.mxu0 0
    %1771 = vmatmul.mubr.bf16.gmra.mxu0 %v1728
    %v1772 = vpop.f32.mrf.mxu0
    %v1773 = vadd.f32 %v1723, %v1772
    %v1774 = vpop.f32.mrf.mxu0
    %v1775 = vpop.f32.mrf.mxu0
    %v1776 = vadd.f32 %v1723, %v1775
    %v1777 = vpop.f32.mrf.mxu0
    %1778 = vdwg.mxu0
    %v1779 = vadd.f32 %v1629, %v1765
    %v1780 = vadd.f32 %v1630, %v1768
    %v1781 = vadd.f32 %v1631, %v1773
    %v1782 = vadd.f32 %v1632, %v1776
    %v1783 = vld [vmem:[#allocation9 + $0x10] sm:$0x1]
    %v1784 = vld [vmem:[#allocation9 + $0x11] sm:$0x1]
    %v1785 = vsel %vm145, %v1779, 0.0
    %1786 = vadd.xlane.f32.xlu0 %v1785
    %v1787 = vpop.xlane.xlu0 %1786
    %v1788 = vsel %vm145, %v1780, 0.0
    %1789 = vadd.xlane.f32.xlu0 %v1788
    %v1790 = vpop.xlane.xlu0 %1789
    %v1791 = vsel %vm145, %v1781, 0.0
    %1792 = vadd.xlane.f32.xlu0 %v1791
    %v1793 = vpop.xlane.xlu0 %1792
    %v1794 = vsel %vm145, %v1782, 0.0
    %1795 = vadd.xlane.f32.xlu0 %v1794
    %v1796 = vpop.xlane.xlu0 %1795
    %v1797 = vmul.f32 %v1787, %v158
    %v1798 = vmul.f32 %v1790, %v158
    %v1799 = vmul.f32 %v1793, %v158
    %v1800 = vmul.f32 %v1796, %v158
    %v1801 = vsub.f32 %v1779, %v1797
    %v1802 = vsub.f32 %v1780, %v1798
    %v1803 = vsub.f32 %v1781, %v1799
    %v1804 = vsub.f32 %v1782, %v1800
    %v1805 = vmul.f32 %v1801, %v1801
    %v1806 = vmul.f32 %v1802, %v1802
    %v1807 = vmul.f32 %v1803, %v1803
    %v1808 = vmul.f32 %v1804, %v1804
    %v1809 = vsel %vm145, %v1805, 0.0
    %1810 = vadd.xlane.f32.xlu0 %v1809
    %v1811 = vpop.xlane.xlu0 %1810
    %v1812 = vsel %vm145, %v1806, 0.0
    %1813 = vadd.xlane.f32.xlu0 %v1812
    %v1814 = vpop.xlane.xlu0 %1813
    %v1815 = vsel %vm145, %v1807, 0.0
    %1816 = vadd.xlane.f32.xlu0 %v1815
    %v1817 = vpop.xlane.xlu0 %1816
    %v1818 = vsel %vm145, %v1808, 0.0
    %1819 = vadd.xlane.f32.xlu0 %v1818
    %v1820 = vpop.xlane.xlu0 %1819
    %v1821 = vmul.f32 %v1811, %v158
    %v1822 = vmul.f32 %v1814, %v158
    %v1823 = vmul.f32 %v1817, %v158
    %v1824 = vmul.f32 %v1820, %v158
    %v1825 = vadd.f32 %v1821, 1e-05
    %v1826 = vadd.f32 %v1822, 1e-05
    %v1827 = vadd.f32 %v1823, 1e-05
    %v1828 = vadd.f32 %v1824, 1e-05
    %v1829 = vrsqrt.pop %v1825
    %v1830 = vrsqrt.pop %v1826
    %v1831 = vrsqrt.pop %v1827
    %v1832 = vrsqrt.pop %v1828
    %v1833 = vmul.f32 %v1801, %v1829
    %v1834 = vmul.f32 %v1802, %v1830
    %v1835 = vmul.f32 %v1803, %v1831
    %v1836 = vmul.f32 %v1804, %v1832
    %v1837 = vlaneseq
    %v1838 = vshrl.u32 %v1837, 7
    %v1839 = vsub.s32 0, %v1838
    %v1840 = vrot.slane %v1783, %v1839
    %v1841 = vmul.f32 %v1833, %v1840
    %v1842 = vmul.f32 %v1834, %v1840
    %v1843 = vmul.f32 %v1835, %v1840
    %v1844 = vmul.f32 %v1836, %v1840
    %v1845 = vlaneseq
    %v1846 = vshrl.u32 %v1845, 7
    %v1847 = vsub.s32 0, %v1846
    %v1848 = vrot.slane %v1784, %v1847
    %v1849 = vadd.f32 %v1841, %v1848
    %v1850 = vadd.f32 %v1842, %v1848
    %v1851 = vadd.f32 %v1843, %v1848
    %v1852 = vadd.f32 %v1844, %v1848
    %v1853 = vlaneseq
    %v1854 = vand.u32 %v1853, 127
    %v1855 = vlaneseq
    %v1856 = vshrl.u32 %v1855, 7
    %v1857 = vadd.s32 %v1856, 8
    %s1858 = sld [smem:[#allocation3]]
    %s1859 = sld [smem:[#allocation3 + $0x1]]
    %vm1860 = vcmp.eq.s32.totalorder %v1856, 0
    %vm1861 = vcmp.eq.s32.totalorder %v1857, 0
    %v1862 = vstv %s1859
    %vm1863 = vcmp.eq.s32.totalorder %v1854, %v1862
    %vm1864 = vmand %vm1860, %vm1863
    %vm1865 = vmand %vm1861, %vm1863
    %vm1866 = vcmp.eq.s32.totalorder %v1856, 8
    %vm1867 = vcmp.eq.s32.totalorder %v1857, 8
    %s1868 = sadd.s32 %s1859, 1
    %v1869 = vstv %s1868
    %vm1870 = vcmp.eq.s32.totalorder %v1854, %v1869
    %vm1871 = vmand %vm1866, %vm1870
    %vm1872 = vmand %vm1867, %vm1870
    %vm1873 = vmor %vm1864, %vm1871
    %vm1874 = vmor %vm1865, %vm1872
    %v1875 = vstv %s1858
    %vm1876 = vcmp.eq.s32.totalorder %v1854, %v1875
    %vm1877 = vmand %vm1860, %vm1876
    %vm1878 = vmand %vm1861, %vm1876
    %s1879 = sadd.s32 %s1858, 1
    %v1880 = vstv %s1879
    %vm1881 = vcmp.eq.s32.totalorder %v1854, %v1880
    %vm1882 = vmand %vm1866, %vm1881
    %vm1883 = vmand %vm1867, %vm1881
    %vm1884 = vmor %vm1877, %vm1882
    %vm1885 = vmor %vm1878, %vm1883
    %v1886 = vsel %vm1873, 1, 0
    %v1887 = vsel %vm1874, 1, 0
    %v1888 = vcvt.s32.f32 %v1886
    %v1889 = vcvt.s32.f32 %v1887
    %v1890 = vadd.f32 %v1888, 0.0
    %v1891 = vadd.f32 %v1889, 0.0
    %v1892 = vsel %vm1884, 1, 0
    %v1893 = vsel %vm1885, 1, 0
    %v1894 = vcvt.s32.f32 %v1892
    %v1895 = vcvt.s32.f32 %v1893
    %v1896 = vsub.f32 %v1890, %v1894
    %v1897 = vsub.f32 %v1891, %v1895
    %s1898 = sld [smem:[#allocation3 + $0x80]]
    %s1899 = sld [smem:[#allocation3 + $0x81]]
    %vm1900 = vcmp.eq.s32.totalorder %v1856, 1
    %vm1901 = vcmp.eq.s32.totalorder %v1857, 1
    %v1902 = vstv %s1899
    %vm1903 = vcmp.eq.s32.totalorder %v1854, %v1902
    %vm1904 = vmand %vm1900, %vm1903
    %vm1905 = vmand %vm1901, %vm1903
    %vm1906 = vcmp.eq.s32.totalorder %v1856, 9
    %vm1907 = vcmp.eq.s32.totalorder %v1857, 9
    %s1908 = sadd.s32 %s1899, 1
    %v1909 = vstv %s1908
    %vm1910 = vcmp.eq.s32.totalorder %v1854, %v1909
    %vm1911 = vmand %vm1906, %vm1910
    %vm1912 = vmand %vm1907, %vm1910
    %vm1913 = vmor %vm1904, %vm1911
    %vm1914 = vmor %vm1905, %vm1912
    %v1915 = vstv %s1898
    %vm1916 = vcmp.eq.s32.totalorder %v1854, %v1915
    %vm1917 = vmand %vm1900, %vm1916
    %vm1918 = vmand %vm1901, %vm1916
    %s1919 = sadd.s32 %s1898, 1
    %v1920 = vstv %s1919
    %vm1921 = vcmp.eq.s32.totalorder %v1854, %v1920
    %vm1922 = vmand %vm1906, %vm1921
    %vm1923 = vmand %vm1907, %vm1921
    %vm1924 = vmor %vm1917, %vm1922
    %vm1925 = vmor %vm1918, %vm1923
    %v1926 = vsel %vm1913, 1, 0
    %v1927 = vsel %vm1914, 1, 0
    %v1928 = vcvt.s32.f32 %v1926
    %v1929 = vcvt.s32.f32 %v1927
    %v1930 = vadd.f32 %v1896, %v1928
    %v1931 = vadd.f32 %v1897, %v1929
    %v1932 = vsel %vm1924, 1, 0
    %v1933 = vsel %vm1925, 1, 0
    %v1934 = vcvt.s32.f32 %v1932
    %v1935 = vcvt.s32.f32 %v1933
    %v1936 = vsub.f32 %v1930, %v1934
    %v1937 = vsub.f32 %v1931, %v1935
    %s1938 = sld [smem:[#allocation3 + $0x100]]
    %s1939 = sld [smem:[#allocation3 + $0x101]]
    %vm1940 = vcmp.eq.s32.totalorder %v1856, 2
    %vm1941 = vcmp.eq.s32.totalorder %v1857, 2
    %v1942 = vstv %s1939
    %vm1943 = vcmp.eq.s32.totalorder %v1854, %v1942
    %vm1944 = vmand %vm1940, %vm1943
    %vm1945 = vmand %vm1941, %vm1943
    %vm1946 = vcmp.eq.s32.totalorder %v1856, 10
    %vm1947 = vcmp.eq.s32.totalorder %v1857, 10
    %s1948 = sadd.s32 %s1939, 1
    %v1949 = vstv %s1948
    %vm1950 = vcmp.eq.s32.totalorder %v1854, %v1949
    %vm1951 = vmand %vm1946, %vm1950
    %vm1952 = vmand %vm1947, %vm1950
    %vm1953 = vmor %vm1944, %vm1951
    %vm1954 = vmor %vm1945, %vm1952
    %v1955 = vstv %s1938
    %vm1956 = vcmp.eq.s32.totalorder %v1854, %v1955
    %vm1957 = vmand %vm1940, %vm1956
    %vm1958 = vmand %vm1941, %vm1956
    %s1959 = sadd.s32 %s1938, 1
    %v1960 = vstv %s1959
    %vm1961 = vcmp.eq.s32.totalorder %v1854, %v1960
    %vm1962 = vmand %vm1946, %vm1961
    %vm1963 = vmand %vm1947, %vm1961
    %vm1964 = vmor %vm1957, %vm1962
    %vm1965 = vmor %vm1958, %vm1963
    %v1966 = vsel %vm1953, 1, 0
    %v1967 = vsel %vm1954, 1, 0
    %v1968 = vcvt.s32.f32 %v1966
    %v1969 = vcvt.s32.f32 %v1967
    %v1970 = vadd.f32 %v1936, %v1968
    %v1971 = vadd.f32 %v1937, %v1969
    %v1972 = vsel %vm1964, 1, 0
    %v1973 = vsel %vm1965, 1, 0
    %v1974 = vcvt.s32.f32 %v1972
    %v1975 = vcvt.s32.f32 %v1973
    %v1976 = vsub.f32 %v1970, %v1974
    %v1977 = vsub.f32 %v1971, %v1975
    %s1978 = sld [smem:[#allocation3 + $0x180]]
    %s1979 = sld [smem:[#allocation3 + $0x181]]
    %vm1980 = vcmp.eq.s32.totalorder %v1856, 3
    %vm1981 = vcmp.eq.s32.totalorder %v1857, 3
    %v1982 = vstv %s1979
    %vm1983 = vcmp.eq.s32.totalorder %v1854, %v1982
    %vm1984 = vmand %vm1980, %vm1983
    %vm1985 = vmand %vm1981, %vm1983
    %vm1986 = vcmp.eq.s32.totalorder %v1856, 11
    %vm1987 = vcmp.eq.s32.totalorder %v1857, 11
    %s1988 = sadd.s32 %s1979, 1
    %v1989 = vstv %s1988
    %vm1990 = vcmp.eq.s32.totalorder %v1854, %v1989
    %vm1991 = vmand %vm1986, %vm1990
    %vm1992 = vmand %vm1987, %vm1990
    %vm1993 = vmor %vm1984, %vm1991
    %vm1994 = vmor %vm1985, %vm1992
    %v1995 = vstv %s1978
    %vm1996 = vcmp.eq.s32.totalorder %v1854, %v1995
    %vm1997 = vmand %vm1980, %vm1996
    %vm1998 = vmand %vm1981, %vm1996
    %s1999 = sadd.s32 %s1978, 1
    %v2000 = vstv %s1999
    %vm2001 = vcmp.eq.s32.totalorder %v1854, %v2000
    %vm2002 = vmand %vm1986, %vm2001
    %vm2003 = vmand %vm1987, %vm2001
    %vm2004 = vmor %vm1997, %vm2002
    %vm2005 = vmor %vm1998, %vm2003
    %v2006 = vsel %vm1993, 1, 0
    %v2007 = vsel %vm1994, 1, 0
    %v2008 = vcvt.s32.f32 %v2006
    %v2009 = vcvt.s32.f32 %v2007
    %v2010 = vadd.f32 %v1976, %v2008
    %v2011 = vadd.f32 %v1977, %v2009
    %v2012 = vsel %vm2004, 1, 0
    %v2013 = vsel %vm2005, 1, 0
    %v2014 = vcvt.s32.f32 %v2012
    %v2015 = vcvt.s32.f32 %v2013
    %v2016 = vsub.f32 %v2010, %v2014
    %v2017 = vsub.f32 %v2011, %v2015
    %s2018 = sld [smem:[#allocation3 + $0x200]]
    %s2019 = sld [smem:[#allocation3 + $0x201]]
    %vm2020 = vcmp.eq.s32.totalorder %v1856, 4
    %vm2021 = vcmp.eq.s32.totalorder %v1857, 4
    %v2022 = vstv %s2019
    %vm2023 = vcmp.eq.s32.totalorder %v1854, %v2022
    %vm2024 = vmand %vm2020, %vm2023
    %vm2025 = vmand %vm2021, %vm2023
    %vm2026 = vcmp.eq.s32.totalorder %v1856, 12
    %vm2027 = vcmp.eq.s32.totalorder %v1857, 12
    %s2028 = sadd.s32 %s2019, 1
    %v2029 = vstv %s2028
    %vm2030 = vcmp.eq.s32.totalorder %v1854, %v2029
    %vm2031 = vmand %vm2026, %vm2030
    %vm2032 = vmand %vm2027, %vm2030
    %vm2033 = vmor %vm2024, %vm2031
    %vm2034 = vmor %vm2025, %vm2032
    %v2035 = vstv %s2018
    %vm2036 = vcmp.eq.s32.totalorder %v1854, %v2035
    %vm2037 = vmand %vm2020, %vm2036
    %vm2038 = vmand %vm2021, %vm2036
    %s2039 = sadd.s32 %s2018, 1
    %v2040 = vstv %s2039
    %vm2041 = vcmp.eq.s32.totalorder %v1854, %v2040
    %vm2042 = vmand %vm2026, %vm2041
    %vm2043 = vmand %vm2027, %vm2041
    %vm2044 = vmor %vm2037, %vm2042
    %vm2045 = vmor %vm2038, %vm2043
    %v2046 = vsel %vm2033, 1, 0
    %v2047 = vsel %vm2034, 1, 0
    %v2048 = vcvt.s32.f32 %v2046
    %v2049 = vcvt.s32.f32 %v2047
    %v2050 = vadd.f32 %v2016, %v2048
    %v2051 = vadd.f32 %v2017, %v2049
    %v2052 = vsel %vm2044, 1, 0
    %v2053 = vsel %vm2045, 1, 0
    %v2054 = vcvt.s32.f32 %v2052
    %v2055 = vcvt.s32.f32 %v2053
    %v2056 = vsub.f32 %v2050, %v2054
    %v2057 = vsub.f32 %v2051, %v2055
    %s2058 = sld [smem:[#allocation3 + $0x280]]
    %vm2059 = vcmp.eq.s32.totalorder %v1856, 5
    %vm2060 = vcmp.eq.s32.totalorder %v1857, 5
    %v2061 = vstv %s2058
    %vm2062 = vcmp.eq.s32.totalorder %v1854, %v2061
    %vm2063 = vmand %vm2059, %vm2062
    %vm2064 = vmand %vm2060, %vm2062
    %vm2065 = vcmp.eq.s32.totalorder %v1856, 13
    %vm2066 = vcmp.eq.s32.totalorder %v1857, 13
    %s2067 = sadd.s32 %s2058, 1
    %v2068 = vstv %s2067
    %vm2069 = vcmp.eq.s32.totalorder %v1854, %v2068
    %vm2070 = vmand %vm2065, %vm2069
    %vm2071 = vmand %vm2066, %vm2069
    %vm2072 = vmor %vm2063, %vm2070
    %vm2073 = vmor %vm2064, %vm2071
    %v2074 = vsel %vm2072, 1, 0
    %v2075 = vsel %vm2073, 1, 0
    %v2076 = vcvt.s32.f32 %v2074
    %v2077 = vcvt.s32.f32 %v2075
    %v2078 = vadd.f32 %v2056, %v2076
    %v2079 = vadd.f32 %v2057, %v2077
    %s2080 = sld [smem:[#allocation3 + $0x300]]
    %vm2081 = vcmp.eq.s32.totalorder %v1856, 6
    %vm2082 = vcmp.eq.s32.totalorder %v1857, 6
    %v2083 = vstv %s2080
    %vm2084 = vcmp.eq.s32.totalorder %v1854, %v2083
    %vm2085 = vmand %vm2081, %vm2084
    %vm2086 = vmand %vm2082, %vm2084
    %vm2087 = vcmp.eq.s32.totalorder %v1856, 14
    %vm2088 = vcmp.eq.s32.totalorder %v1857, 14
    %s2089 = sadd.s32 %s2080, 1
    %v2090 = vstv %s2089
    %vm2091 = vcmp.eq.s32.totalorder %v1854, %v2090
    %vm2092 = vmand %vm2087, %vm2091
    %vm2093 = vmand %vm2088, %vm2091
    %vm2094 = vmor %vm2085, %vm2092
    %vm2095 = vmor %vm2086, %vm2093
    %v2096 = vsel %vm2094, 1, 0
    %v2097 = vsel %vm2095, 1, 0
    %v2098 = vcvt.s32.f32 %v2096
    %v2099 = vcvt.s32.f32 %v2097
    %v2100 = vadd.f32 %v2078, %v2098
    %v2101 = vadd.f32 %v2079, %v2099
    %v2102 = vpack.c.bf16 %v2101, %v2100
    %v2103 = vpack.c.bf16 %v1850, %v1849
    %v2104 = vpack.c.bf16 %v1852, %v1851
    %v2106 = vsel %vm145, %v2102, 0
    %2108 = vmatprep.subr.bf16.mxu0 0
    %2109 = vmatpush1.bf16.msra.mxu0 0
    %2110 = vmatprep.subr.bf16.mxu0 0
    %2111 = vmatpush1.bf16.msra.mxu0 0
    %2112 = vmatprep.subr.bf16.mxu0 0
    %2113 = vmatpush1.bf16.msra.mxu0 0
    %2114 = vmatprep.subr.bf16.mxu0 0
    %2115 = vmatpush1.bf16.msra.mxu0 0
    %2116 = vmatprep.subr.bf16.mxu0 0
    %2117 = vmatpush1.bf16.msra.mxu0 0
    %2118 = vmatprep.subr.bf16.mxu0 0
    %2119 = vmatpush1.bf16.msra.mxu0 0
    %2120 = vmatprep.subr.bf16.mxu0 0
    %2121 = vmatpush1.bf16.msra.mxu0 %v2104
    %2122 = vmatprep.subr.bf16.mxu0 0
    %2123 = vmatpush1.bf16.msra.mxu0 %v2103
    %2124 = vmatprep.subr.bf16.mxu0 0
    %2125 = vmatpush2.bf16.msra.mxu0 0
    %2126 = vmatprep.subr.bf16.mxu0 0
    %2127 = vmatpush2.bf16.msra.mxu0 0
    %2128 = vmatprep.subr.bf16.mxu0 0
    %2129 = vmatpush2.bf16.msra.mxu0 0
    %2130 = vmatprep.subr.bf16.mxu0 0
    %2131 = vmatpush2.bf16.msra.mxu0 0
    %2132 = vmatprep.subr.bf16.mxu0 0
    %2133 = vmatpush2.bf16.msra.mxu0 0
    %2134 = vmatprep.subr.bf16.mxu0 0
    %2135 = vmatpush2.bf16.msra.mxu0 0
    %2136 = vmatprep.subr.bf16.mxu0 0
    %2137 = vmatpush2.bf16.msra.mxu0 0
    %2138 = vmatprep.subr.bf16.mxu0 0
    %2139 = vmatpush2.bf16.msra.mxu0 0
    %2140 = vmatprep.mubr.bf16.mxu0 0
    %2141 = vmatmul.mubr.bf16.gmra.mxu0 %v2106
    %v2142 = vpop.f32.mrf.mxu0
    %v2143 = vadd.f32 0.0, %v2142
    %v2144 = vpop.f32.mrf.mxu0
    %v2145 = vpop.f32.mrf.mxu0
    %v2146 = vadd.f32 0.0, %v2145
    %v2147 = vpop.f32.mrf.mxu0
    %2148 = vdwg.mxu0
    %v2149 = vld [vmem:[#allocation7 + $0x170] sm:$0xff]
    %v2150 = vld [vmem:[#allocation7 + $0x178] sm:$0xff]
    %v2151 = vld [vmem:[#allocation7 + $0x180] sm:$0xff]
    %v2152 = vld [vmem:[#allocation7 + $0x188] sm:$0xff]
    %v2153 = vpack.c.bf16 %v2143, %v2143
    %v2154 = vpack.c.bf16 %v2150, %v2149
    %v2155 = vpack.c.bf16 %v2152, %v2151
    %v2156 = vld [vmem:[#allocation7 + $0x190] sm:$0xff]
    %v2157 = vld [vmem:[#allocation7 + $0x198] sm:$0xff]
    %v2158 = vld [vmem:[#allocation7 + $0x1a0] sm:$0xff]
    %v2159 = vld [vmem:[#allocation7 + $0x1a8] sm:$0xff]
    %v2160 = vpack.c.bf16 %v2146, %v2146
    %v2161 = vpack.c.bf16 %v2157, %v2156
    %v2162 = vpack.c.bf16 %v2159, %v2158
    %v2164 = vsel %vm145, %v2160, 0
    %2166 = vmatprep.subr.bf16.mxu0 0
    %2167 = vmatpush1.bf16.msra.mxu0 0
    %2168 = vmatprep.subr.bf16.mxu0 0
    %2169 = vmatpush1.bf16.msra.mxu0 0
    %2170 = vmatprep.subr.bf16.mxu0 0
    %2171 = vmatpush1.bf16.msra.mxu0 0
    %2172 = vmatprep.subr.bf16.mxu0 0
    %2173 = vmatpush1.bf16.msra.mxu0 0
    %2174 = vmatprep.subr.bf16.mxu0 0
    %2175 = vmatpush1.bf16.msra.mxu0 0
    %2176 = vmatprep.subr.bf16.mxu0 0
    %2177 = vmatpush1.bf16.msra.mxu0 0
    %2178 = vmatprep.subr.bf16.mxu0 0
    %2179 = vmatpush1.bf16.msra.mxu0 %v2162
    %2180 = vmatprep.subr.bf16.mxu0 0
    %2181 = vmatpush1.bf16.msra.mxu0 %v2161
    %2182 = vmatprep.subr.bf16.mxu0 0
    %2183 = vmatpush2.bf16.msra.mxu0 0
    %2184 = vmatprep.subr.bf16.mxu0 0
    %2185 = vmatpush2.bf16.msra.mxu0 0
    %2186 = vmatprep.subr.bf16.mxu0 0
    %2187 = vmatpush2.bf16.msra.mxu0 0
    %2188 = vmatprep.subr.bf16.mxu0 0
    %2189 = vmatpush2.bf16.msra.mxu0 0
    %2190 = vmatprep.subr.bf16.mxu0 0
    %2191 = vmatpush2.bf16.msra.mxu0 0
    %2192 = vmatprep.subr.bf16.mxu0 0
    %2193 = vmatpush2.bf16.msra.mxu0 0
    %2194 = vmatprep.subr.bf16.mxu0 0
    %2195 = vmatpush2.bf16.msra.mxu0 0
    %2196 = vmatprep.subr.bf16.mxu0 0
    %2197 = vmatpush2.bf16.msra.mxu0 0
    %2198 = vmatprep.mubr.bf16.mxu0 0
    %2199 = vmatmul.mubr.bf16.gmra.mxu0 %v2164
    %v2200 = vpop.f32.mrf.mxu0
    %v2201 = vadd.f32 0.0, %v2200
    %v2202 = vpop.f32.mrf.mxu0
    %v2203 = vpop.f32.mrf.mxu0
    %v2204 = vpop.f32.mrf.mxu0
    %2205 = vdwg.mxu0
    %v2207 = vsel %vm145, %v2153, 0
    %2209 = vmatprep.subr.bf16.mxu0 0
    %2210 = vmatpush1.bf16.msra.mxu0 0
    %2211 = vmatprep.subr.bf16.mxu0 0
    %2212 = vmatpush1.bf16.msra.mxu0 0
    %2213 = vmatprep.subr.bf16.mxu0 0
    %2214 = vmatpush1.bf16.msra.mxu0 0
    %2215 = vmatprep.subr.bf16.mxu0 0
    %2216 = vmatpush1.bf16.msra.mxu0 0
    %2217 = vmatprep.subr.bf16.mxu0 0
    %2218 = vmatpush1.bf16.msra.mxu0 0
    %2219 = vmatprep.subr.bf16.mxu0 0
    %2220 = vmatpush1.bf16.msra.mxu0 0
    %2221 = vmatprep.subr.bf16.mxu0 0
    %2222 = vmatpush1.bf16.msra.mxu0 %v2155
    %2223 = vmatprep.subr.bf16.mxu0 0
    %2224 = vmatpush1.bf16.msra.mxu0 %v2154
    %2225 = vmatprep.subr.bf16.mxu0 0
    %2226 = vmatpush2.bf16.msra.mxu0 0
    %2227 = vmatprep.subr.bf16.mxu0 0
    %2228 = vmatpush2.bf16.msra.mxu0 0
    %2229 = vmatprep.subr.bf16.mxu0 0
    %2230 = vmatpush2.bf16.msra.mxu0 0
    %2231 = vmatprep.subr.bf16.mxu0 0
    %2232 = vmatpush2.bf16.msra.mxu0 0
    %2233 = vmatprep.subr.bf16.mxu0 0
    %2234 = vmatpush2.bf16.msra.mxu0 0
    %2235 = vmatprep.subr.bf16.mxu0 0
    %2236 = vmatpush2.bf16.msra.mxu0 0
    %2237 = vmatprep.subr.bf16.mxu0 0
    %2238 = vmatpush2.bf16.msra.mxu0 0
    %2239 = vmatprep.subr.bf16.mxu0 0
    %2240 = vmatpush2.bf16.msra.mxu0 0
    %2241 = vmatprep.mubr.bf16.mxu0 0
    %2242 = vmatmul.mubr.bf16.gmra.mxu0 %v2207
    %v2243 = vpop.f32.mrf.mxu0
    %v2244 = vadd.f32 %v2201, %v2243
    %v2245 = vpop.f32.mrf.mxu0
    %v2246 = vpop.f32.mrf.mxu0
    %v2247 = vpop.f32.mrf.mxu0
    %2248 = vdwg.mxu0
    %v2249 = vld [vmem:[#allocation9 + $0x12] sm:$0x1]
    %v2250 = vlaneseq
    %v2251 = vshrl.u32 %v2250, 7
    %v2252 = vsub.s32 0, %v2251
    %v2253 = vrot.slane %v2249, %v2252
    %v2254 = vadd.f32 %v2244, %v2253
    %v2255 = vld [vmem:[#allocation9 + $0x13] sm:$0x1]
    %v2256 = vld [vmem:[#allocation9 + $0x14] sm:$0x1]
    %vm2257 = vcmask 189440
    %v2258 = vsel %vm2257, %v2254, 0.0
    %2259 = vadd.xlane.f32.xlu0 %v2258
    %v2260 = vpop.xlane.xlu0 %2259
    %v2261 = vrcp.pop 24.0
    %v2262 = vmul.f32 %v2260, %v2261
    %v2263 = vsub.f32 %v2254, %v2262
    %v2264 = vmul.f32 %v2263, %v2263
    %v2265 = vsel %vm2257, %v2264, 0.0
    %2266 = vadd.xlane.f32.xlu0 %v2265
    %v2267 = vpop.xlane.xlu0 %2266
    %v2268 = vmul.f32 %v2267, %v2261
    %v2269 = vadd.f32 %v2268, 1e-05
    %v2270 = vrsqrt.pop %v2269
    %v2271 = vmul.f32 %v2263, %v2270
    %v2272 = vlaneseq
    %v2273 = vshrl.u32 %v2272, 7
    %v2274 = vsub.s32 0, %v2273
    %v2275 = vrot.slane %v2255, %v2274
    %v2276 = vmul.f32 %v2271, %v2275
    %v2277 = vlaneseq
    %v2278 = vshrl.u32 %v2277, 7
    %v2279 = vsub.s32 0, %v2278
    %v2280 = vrot.slane %v2256, %v2279
    %v2281 = vadd.f32 %v2276, %v2280
    %v2282 = vmax.f32 %v2281, 0.0
    %v2283 = vld [vmem:[#allocation7 + $0x1b0] sm:$0xff]
    %v2284 = vld [vmem:[#allocation7 + $0x1b8] sm:$0xff]
    %v2285 = vld [vmem:[#allocation7 + $0x1c0] sm:$0xff]
    %v2286 = vpack.c.bf16 %v2282, %v2282
    %v2287 = vpack.c.bf16 %v2284, %v2283
    %v2288 = vpack.c.bf16 %v2285, %v2285
    %v2289 = vld [vmem:[#allocation9 + $0x15] sm:$0x1]
    %v2290 = vlaneseq
    %v2291 = vshrl.u32 %v2290, 7
    %v2292 = vsub.s32 0, %v2291
    %v2293 = vrot.slane %v2289, %v2292
    %vm2294 = vcmask 195584
    %v2296 = vsel %vm2294, %v2286, 0
    %vm2298 = vcmask 1043456
    %v2300 = vsel %vm2298, %v2288, 0
    %2302 = vmatprep.subr.bf16.mxu0 0
    %2303 = vmatpush1.bf16.msra.mxu0 0
    %2304 = vmatprep.subr.bf16.mxu0 0
    %2305 = vmatpush1.bf16.msra.mxu0 0
    %2306 = vmatprep.subr.bf16.mxu0 0
    %2307 = vmatpush1.bf16.msra.mxu0 0
    %2308 = vmatprep.subr.bf16.mxu0 0
    %2309 = vmatpush1.bf16.msra.mxu0 0
    %2310 = vmatprep.subr.bf16.mxu0 0
    %2311 = vmatpush1.bf16.msra.mxu0 0
    %2312 = vmatprep.subr.bf16.mxu0 0
    %2313 = vmatpush1.bf16.msra.mxu0 0
    %2314 = vmatprep.subr.bf16.mxu0 0
    %2315 = vmatpush1.bf16.msra.mxu0 %v2300
    %2316 = vmatprep.subr.bf16.mxu0 0
    %2317 = vmatpush1.bf16.msra.mxu0 %v2287
    %2318 = vmatprep.subr.bf16.mxu0 0
    %2319 = vmatpush2.bf16.msra.mxu0 0
    %2320 = vmatprep.subr.bf16.mxu0 0
    %2321 = vmatpush2.bf16.msra.mxu0 0
    %2322 = vmatprep.subr.bf16.mxu0 0
    %2323 = vmatpush2.bf16.msra.mxu0 0
    %2324 = vmatprep.subr.bf16.mxu0 0
    %2325 = vmatpush2.bf16.msra.mxu0 0
    %2326 = vmatprep.subr.bf16.mxu0 0
    %2327 = vmatpush2.bf16.msra.mxu0 0
    %2328 = vmatprep.subr.bf16.mxu0 0
    %2329 = vmatpush2.bf16.msra.mxu0 0
    %2330 = vmatprep.subr.bf16.mxu0 0
    %2331 = vmatpush2.bf16.msra.mxu0 0
    %2332 = vmatprep.subr.bf16.mxu0 0
    %2333 = vmatpush2.bf16.msra.mxu0 0
    %2334 = vmatprep.mubr.bf16.mxu0 0
    %2335 = vmatmul.mubr.bf16.gmra.mxu0 %v2296
    %v2336 = vpop.f32.mrf.mxu0
    %v2337 = vadd.f32 %v2293, %v2336
    %v2338 = vpop.f32.mrf.mxu0
    %v2339 = vpop.f32.mrf.mxu0
    %v2340 = vpop.f32.mrf.mxu0
    %2341 = vdwg.mxu0
    %v2342 = vld [vmem:[#allocation7 + $0x1c8] sm:$0xff]
    %v2343 = vld [vmem:[#allocation7 + $0x1d0] sm:$0xff]
    %v2344 = vld [vmem:[#allocation7 + $0x1d8] sm:$0xff]
    %v2345 = vld [vmem:[#allocation7 + $0x1e0] sm:$0xff]
    %v2346 = vpack.c.bf16 %v2343, %v2342
    %v2347 = vpack.c.bf16 %v2345, %v2344
    %v2348 = vld [vmem:[#allocation7 + $0x1e8] sm:$0xff]
    %v2349 = vld [vmem:[#allocation7 + $0x1f0] sm:$0xff]
    %v2350 = vld [vmem:[#allocation7 + $0x1f8] sm:$0xff]
    %v2351 = vld [vmem:[#allocation7 + $0x200] sm:$0xff]
    %v2352 = vpack.c.bf16 %v2349, %v2348
    %v2353 = vpack.c.bf16 %v2351, %v2350
    %v2355 = vrot.slane %v2160, 1
    %v2357 = vsel %vm145, %v2355, 0
    %2359 = vmatprep.subr.bf16.mxu0 0
    %2360 = vmatpush1.bf16.msra.mxu0 0
    %2361 = vmatprep.subr.bf16.mxu0 0
    %2362 = vmatpush1.bf16.msra.mxu0 0
    %2363 = vmatprep.subr.bf16.mxu0 0
    %2364 = vmatpush1.bf16.msra.mxu0 0
    %2365 = vmatprep.subr.bf16.mxu0 0
    %2366 = vmatpush1.bf16.msra.mxu0 0
    %2367 = vmatprep.subr.bf16.mxu0 0
    %2368 = vmatpush1.bf16.msra.mxu0 0
    %2369 = vmatprep.subr.bf16.mxu0 0
    %2370 = vmatpush1.bf16.msra.mxu0 0
    %2371 = vmatprep.subr.bf16.mxu0 0
    %2372 = vmatpush1.bf16.msra.mxu0 %v2353
    %2373 = vmatprep.subr.bf16.mxu0 0
    %2374 = vmatpush1.bf16.msra.mxu0 %v2352
    %2375 = vmatprep.subr.bf16.mxu0 0
    %2376 = vmatpush2.bf16.msra.mxu0 0
    %2377 = vmatprep.subr.bf16.mxu0 0
    %2378 = vmatpush2.bf16.msra.mxu0 0
    %2379 = vmatprep.subr.bf16.mxu0 0
    %2380 = vmatpush2.bf16.msra.mxu0 0
    %2381 = vmatprep.subr.bf16.mxu0 0
    %2382 = vmatpush2.bf16.msra.mxu0 0
    %2383 = vmatprep.subr.bf16.mxu0 0
    %2384 = vmatpush2.bf16.msra.mxu0 0
    %2385 = vmatprep.subr.bf16.mxu0 0
    %2386 = vmatpush2.bf16.msra.mxu0 0
    %2387 = vmatprep.subr.bf16.mxu0 0
    %2388 = vmatpush2.bf16.msra.mxu0 0
    %2389 = vmatprep.subr.bf16.mxu0 0
    %2390 = vmatpush2.bf16.msra.mxu0 0
    %2391 = vmatprep.mubr.bf16.mxu0 0
    %2392 = vmatmul.mubr.bf16.gmra.mxu0 %v2357
    %v2393 = vpop.f32.mrf.mxu0
    %v2394 = vadd.f32 0.0, %v2393
    %v2395 = vpop.f32.mrf.mxu0
    %v2396 = vpop.f32.mrf.mxu0
    %v2397 = vpop.f32.mrf.mxu0
    %2398 = vdwg.mxu0
    %v2400 = vrot.slane %v2153, 1
    %v2402 = vsel %vm145, %v2400, 0
    %2404 = vmatprep.subr.bf16.mxu0 0
    %2405 = vmatpush1.bf16.msra.mxu0 0
    %2406 = vmatprep.subr.bf16.mxu0 0
    %2407 = vmatpush1.bf16.msra.mxu0 0
    %2408 = vmatprep.subr.bf16.mxu0 0
    %2409 = vmatpush1.bf16.msra.mxu0 0
    %2410 = vmatprep.subr.bf16.mxu0 0
    %2411 = vmatpush1.bf16.msra.mxu0 0
    %2412 = vmatprep.subr.bf16.mxu0 0
    %2413 = vmatpush1.bf16.msra.mxu0 0
    %2414 = vmatprep.subr.bf16.mxu0 0
    %2415 = vmatpush1.bf16.msra.mxu0 0
    %2416 = vmatprep.subr.bf16.mxu0 0
    %2417 = vmatpush1.bf16.msra.mxu0 %v2347
    %2418 = vmatprep.subr.bf16.mxu0 0
    %2419 = vmatpush1.bf16.msra.mxu0 %v2346
    %2420 = vmatprep.subr.bf16.mxu0 0
    %2421 = vmatpush2.bf16.msra.mxu0 0
    %2422 = vmatprep.subr.bf16.mxu0 0
    %2423 = vmatpush2.bf16.msra.mxu0 0
    %2424 = vmatprep.subr.bf16.mxu0 0
    %2425 = vmatpush2.bf16.msra.mxu0 0
    %2426 = vmatprep.subr.bf16.mxu0 0
    %2427 = vmatpush2.bf16.msra.mxu0 0
    %2428 = vmatprep.subr.bf16.mxu0 0
    %2429 = vmatpush2.bf16.msra.mxu0 0
    %2430 = vmatprep.subr.bf16.mxu0 0
    %2431 = vmatpush2.bf16.msra.mxu0 0
    %2432 = vmatprep.subr.bf16.mxu0 0
    %2433 = vmatpush2.bf16.msra.mxu0 0
    %2434 = vmatprep.subr.bf16.mxu0 0
    %2435 = vmatpush2.bf16.msra.mxu0 0
    %2436 = vmatprep.mubr.bf16.mxu0 0
    %2437 = vmatmul.mubr.bf16.gmra.mxu0 %v2402
    %v2438 = vpop.f32.mrf.mxu0
    %v2439 = vadd.f32 %v2394, %v2438
    %v2440 = vpop.f32.mrf.mxu0
    %v2441 = vpop.f32.mrf.mxu0
    %v2442 = vpop.f32.mrf.mxu0
    %2443 = vdwg.mxu0
    %v2444 = vld [vmem:[#allocation9 + $0x16] sm:$0x1]
    %v2445 = vlaneseq
    %v2446 = vshrl.u32 %v2445, 7
    %v2447 = vsub.s32 0, %v2446
    %v2448 = vrot.slane %v2444, %v2447
    %v2449 = vadd.f32 %v2439, %v2448
    %v2450 = vld [vmem:[#allocation9 + $0x17] sm:$0x1]
    %v2451 = vld [vmem:[#allocation9 + $0x18] sm:$0x1]
    %vm2452 = vcmask 190464
    %v2453 = vsel %vm2452, %v2449, 0.0
    %2454 = vadd.xlane.f32.xlu0 %v2453
    %v2455 = vpop.xlane.xlu0 %2454
    %v2456 = vmul.f32 %v2455, %v2261
    %v2457 = vsub.f32 %v2449, %v2456
    %v2458 = vmul.f32 %v2457, %v2457
    %v2459 = vsel %vm2452, %v2458, 0.0
    %2460 = vadd.xlane.f32.xlu0 %v2459
    %v2461 = vpop.xlane.xlu0 %2460
    %v2462 = vmul.f32 %v2461, %v2261
    %v2463 = vadd.f32 %v2462, 1e-05
    %v2464 = vrsqrt.pop %v2463
    %v2465 = vmul.f32 %v2457, %v2464
    %v2466 = vlaneseq
    %v2467 = vshrl.u32 %v2466, 7
    %v2468 = vsub.s32 0, %v2467
    %v2469 = vrot.slane %v2450, %v2468
    %v2470 = vmul.f32 %v2465, %v2469
    %v2471 = vlaneseq
    %v2472 = vshrl.u32 %v2471, 7
    %v2473 = vsub.s32 0, %v2472
    %v2474 = vrot.slane %v2451, %v2473
    %v2475 = vadd.f32 %v2470, %v2474
    %v2476 = vmax.f32 %v2475, 0.0
    %v2477 = vld [vmem:[#allocation7 + $0x208] sm:$0xff]
    %v2478 = vld [vmem:[#allocation7 + $0x210] sm:$0xff]
    %v2479 = vld [vmem:[#allocation7 + $0x218] sm:$0xff]
    %v2480 = vpack.c.bf16 %v2476, %v2476
    %v2481 = vpack.c.bf16 %v2478, %v2477
    %v2482 = vpack.c.bf16 %v2479, %v2479
    %v2483 = vld [vmem:[#allocation9 + $0x19] sm:$0x1]
    %v2484 = vlaneseq
    %v2485 = vshrl.u32 %v2484, 7
    %v2486 = vsub.s32 0, %v2485
    %v2487 = vrot.slane %v2483, %v2486
    %v2489 = vsel %vm2294, %v2480, 0
    %v2492 = vsel %vm2298, %v2482, 0
    %2494 = vmatprep.subr.bf16.mxu0 0
    %2495 = vmatpush1.bf16.msra.mxu0 0
    %2496 = vmatprep.subr.bf16.mxu0 0
    %2497 = vmatpush1.bf16.msra.mxu0 0
    %2498 = vmatprep.subr.bf16.mxu0 0
    %2499 = vmatpush1.bf16.msra.mxu0 0
    %2500 = vmatprep.subr.bf16.mxu0 0
    %2501 = vmatpush1.bf16.msra.mxu0 0
    %2502 = vmatprep.subr.bf16.mxu0 0
    %2503 = vmatpush1.bf16.msra.mxu0 0
    %2504 = vmatprep.subr.bf16.mxu0 0
    %2505 = vmatpush1.bf16.msra.mxu0 0
    %2506 = vmatprep.subr.bf16.mxu0 0
    %2507 = vmatpush1.bf16.msra.mxu0 %v2492
    %2508 = vmatprep.subr.bf16.mxu0 0
    %2509 = vmatpush1.bf16.msra.mxu0 %v2481
    %2510 = vmatprep.subr.bf16.mxu0 0
    %2511 = vmatpush2.bf16.msra.mxu0 0
    %2512 = vmatprep.subr.bf16.mxu0 0
    %2513 = vmatpush2.bf16.msra.mxu0 0
    %2514 = vmatprep.subr.bf16.mxu0 0
    %2515 = vmatpush2.bf16.msra.mxu0 0
    %2516 = vmatprep.subr.bf16.mxu0 0
    %2517 = vmatpush2.bf16.msra.mxu0 0
    %2518 = vmatprep.subr.bf16.mxu0 0
    %2519 = vmatpush2.bf16.msra.mxu0 0
    %2520 = vmatprep.subr.bf16.mxu0 0
    %2521 = vmatpush2.bf16.msra.mxu0 0
    %2522 = vmatprep.subr.bf16.mxu0 0
    %2523 = vmatpush2.bf16.msra.mxu0 0
    %2524 = vmatprep.subr.bf16.mxu0 0
    %2525 = vmatpush2.bf16.msra.mxu0 0
    %2526 = vmatprep.mubr.bf16.mxu0 0
    %2527 = vmatmul.mubr.bf16.gmra.mxu0 %v2489
    %v2528 = vpop.f32.mrf.mxu0
    %v2529 = vadd.f32 %v2487, %v2528
    %v2530 = vpop.f32.mrf.mxu0
    %v2531 = vpop.f32.mrf.mxu0
    %v2532 = vpop.f32.mrf.mxu0
    %2533 = vdwg.mxu0
    %v2534 = vld [vmem:[#allocation7 + $0x220] sm:$0xff]
    %v2535 = vld [vmem:[#allocation7 + $0x228] sm:$0xff]
    %v2536 = vld [vmem:[#allocation7 + $0x230] sm:$0xff]
    %v2537 = vld [vmem:[#allocation7 + $0x238] sm:$0xff]
    %v2538 = vpack.c.bf16 %v2535, %v2534
    %v2539 = vpack.c.bf16 %v2537, %v2536
    %v2540 = vld [vmem:[#allocation7 + $0x240] sm:$0xff]
    %v2541 = vld [vmem:[#allocation7 + $0x248] sm:$0xff]
    %v2542 = vld [vmem:[#allocation7 + $0x250] sm:$0xff]
    %v2543 = vld [vmem:[#allocation7 + $0x258] sm:$0xff]
    %v2544 = vpack.c.bf16 %v2541, %v2540
    %v2545 = vpack.c.bf16 %v2543, %v2542
    %v2546 = vshrl.u32 %v2160, 16
    %v2548 = vrot.slane %v2546, 2
    %v2549 = vshll.u32 %v2160, 16
    %v2551 = vrot.slane %v2549, 3
    %v2552 = vor.u32 %v2548, %v2551
    %v2554 = vsel %vm145, %v2552, 0
    %2556 = vmatprep.subr.bf16.mxu0 0
    %2557 = vmatpush1.bf16.msra.mxu0 0
    %2558 = vmatprep.subr.bf16.mxu0 0
    %2559 = vmatpush1.bf16.msra.mxu0 0
    %2560 = vmatprep.subr.bf16.mxu0 0
    %2561 = vmatpush1.bf16.msra.mxu0 0
    %2562 = vmatprep.subr.bf16.mxu0 0
    %2563 = vmatpush1.bf16.msra.mxu0 0
    %2564 = vmatprep.subr.bf16.mxu0 0
    %2565 = vmatpush1.bf16.msra.mxu0 0
    %2566 = vmatprep.subr.bf16.mxu0 0
    %2567 = vmatpush1.bf16.msra.mxu0 0
    %2568 = vmatprep.subr.bf16.mxu0 0
    %2569 = vmatpush1.bf16.msra.mxu0 %v2545
    %2570 = vmatprep.subr.bf16.mxu0 0
    %2571 = vmatpush1.bf16.msra.mxu0 %v2544
    %2572 = vmatprep.subr.bf16.mxu0 0
    %2573 = vmatpush2.bf16.msra.mxu0 0
    %2574 = vmatprep.subr.bf16.mxu0 0
    %2575 = vmatpush2.bf16.msra.mxu0 0
    %2576 = vmatprep.subr.bf16.mxu0 0
    %2577 = vmatpush2.bf16.msra.mxu0 0
    %2578 = vmatprep.subr.bf16.mxu0 0
    %2579 = vmatpush2.bf16.msra.mxu0 0
    %2580 = vmatprep.subr.bf16.mxu0 0
    %2581 = vmatpush2.bf16.msra.mxu0 0
    %2582 = vmatprep.subr.bf16.mxu0 0
    %2583 = vmatpush2.bf16.msra.mxu0 0
    %2584 = vmatprep.subr.bf16.mxu0 0
    %2585 = vmatpush2.bf16.msra.mxu0 0
    %2586 = vmatprep.subr.bf16.mxu0 0
    %2587 = vmatpush2.bf16.msra.mxu0 0
    %2588 = vmatprep.mubr.bf16.mxu0 0
    %2589 = vmatmul.mubr.bf16.gmra.mxu0 %v2554
    %v2590 = vpop.f32.mrf.mxu0
    %v2591 = vadd.f32 0.0, %v2590
    %v2592 = vpop.f32.mrf.mxu0
    %v2593 = vpop.f32.mrf.mxu0
    %v2594 = vpop.f32.mrf.mxu0
    %2595 = vdwg.mxu0
    %v2596 = vshrl.u32 %v2153, 16
    %v2598 = vrot.slane %v2596, 2
    %v2599 = vshll.u32 %v2153, 16
    %v2601 = vrot.slane %v2599, 3
    %v2602 = vor.u32 %v2598, %v2601
    %v2604 = vsel %vm145, %v2602, 0
    %2606 = vmatprep.subr.bf16.mxu0 0
    %2607 = vmatpush1.bf16.msra.mxu0 0
    %2608 = vmatprep.subr.bf16.mxu0 0
    %2609 = vmatpush1.bf16.msra.mxu0 0
    %2610 = vmatprep.subr.bf16.mxu0 0
    %2611 = vmatpush1.bf16.msra.mxu0 0
    %2612 = vmatprep.subr.bf16.mxu0 0
    %2613 = vmatpush1.bf16.msra.mxu0 0
    %2614 = vmatprep.subr.bf16.mxu0 0
    %2615 = vmatpush1.bf16.msra.mxu0 0
    %2616 = vmatprep.subr.bf16.mxu0 0
    %2617 = vmatpush1.bf16.msra.mxu0 0
    %2618 = vmatprep.subr.bf16.mxu0 0
    %2619 = vmatpush1.bf16.msra.mxu0 %v2539
    %2620 = vmatprep.subr.bf16.mxu0 0
    %2621 = vmatpush1.bf16.msra.mxu0 %v2538
    %2622 = vmatprep.subr.bf16.mxu0 0
    %2623 = vmatpush2.bf16.msra.mxu0 0
    %2624 = vmatprep.subr.bf16.mxu0 0
    %2625 = vmatpush2.bf16.msra.mxu0 0
    %2626 = vmatprep.subr.bf16.mxu0 0
    %2627 = vmatpush2.bf16.msra.mxu0 0
    %2628 = vmatprep.subr.bf16.mxu0 0
    %2629 = vmatpush2.bf16.msra.mxu0 0
    %2630 = vmatprep.subr.bf16.mxu0 0
    %2631 = vmatpush2.bf16.msra.mxu0 0
    %2632 = vmatprep.subr.bf16.mxu0 0
    %2633 = vmatpush2.bf16.msra.mxu0 0
    %2634 = vmatprep.subr.bf16.mxu0 0
    %2635 = vmatpush2.bf16.msra.mxu0 0
    %2636 = vmatprep.subr.bf16.mxu0 0
    %2637 = vmatpush2.bf16.msra.mxu0 0
    %2638 = vmatprep.mubr.bf16.mxu0 0
    %2639 = vmatmul.mubr.bf16.gmra.mxu0 %v2604
    %v2640 = vpop.f32.mrf.mxu0
    %v2641 = vadd.f32 %v2591, %v2640
    %v2642 = vpop.f32.mrf.mxu0
    %v2643 = vpop.f32.mrf.mxu0
    %v2644 = vpop.f32.mrf.mxu0
    %2645 = vdwg.mxu0
    %v2646 = vld [vmem:[#allocation9 + $0x1a] sm:$0x1]
    %v2647 = vlaneseq
    %v2648 = vshrl.u32 %v2647, 7
    %v2649 = vsub.s32 0, %v2648
    %v2650 = vrot.slane %v2646, %v2649
    %v2651 = vadd.f32 %v2641, %v2650
    %vm2652 = vcmask 1041408
    %v2653 = vsel %vm2652, %v2337, -inf
    %2654 = vmax.xlane.f32.xlu0 %v2653
    %v2655 = vpop.xlane.xlu0 %2654
    %v2656 = vsub.f32 %v2337, %v2655
    %v2657 = vmul.f32 %v2656, 1.442695
    %v2658 = vpow.pop %v2657
    %v2659 = vsel %vm2652, %v2658, 0.0
    %2660 = vadd.xlane.f32.xlu0 %v2659
    %v2661 = vpop.xlane.xlu0 %2660
    %v2662 = vlog2.pop %v2661
    %v2663 = vmul.f32 %v2662, 0.6931472
    %v2664 = vadd.f32 %v2663, %v2655
    %s2665 = sld [smem:[#allocation3 + $0x2]]
    %v2666 = vstv %s2665
    %vm2667 = vcmp.eq.s32.totalorder %v1854, %v2666
    %vm2668 = vmand %vm1860, %vm2667
    %v2669 = vsel %vm2668, 1.0, 0.0
    %v2670 = vadd.f32 %v2669, 0.0
    %s2671 = sld [smem:[#allocation3 + $0x82]]
    %v2672 = vstv %s2671
    %vm2673 = vcmp.eq.s32.totalorder %v1854, %v2672
    %vm2674 = vmand %vm1900, %vm2673
    %v2675 = vsel %vm2674, 1.0, 0.0
    %v2676 = vadd.f32 %v2670, %v2675
    %v2677 = vmul.f32 %v2337, %v2676
    %v2678 = vsel %vm2652, %v2677, 0.0
    %2679 = vadd.xlane.f32.xlu0 %v2678
    %v2680 = vpop.xlane.xlu0 %2679
    %v2681 = vsub.f32 %v2664, %v2680
    %vm2682 = vcmask 1024
    %v2683 = vsel %vm2682, %v2681, 0.0
    %2684 = vadd.xlane.f32.xlu0 %v2683
    %v2685 = vpop.xlane.xlu0 %2684
    %v2686 = vrot.slane %v2685, 4
    %v2687 = vadd.f32 %v2685, %v2686
    %v2688 = vrot.slane %v2687, 2
    %v2689 = vadd.f32 %v2687, %v2688
    %v2690 = vrot.slane %v2689, 1
    %v2691 = vadd.f32 %v2689, %v2690
    %s2692 = vtos %v2691
    %vm2693 = vcmask 1042432
    %v2694 = vsel %vm2693, %v2529, -inf
    %2695 = vmax.xlane.f32.xlu0 %v2694
    %v2696 = vpop.xlane.xlu0 %2695
    %v2697 = vsub.f32 %v2529, %v2696
    %v2698 = vmul.f32 %v2697, 1.442695
    %v2699 = vpow.pop %v2698
    %v2700 = vsel %vm2693, %v2699, 0.0
    %2701 = vadd.xlane.f32.xlu0 %v2700
    %v2702 = vpop.xlane.xlu0 %2701
    %v2703 = vlog2.pop %v2702
    %v2704 = vmul.f32 %v2703, 0.6931472
    %v2705 = vadd.f32 %v2704, %v2696
    %s2706 = sld [smem:[#allocation3 + $0x102]]
    %v2707 = vstv %s2706
    %vm2708 = vcmp.eq.s32.totalorder %v1854, %v2707
    %vm2709 = vmand %vm1860, %vm2708
    %v2710 = vsel %vm2709, 1.0, 0.0
    %v2711 = vadd.f32 %v2710, 0.0
    %s2712 = sld [smem:[#allocation3 + $0x182]]
    %v2713 = vstv %s2712
    %vm2714 = vcmp.eq.s32.totalorder %v1854, %v2713
    %vm2715 = vmand %vm1900, %vm2714
    %v2716 = vsel %vm2715, 1.0, 0.0
    %v2717 = vadd.f32 %v2711, %v2716
    %s2718 = sld [smem:[#allocation3 + $0x202]]
    %v2719 = vstv %s2718
    %vm2720 = vcmp.eq.s32.totalorder %v1854, %v2719
    %vm2721 = vmand %vm1940, %vm2720
    %v2722 = vsel %vm2721, 1.0, 0.0
    %v2723 = vadd.f32 %v2717, %v2722
    %v2724 = vmul.f32 %v2529, %v2723
    %v2725 = vsel %vm2693, %v2724, 0.0
    %2726 = vadd.xlane.f32.xlu0 %v2725
    %v2727 = vpop.xlane.xlu0 %2726
    %v2728 = vsub.f32 %v2705, %v2727
    %vm2729 = vcmask 2048
    %v2730 = vsel %vm2729, %v2728, 0.0
    %2731 = vadd.xlane.f32.xlu0 %v2730
    %v2732 = vpop.xlane.xlu0 %2731
    %v2733 = vrot.slane %v2732, 4
    %v2734 = vadd.f32 %v2732, %v2733
    %v2735 = vrot.slane %v2734, 2
    %v2736 = vadd.f32 %v2734, %v2735
    %v2737 = vrot.slane %v2736, 1
    %v2738 = vadd.f32 %v2736, %v2737
    %s2739 = vtos %v2738
    %s2740 = sadd.f32 %s2692, %s2739
    %v2741 = vsel %vm2652, %v2651, -inf
    %2742 = vmax.xlane.f32.xlu0 %v2741
    %v2743 = vpop.xlane.xlu0 %2742
    %v2744 = vsub.f32 %v2651, %v2743
    %v2745 = vmul.f32 %v2744, 1.442695
    %v2746 = vpow.pop %v2745
    %v2747 = vsel %vm2652, %v2746, 0.0
    %2748 = vadd.xlane.f32.xlu0 %v2747
    %v2749 = vpop.xlane.xlu0 %2748
    %v2750 = vlog2.pop %v2749
    %v2751 = vmul.f32 %v2750, 0.6931472
    %v2752 = vadd.f32 %v2751, %v2743
    %s2753 = sld [smem:[#allocation3 + $0x282]]
    %v2754 = vstv %s2753
    %vm2755 = vcmp.eq.s32.totalorder %v1854, %v2754
    %vm2756 = vmand %vm1860, %vm2755
    %v2757 = vsel %vm2756, 1.0, 0.0
    %v2758 = vadd.f32 %v2757, 0.0
    %s2759 = sld [smem:[#allocation3 + $0x302]]
    %v2760 = vstv %s2759
    %vm2761 = vcmp.eq.s32.totalorder %v1854, %v2760
    %vm2762 = vmand %vm1900, %vm2761
    %v2763 = vsel %vm2762, 1.0, 0.0
    %v2764 = vadd.f32 %v2758, %v2763
    %v2765 = vmul.f32 %v2651, %v2764
    %v2766 = vsel %vm2652, %v2765, 0.0
    %2767 = vadd.xlane.f32.xlu0 %v2766
    %v2768 = vpop.xlane.xlu0 %2767
    %v2769 = vsub.f32 %v2752, %v2768
    %v2770 = vsel %vm2682, %v2769, 0.0
    %2771 = vadd.xlane.f32.xlu0 %v2770
    %v2772 = vpop.xlane.xlu0 %2771
    %v2773 = vrot.slane %v2772, 4
    %v2774 = vadd.f32 %v2772, %v2773
    %v2775 = vrot.slane %v2774, 2
    %v2776 = vadd.f32 %v2774, %v2775
    %v2777 = vrot.slane %v2776, 1
    %v2778 = vadd.f32 %v2776, %v2777
    %s2779 = vtos %v2778
    %s2780 = sadd.f32 %s2740, %s2779
    %2781 = vst [vmem:[#allocation10] sm:$0x3] %v2337
    %2782 = vst [vmem:[#allocation10 + $0x2] sm:$0x7] %v2529
    %2783 = vst [vmem:[#allocation10 + $0x5] sm:$0x3] %v2651
    %v2784 = vstv %s2780
    %2785 = vst [vmem:[#allocation10 + $0x7] sm:$0x1] %v2784
    // Predicated region
    $region26: #{tpu_custom_call.1} parent=1 // pred_check
      _
    $region27: #{tpu_custom_call.1} parent=1 // pred_check_branch
      %2787 = sbr.rel (0) target = $region29
    $region28: #{tpu_custom_call.1} parent=1 // pred_region
      %s2789 = ssub.s32 128, 128
      %2790 = vsyncadd [#allocation6], %s2789
      %s2792 = sshll.u32 [#allocation10], 4
      %s2793 = int_to_ptr.vmem [resolvable:$true] %s2792
      %2795 = dma.vmem_to_hbm [thread:$0]  %s2793, 128, %s4, [#allocation6]
    $region29: #{tpu_custom_call.1} parent=1 // pred_fallthru
      _
    // Predicated region
    $region30: #{tpu_custom_call.1} parent=1 // pred_check
      _
    $region31: #{tpu_custom_call.1} parent=1 // pred_check_branch
      %2797 = sbr.rel (0) target = $region33
    $region32: #{tpu_custom_call.1} parent=1 // pred_region
      %2798 = dma.done [#allocation6], 128
    $region33: #{tpu_custom_call.1} parent=1 // pred_fallthru
      _
    %2799 = vsyncpa [#allocation5], 1
    %2800 = vsyncpa [#allocation8], 1
    %2801 = vsyncpa [#allocation6], 1

</llo_original>
